<compile_context>
chip_gen: v7x
topology: tpu7x:2x2x1
jax: 0.10.0
libtpu: 0.0.40
codegen_flags: <defaults>
</compile_context>

<pallas_src>
import numpy as np
import jax
import jax.numpy as jnp
from jax.experimental import pallas as pl
from jax.experimental.pallas import tpu as pltpu

INPUT_SIZE = 16 * 5 * 5
NUM_CLASSES = 10
NEG_SLOPE = 0.01  # nn.LeakyReLU default


def _lrelu(a):
    return jnp.where(a >= 0, a, NEG_SLOPE * a)


# -----------------------------------------------------------------------------
# Fused forward kernel: one batch sample per grid step, everything in VMEM.
#
# Layouts (per sample):
#   x   : (32, 96)   f32,  x[h, 3*w + c]
#   y1  : (28, 224)  f32,  y1[oh, 8*ow + oc]           (conv1 + lrelu)
#   q1  : (14, 216)  f32,  pooled value at column 16*pw + oc (other cols ignored
#                          by zero rows of w2b)
#   y2  : (10, 160)  f32,  y2[oh, 16*ow + oc]          (conv2 + lrelu)
#   q2  : (5, 144)   f32,  pooled value at column 32*pw + oc (other cols ignored
#                          by zero rows of wf1)
# -----------------------------------------------------------------------------
def _fused_forward_kernel(x_ref, w1_ref, b1_ref, w2_ref, b2_ref, s1_ref, s2_ref,
                          wf1_ref, bf1_ref, wf2_ref, bf2_ref, wf3_ref, bf3_ref,
                          out_ref):
    f32 = jnp.float32
    bf16 = jnp.bfloat16

    x = x_ref[0]                                                   # (32, 96) f32

    # ---- conv1 (5x5, 3->8, valid) + bias + LeakyReLU -------------------------
    # a1[oh, 8*ow+oc] = sum_kh  x[kh+oh, :] . w1b[kh, :, 8*ow+oc]
    a1 = jnp.dot(x[0:28, :].astype(bf16), w1_ref[0], preferred_element_type=f32)
    for kh in range(1, 5):
        a1 = a1 + jnp.dot(x[kh:kh + 28, :].astype(bf16), w1_ref[kh],
                          preferred_element_type=f32)
    y1 = _lrelu(a1 + b1_ref[...])                                  # (28, 224)

    # ---- maxpool 2x2: (28,28,8) -> (14,14,8) ---------------------------------
    mr1 = jnp.maximum(y1[0:27, :], y1[1:28, :])                    # adjacent-row max
    r1 = jnp.dot(s1_ref[...], mr1, preferred_element_type=f32)     # pick even rows -> (14,224)
    q1 = jnp.maximum(r1[:, 0:216], r1[:, 8:224])                   # adjacent-ow max; (14,216)

    # ---- conv2 (5x5, 8->16, valid) + bias + LeakyReLU ------------------------
    a2 = jnp.dot(q1[0:10, :].astype(bf16), w2_ref[0], preferred_element_type=f32)
    for kh in range(1, 5):
        a2 = a2 + jnp.dot(q1[kh:kh + 10, :].astype(bf16), w2_ref[kh],
                          preferred_element_type=f32)
    y2 = _lrelu(a2 + b2_ref[...])                                  # (10, 160)

    # ---- maxpool 2x2: (10,10,16) -> (5,5,16) ---------------------------------
    mr2 = jnp.maximum(y2[0:9, :], y2[1:10, :])
    r2 = jnp.dot(s2_ref[...], mr2, preferred_element_type=f32)     # (5, 160)
    q2 = jnp.maximum(r2[:, 0:144], r2[:, 16:160])                  # (5, 144)

    # ---- flatten (torch NCHW .view order folded into wf1) + fc1 + LeakyReLU --
    h1 = jnp.dot(q2[0:1, :].astype(bf16), wf1_ref[0], preferred_element_type=f32)
    for r in range(1, 5):
        h1 = h1 + jnp.dot(q2[r:r + 1, :].astype(bf16), wf1_ref[r],
                          preferred_element_type=f32)
    h1 = _lrelu(h1 + bf1_ref[...])                                 # (1, l1)

    # nn.Dropout -> identity at inference time.
    h2 = jnp.dot(h1.astype(bf16), wf2_ref[...], preferred_element_type=f32)
    h2 = _lrelu(h2 + bf2_ref[...])                                 # (1, l2)

    logits = jnp.dot(h2.astype(bf16), wf3_ref[...],
                     preferred_element_type=f32) + bf3_ref[...]    # (1, 10)
    out_ref[0] = logits.astype(out_ref.dtype)


# -----------------------------------------------------------------------------
# Parameters (torch layout) and one-time host-side repack into kernel layout.
# -----------------------------------------------------------------------------
def init_params(key, l1, l2):
    ks = jax.random.split(key, 10)
    s = 0.05
    return {
        "w1": s * jax.random.normal(ks[0], (8, 3, 5, 5), jnp.float32),     # (OC,C,KH,KW)
        "b1": s * jax.random.normal(ks[1], (8,), jnp.float32),
        "w2": s * jax.random.normal(ks[2], (16, 8, 5, 5), jnp.float32),
        "b2": s * jax.random.normal(ks[3], (16,), jnp.float32),
        "fc1_w": s * jax.random.normal(ks[4], (l1, INPUT_SIZE), jnp.float32),  # torch (out,in)
        "fc1_b": s * jax.random.normal(ks[5], (l1,), jnp.float32),
        "fc2_w": s * jax.random.normal(ks[6], (l2, l1), jnp.float32),
        "fc2_b": s * jax.random.normal(ks[7], (l2,), jnp.float32),
        "fc3_w": s * jax.random.normal(ks[8], (NUM_CLASSES, l2), jnp.float32),
        "fc3_b": s * jax.random.normal(ks[9], (NUM_CLASSES,), jnp.float32),
    }


def prepare_params(params):
    """One-time host-side repack of torch-layout params into fused-kernel layout."""
    w1 = np.asarray(params["w1"], np.float32)        # (8, 3, 5, 5)
    w2 = np.asarray(params["w2"], np.float32)        # (16, 8, 5, 5)
    fc1_w = np.asarray(params["fc1_w"], np.float32)  # (l1, 400)
    fc2_w = np.asarray(params["fc2_w"], np.float32)  # (l2, l1)
    fc3_w = np.asarray(params["fc3_w"], np.float32)  # (10, l2)
    l1 = fc1_w.shape[0]

    # conv1 banded weight: w1b[kh, 3*w + c, 8*ow + oc] = w1[oc, c, kh, w - ow]
    # so  sum_w,c x[oh+kh, w, c] * w1b[kh, 3w+c, 8ow+oc] = valid conv at (oh, ow).
    w1b = np.zeros((5, 96, 224), np.float32)
    for kh in range(5):
        for ow in range(28):
            for kw in range(5):
                w = ow + kw
                w1b[kh, 3 * w:3 * w + 3, 8 * ow:8 * ow + 8] = w1[:, :, kh, kw].T  # (C, OC)

    # conv2 banded weight over pooled columns (valid input cols = 16*pw + ic;
    # the other "garbage" columns of q1 hit all-zero rows):
    # w2b[kh, 16*pw + ic, 16*ow + oc] = w2[oc, ic, kh, pw - ow]
    w2b = np.zeros((5, 216, 160), np.float32)
    for kh in range(5):
        for ow in range(10):
            for kw in range(5):
                pw = ow + kw
                w2b[kh, 16 * pw:16 * pw + 8, 16 * ow:16 * ow + 16] = w2[:, :, kh, kw].T  # (IC, OC)

    # fc1 with the torch NCHW flatten (.view(-1, 16*5*5): idx = oc*25 + ph*5 + pw)
    # folded in:  wf1[ph, 32*pw + oc, l] = fc1_w[l, oc*25 + ph*5 + pw]
    wf1 = np.zeros((5, 144, l1), np.float32)
    for ph in range(5):
        for pw in range(5):
            for oc in range(16):
                wf1[ph, 32 * pw + oc, :] = fc1_w[:, oc * 25 + ph * 5 + pw]

    # 0/1 "pick even rows" selection matrices for the two max-pools.
    s1 = np.zeros((14, 27), np.float32)
    s1[np.arange(14), 2 * np.arange(14)] = 1.0
    s2 = np.zeros((5, 9), np.float32)
    s2[np.arange(5), 2 * np.arange(5)] = 1.0

    b1 = np.asarray(params["b1"], np.float32)
    b2 = np.asarray(params["b2"], np.float32)

    bf16 = jnp.bfloat16
    return {
        "w1b": jnp.asarray(w1b, bf16),
        "b1row": jnp.asarray(np.tile(b1, 28)[None, :]),                    # (1, 224)
        "w2b": jnp.asarray(w2b, bf16),
        "b2row": jnp.asarray(np.tile(b2, 10)[None, :]),                    # (1, 160)
        "s1": jnp.asarray(s1),
        "s2": jnp.asarray(s2),
        "wf1": jnp.asarray(wf1, bf16),
        "bf1": jnp.asarray(np.asarray(params["fc1_b"], np.float32)[None, :]),
        "wf2": jnp.asarray(fc2_w.T, bf16),                                 # (l1, l2)
        "bf2": jnp.asarray(np.asarray(params["fc2_b"], np.float32)[None, :]),
        "wf3": jnp.asarray(fc3_w.T, bf16),                                 # (l2, 10)
        "bf3": jnp.asarray(np.asarray(params["fc3_b"], np.float32)[None, :]),
    }


# -----------------------------------------------------------------------------
# Forward wrapper: one fused pallas_call, grid over batch.
# -----------------------------------------------------------------------------
@jax.jit
def cifar_forward(x_nchw, prep):
    N = x_nchw.shape[0]
    # NCHW -> NHWC -> (N, H, W*C); the only XLA op in the forward pass.
    x = jnp.transpose(x_nchw, (0, 2, 3, 1)).reshape(N, 32, 96).astype(jnp.float32)
    l1 = prep["wf1"].shape[-1]
    l2 = prep["wf2"].shape[-1]

    const2 = lambda b: (0, 0)
    const3 = lambda b: (0, 0, 0)
    out = pl.pallas_call(
        _fused_forward_kernel,
        out_shape=jax.ShapeDtypeStruct((N, 1, NUM_CLASSES), jnp.float32),
        grid=(N,),
        in_specs=[
            pl.BlockSpec((1, 32, 96), lambda b: (b, 0, 0)),   # x (per-sample tile)
            pl.BlockSpec((5, 96, 224), const3),               # w1b  (resident)
            pl.BlockSpec((1, 224), const2),                   # b1row
            pl.BlockSpec((5, 216, 160), const3),              # w2b
            pl.BlockSpec((1, 160), const2),                   # b2row
            pl.BlockSpec((14, 27), const2),                   # s1
            pl.BlockSpec((5, 9), const2),                     # s2
            pl.BlockSpec((5, 144, l1), const3),               # wf1
            pl.BlockSpec((1, l1), const2),                    # bf1
            pl.BlockSpec((l1, l2), const2),                   # wf2
            pl.BlockSpec((1, l2), const2),                    # bf2
            pl.BlockSpec((l2, NUM_CLASSES), const2),          # wf3
            pl.BlockSpec((1, NUM_CLASSES), const2),           # bf3
        ],
        out_specs=pl.BlockSpec((1, 1, NUM_CLASSES), lambda b: (b, 0, 0)),
        compiler_params=pltpu.CompilerParams(
            dimension_semantics=("parallel",)),               # megacore on v7x
    )(x, prep["w1b"], prep["b1row"], prep["w2b"], prep["b2row"],
      prep["s1"], prep["s2"], prep["wf1"], prep["bf1"],
      prep["wf2"], prep["bf2"], prep["wf3"], prep["bf3"])
    return out.reshape(N, NUM_CLASSES)


if __name__ == "__main__":
    key = jax.random.PRNGKey(0)
    k_x, k_p = jax.random.split(key)

    # CIFAR-shaped input (spatial 32 is required by the 16*5*5 flatten), small batch.
    x = jax.random.normal(k_x, (2, 3, 32, 32), jnp.float32)
    params = init_params(k_p, l1=32, l2=32)
    prep = prepare_params(params)     # one-time, zero-runtime-cost repack

    logits = cifar_forward(x, prep)
    jax.block_until_ready(logits)
    assert logits.shape == (2, NUM_CLASSES)
    print("KERNEL_OK")
</pallas_src>

<mosaic_0001>
module attributes {stable_mosaic.version = 11 : i64} {
  func.func @_fused_forward_kernel(%arg0: i32, %arg1: memref<1x32x96xf32, #tpu.memory_space<vmem>>, %arg2: memref<5x96x224xbf16, #tpu.memory_space<vmem>>, %arg3: memref<1x224xf32, #tpu.memory_space<vmem>>, %arg4: memref<5x216x160xbf16, #tpu.memory_space<vmem>>, %arg5: memref<1x160xf32, #tpu.memory_space<vmem>>, %arg6: memref<14x27xf32, #tpu.memory_space<vmem>>, %arg7: memref<5x9xf32, #tpu.memory_space<vmem>>, %arg8: memref<5x144x32xbf16, #tpu.memory_space<vmem>>, %arg9: memref<1x32xf32, #tpu.memory_space<vmem>>, %arg10: memref<32x32xbf16, #tpu.memory_space<vmem>>, %arg11: memref<1x32xf32, #tpu.memory_space<vmem>>, %arg12: memref<32x10xbf16, #tpu.memory_space<vmem>>, %arg13: memref<1x10xf32, #tpu.memory_space<vmem>>, %arg14: memref<1x1x10xf32, #tpu.memory_space<vmem>>) attributes {dimension_semantics = [#tpu.dimension_semantics<parallel>], iteration_bounds = array<i64: 2>, scalar_prefetch = 0 : i64, scratch_operands = 0 : i64, tpu.core_type = #tpu.core_type<tc>, window_params = [{transform_indices = @transform_0, window_bounds = array<i64: 1, 32, 96>}, {pipeline_mode = #tpu.pipeline_mode<synchronous>, transform_indices = @transform_1, window_bounds = array<i64: 5, 96, 224>}, {pipeline_mode = #tpu.pipeline_mode<synchronous>, transform_indices = @transform_2, window_bounds = array<i64: 1, 224>}, {pipeline_mode = #tpu.pipeline_mode<synchronous>, transform_indices = @transform_3, window_bounds = array<i64: 5, 216, 160>}, {pipeline_mode = #tpu.pipeline_mode<synchronous>, transform_indices = @transform_4, window_bounds = array<i64: 1, 160>}, {pipeline_mode = #tpu.pipeline_mode<synchronous>, transform_indices = @transform_5, window_bounds = array<i64: 14, 27>}, {pipeline_mode = #tpu.pipeline_mode<synchronous>, transform_indices = @transform_6, window_bounds = array<i64: 5, 9>}, {pipeline_mode = #tpu.pipeline_mode<synchronous>, transform_indices = @transform_7, window_bounds = array<i64: 5, 144, 32>}, {pipeline_mode = #tpu.pipeline_mode<synchronous>, transform_indices = @transform_8, window_bounds = array<i64: 1, 32>}, {pipeline_mode = #tpu.pipeline_mode<synchronous>, transform_indices = @transform_9, window_bounds = array<i64: 32, 32>}, {pipeline_mode = #tpu.pipeline_mode<synchronous>, transform_indices = @transform_10, window_bounds = array<i64: 1, 32>}, {pipeline_mode = #tpu.pipeline_mode<synchronous>, transform_indices = @transform_11, window_bounds = array<i64: 32, 10>}, {pipeline_mode = #tpu.pipeline_mode<synchronous>, transform_indices = @transform_12, window_bounds = array<i64: 1, 10>}, {transform_indices = @transform_13, window_bounds = array<i64: 1, 1, 10>}]} {
    %c0 = arith.constant 0 : index
    %c0_0 = arith.constant 0 : index
    %c0_1 = arith.constant 0 : index
    %0 = vector.load %arg1[%c0, %c0_0, %c0_1] : memref<1x32x96xf32, #tpu.memory_space<vmem>>, vector<1x32x96xf32>
    %1 = vector.shape_cast %0 : vector<1x32x96xf32> to vector<32x96xf32>
    %2 = vector.extract_strided_slice %1 {offsets = [0, 0], sizes = [28, 96], strides = [1, 1]} : vector<32x96xf32> to vector<28x96xf32>
    %3 = arith.truncf %2 : vector<28x96xf32> to vector<28x96xbf16>
    %c0_2 = arith.constant 0 : index
    %c0_3 = arith.constant 0 : index
    %c0_4 = arith.constant 0 : index
    %4 = vector.load %arg2[%c0_2, %c0_3, %c0_4] : memref<5x96x224xbf16, #tpu.memory_space<vmem>>, vector<1x96x224xbf16>
    %5 = vector.shape_cast %4 : vector<1x96x224xbf16> to vector<96x224xbf16>
    %cst = arith.constant dense<0.000000e+00> : vector<28x224xf32>
    %6 = tpu.matmul %3, %5, %cst {dimension_numbers = #tpu.dot_dimension_numbers<[1], [0], [0], [1], [0, 0, 1, 1], [], []>} : vector<28x96xbf16>, vector<96x224xbf16>, vector<28x224xf32> -> vector<28x224xf32>
    %7 = vector.extract_strided_slice %1 {offsets = [1, 0], sizes = [28, 96], strides = [1, 1]} : vector<32x96xf32> to vector<28x96xf32>
    %8 = arith.truncf %7 : vector<28x96xf32> to vector<28x96xbf16>
    %c1 = arith.constant 1 : index
    %c0_5 = arith.constant 0 : index
    %c0_6 = arith.constant 0 : index
    %9 = vector.load %arg2[%c1, %c0_5, %c0_6] : memref<5x96x224xbf16, #tpu.memory_space<vmem>>, vector<1x96x224xbf16>
    %10 = vector.shape_cast %9 : vector<1x96x224xbf16> to vector<96x224xbf16>
    %cst_7 = arith.constant dense<0.000000e+00> : vector<28x224xf32>
    %11 = tpu.matmul %8, %10, %cst_7 {dimension_numbers = #tpu.dot_dimension_numbers<[1], [0], [0], [1], [0, 0, 1, 1], [], []>} : vector<28x96xbf16>, vector<96x224xbf16>, vector<28x224xf32> -> vector<28x224xf32>
    %12 = arith.addf %6, %11 : vector<28x224xf32>
    %13 = vector.extract_strided_slice %1 {offsets = [2, 0], sizes = [28, 96], strides = [1, 1]} : vector<32x96xf32> to vector<28x96xf32>
    %14 = arith.truncf %13 : vector<28x96xf32> to vector<28x96xbf16>
    %c2 = arith.constant 2 : index
    %c0_8 = arith.constant 0 : index
    %c0_9 = arith.constant 0 : index
    %15 = vector.load %arg2[%c2, %c0_8, %c0_9] : memref<5x96x224xbf16, #tpu.memory_space<vmem>>, vector<1x96x224xbf16>
    %16 = vector.shape_cast %15 : vector<1x96x224xbf16> to vector<96x224xbf16>
    %cst_10 = arith.constant dense<0.000000e+00> : vector<28x224xf32>
    %17 = tpu.matmul %14, %16, %cst_10 {dimension_numbers = #tpu.dot_dimension_numbers<[1], [0], [0], [1], [0, 0, 1, 1], [], []>} : vector<28x96xbf16>, vector<96x224xbf16>, vector<28x224xf32> -> vector<28x224xf32>
    %18 = arith.addf %12, %17 : vector<28x224xf32>
    %19 = vector.extract_strided_slice %1 {offsets = [3, 0], sizes = [28, 96], strides = [1, 1]} : vector<32x96xf32> to vector<28x96xf32>
    %20 = arith.truncf %19 : vector<28x96xf32> to vector<28x96xbf16>
    %c3 = arith.constant 3 : index
    %c0_11 = arith.constant 0 : index
    %c0_12 = arith.constant 0 : index
    %21 = vector.load %arg2[%c3, %c0_11, %c0_12] : memref<5x96x224xbf16, #tpu.memory_space<vmem>>, vector<1x96x224xbf16>
    %22 = vector.shape_cast %21 : vector<1x96x224xbf16> to vector<96x224xbf16>
    %cst_13 = arith.constant dense<0.000000e+00> : vector<28x224xf32>
    %23 = tpu.matmul %20, %22, %cst_13 {dimension_numbers = #tpu.dot_dimension_numbers<[1], [0], [0], [1], [0, 0, 1, 1], [], []>} : vector<28x96xbf16>, vector<96x224xbf16>, vector<28x224xf32> -> vector<28x224xf32>
    %24 = arith.addf %18, %23 : vector<28x224xf32>
    %25 = vector.extract_strided_slice %1 {offsets = [4, 0], sizes = [28, 96], strides = [1, 1]} : vector<32x96xf32> to vector<28x96xf32>
    %26 = arith.truncf %25 : vector<28x96xf32> to vector<28x96xbf16>
    %c4 = arith.constant 4 : index
    %c0_14 = arith.constant 0 : index
    %c0_15 = arith.constant 0 : index
    %27 = vector.load %arg2[%c4, %c0_14, %c0_15] : memref<5x96x224xbf16, #tpu.memory_space<vmem>>, vector<1x96x224xbf16>
    %28 = vector.shape_cast %27 : vector<1x96x224xbf16> to vector<96x224xbf16>
    %cst_16 = arith.constant dense<0.000000e+00> : vector<28x224xf32>
    %29 = tpu.matmul %26, %28, %cst_16 {dimension_numbers = #tpu.dot_dimension_numbers<[1], [0], [0], [1], [0, 0, 1, 1], [], []>} : vector<28x96xbf16>, vector<96x224xbf16>, vector<28x224xf32> -> vector<28x224xf32>
    %30 = arith.addf %24, %29 : vector<28x224xf32>
    %c0_17 = arith.constant 0 : index
    %c0_18 = arith.constant 0 : index
    %31 = vector.load %arg3[%c0_17, %c0_18] : memref<1x224xf32, #tpu.memory_space<vmem>>, vector<1x224xf32>
    %32 = vector.broadcast %31 : vector<1x224xf32> to vector<28x224xf32>
    %33 = arith.addf %30, %32 : vector<28x224xf32>
    %cst_19 = arith.constant 0.000000e+00 : f32
    %34 = vector.broadcast %cst_19 : f32 to vector<28x224xf32>
    %35 = arith.cmpf oge, %33, %34 : vector<28x224xf32>
    %cst_20 = arith.constant 0.00999999977 : f32
    %36 = vector.broadcast %cst_20 : f32 to vector<28x224xf32>
    %37 = arith.mulf %36, %33 : vector<28x224xf32>
    %38 = arith.select %35, %33, %37 : vector<28x224xi1>, vector<28x224xf32>
    %39 = vector.extract_strided_slice %38 {offsets = [0, 0], sizes = [27, 224], strides = [1, 1]} : vector<28x224xf32> to vector<27x224xf32>
    %40 = vector.extract_strided_slice %38 {offsets = [1, 0], sizes = [27, 224], strides = [1, 1]} : vector<28x224xf32> to vector<27x224xf32>
    %41 = arith.maximumf %39, %40 : vector<27x224xf32>
    %c0_21 = arith.constant 0 : index
    %c0_22 = arith.constant 0 : index
    %42 = vector.load %arg6[%c0_21, %c0_22] : memref<14x27xf32, #tpu.memory_space<vmem>>, vector<14x27xf32>
    %cst_23 = arith.constant dense<0.000000e+00> : vector<14x224xf32>
    %43 = tpu.matmul %42, %41, %cst_23 {dimension_numbers = #tpu.dot_dimension_numbers<[1], [0], [0], [1], [0, 0, 1, 1], [], []>} : vector<14x27xf32>, vector<27x224xf32>, vector<14x224xf32> -> vector<14x224xf32>
    %44 = vector.extract_strided_slice %43 {offsets = [0, 0], sizes = [14, 216], strides = [1, 1]} : vector<14x224xf32> to vector<14x216xf32>
    %45 = vector.extract_strided_slice %43 {offsets = [0, 8], sizes = [14, 216], strides = [1, 1]} : vector<14x224xf32> to vector<14x216xf32>
    %46 = arith.maximumf %44, %45 : vector<14x216xf32>
    %47 = vector.extract_strided_slice %46 {offsets = [0, 0], sizes = [10, 216], strides = [1, 1]} : vector<14x216xf32> to vector<10x216xf32>
    %48 = arith.truncf %47 : vector<10x216xf32> to vector<10x216xbf16>
    %c0_24 = arith.constant 0 : index
    %c0_25 = arith.constant 0 : index
    %c0_26 = arith.constant 0 : index
    %49 = vector.load %arg4[%c0_24, %c0_25, %c0_26] : memref<5x216x160xbf16, #tpu.memory_space<vmem>>, vector<1x216x160xbf16>
    %50 = vector.shape_cast %49 : vector<1x216x160xbf16> to vector<216x160xbf16>
    %cst_27 = arith.constant dense<0.000000e+00> : vector<10x160xf32>
    %51 = tpu.matmul %48, %50, %cst_27 {dimension_numbers = #tpu.dot_dimension_numbers<[1], [0], [0], [1], [0, 0, 1, 1], [], []>} : vector<10x216xbf16>, vector<216x160xbf16>, vector<10x160xf32> -> vector<10x160xf32>
    %52 = vector.extract_strided_slice %46 {offsets = [1, 0], sizes = [10, 216], strides = [1, 1]} : vector<14x216xf32> to vector<10x216xf32>
    %53 = arith.truncf %52 : vector<10x216xf32> to vector<10x216xbf16>
    %c1_28 = arith.constant 1 : index
    %c0_29 = arith.constant 0 : index
    %c0_30 = arith.constant 0 : index
    %54 = vector.load %arg4[%c1_28, %c0_29, %c0_30] : memref<5x216x160xbf16, #tpu.memory_space<vmem>>, vector<1x216x160xbf16>
    %55 = vector.shape_cast %54 : vector<1x216x160xbf16> to vector<216x160xbf16>
    %cst_31 = arith.constant dense<0.000000e+00> : vector<10x160xf32>
    %56 = tpu.matmul %53, %55, %cst_31 {dimension_numbers = #tpu.dot_dimension_numbers<[1], [0], [0], [1], [0, 0, 1, 1], [], []>} : vector<10x216xbf16>, vector<216x160xbf16>, vector<10x160xf32> -> vector<10x160xf32>
    %57 = arith.addf %51, %56 : vector<10x160xf32>
    %58 = vector.extract_strided_slice %46 {offsets = [2, 0], sizes = [10, 216], strides = [1, 1]} : vector<14x216xf32> to vector<10x216xf32>
    %59 = arith.truncf %58 : vector<10x216xf32> to vector<10x216xbf16>
    %c2_32 = arith.constant 2 : index
    %c0_33 = arith.constant 0 : index
    %c0_34 = arith.constant 0 : index
    %60 = vector.load %arg4[%c2_32, %c0_33, %c0_34] : memref<5x216x160xbf16, #tpu.memory_space<vmem>>, vector<1x216x160xbf16>
    %61 = vector.shape_cast %60 : vector<1x216x160xbf16> to vector<216x160xbf16>
    %cst_35 = arith.constant dense<0.000000e+00> : vector<10x160xf32>
    %62 = tpu.matmul %59, %61, %cst_35 {dimension_numbers = #tpu.dot_dimension_numbers<[1], [0], [0], [1], [0, 0, 1, 1], [], []>} : vector<10x216xbf16>, vector<216x160xbf16>, vector<10x160xf32> -> vector<10x160xf32>
    %63 = arith.addf %57, %62 : vector<10x160xf32>
    %64 = vector.extract_strided_slice %46 {offsets = [3, 0], sizes = [10, 216], strides = [1, 1]} : vector<14x216xf32> to vector<10x216xf32>
    %65 = arith.truncf %64 : vector<10x216xf32> to vector<10x216xbf16>
    %c3_36 = arith.constant 3 : index
    %c0_37 = arith.constant 0 : index
    %c0_38 = arith.constant 0 : index
    %66 = vector.load %arg4[%c3_36, %c0_37, %c0_38] : memref<5x216x160xbf16, #tpu.memory_space<vmem>>, vector<1x216x160xbf16>
    %67 = vector.shape_cast %66 : vector<1x216x160xbf16> to vector<216x160xbf16>
    %cst_39 = arith.constant dense<0.000000e+00> : vector<10x160xf32>
    %68 = tpu.matmul %65, %67, %cst_39 {dimension_numbers = #tpu.dot_dimension_numbers<[1], [0], [0], [1], [0, 0, 1, 1], [], []>} : vector<10x216xbf16>, vector<216x160xbf16>, vector<10x160xf32> -> vector<10x160xf32>
    %69 = arith.addf %63, %68 : vector<10x160xf32>
    %70 = vector.extract_strided_slice %46 {offsets = [4, 0], sizes = [10, 216], strides = [1, 1]} : vector<14x216xf32> to vector<10x216xf32>
    %71 = arith.truncf %70 : vector<10x216xf32> to vector<10x216xbf16>
    %c4_40 = arith.constant 4 : index
    %c0_41 = arith.constant 0 : index
    %c0_42 = arith.constant 0 : index
    %72 = vector.load %arg4[%c4_40, %c0_41, %c0_42] : memref<5x216x160xbf16, #tpu.memory_space<vmem>>, vector<1x216x160xbf16>
    %73 = vector.shape_cast %72 : vector<1x216x160xbf16> to vector<216x160xbf16>
    %cst_43 = arith.constant dense<0.000000e+00> : vector<10x160xf32>
    %74 = tpu.matmul %71, %73, %cst_43 {dimension_numbers = #tpu.dot_dimension_numbers<[1], [0], [0], [1], [0, 0, 1, 1], [], []>} : vector<10x216xbf16>, vector<216x160xbf16>, vector<10x160xf32> -> vector<10x160xf32>
    %75 = arith.addf %69, %74 : vector<10x160xf32>
    %c0_44 = arith.constant 0 : index
    %c0_45 = arith.constant 0 : index
    %76 = vector.load %arg5[%c0_44, %c0_45] : memref<1x160xf32, #tpu.memory_space<vmem>>, vector<1x160xf32>
    %77 = vector.broadcast %76 : vector<1x160xf32> to vector<10x160xf32>
    %78 = arith.addf %75, %77 : vector<10x160xf32>
    %cst_46 = arith.constant 0.000000e+00 : f32
    %79 = vector.broadcast %cst_46 : f32 to vector<10x160xf32>
    %80 = arith.cmpf oge, %78, %79 : vector<10x160xf32>
    %cst_47 = arith.constant 0.00999999977 : f32
    %81 = vector.broadcast %cst_47 : f32 to vector<10x160xf32>
    %82 = arith.mulf %81, %78 : vector<10x160xf32>
    %83 = arith.select %80, %78, %82 : vector<10x160xi1>, vector<10x160xf32>
    %84 = vector.extract_strided_slice %83 {offsets = [0, 0], sizes = [9, 160], strides = [1, 1]} : vector<10x160xf32> to vector<9x160xf32>
    %85 = vector.extract_strided_slice %83 {offsets = [1, 0], sizes = [9, 160], strides = [1, 1]} : vector<10x160xf32> to vector<9x160xf32>
    %86 = arith.maximumf %84, %85 : vector<9x160xf32>
    %c0_48 = arith.constant 0 : index
    %c0_49 = arith.constant 0 : index
    %87 = vector.load %arg7[%c0_48, %c0_49] : memref<5x9xf32, #tpu.memory_space<vmem>>, vector<5x9xf32>
    %cst_50 = arith.constant dense<0.000000e+00> : vector<5x160xf32>
    %88 = tpu.matmul %87, %86, %cst_50 {dimension_numbers = #tpu.dot_dimension_numbers<[1], [0], [0], [1], [0, 0, 1, 1], [], []>} : vector<5x9xf32>, vector<9x160xf32>, vector<5x160xf32> -> vector<5x160xf32>
    %89 = vector.extract_strided_slice %88 {offsets = [0, 0], sizes = [5, 144], strides = [1, 1]} : vector<5x160xf32> to vector<5x144xf32>
    %90 = vector.extract_strided_slice %88 {offsets = [0, 16], sizes = [5, 144], strides = [1, 1]} : vector<5x160xf32> to vector<5x144xf32>
    %91 = arith.maximumf %89, %90 : vector<5x144xf32>
    %92 = vector.extract_strided_slice %91 {offsets = [0, 0], sizes = [1, 144], strides = [1, 1]} : vector<5x144xf32> to vector<1x144xf32>
    %93 = arith.truncf %92 : vector<1x144xf32> to vector<1x144xbf16>
    %c0_51 = arith.constant 0 : index
    %c0_52 = arith.constant 0 : index
    %c0_53 = arith.constant 0 : index
    %94 = vector.load %arg8[%c0_51, %c0_52, %c0_53] : memref<5x144x32xbf16, #tpu.memory_space<vmem>>, vector<1x144x32xbf16>
    %95 = vector.shape_cast %94 : vector<1x144x32xbf16> to vector<144x32xbf16>
    %cst_54 = arith.constant dense<0.000000e+00> : vector<1x32xf32>
    %96 = tpu.matmul %93, %95, %cst_54 {dimension_numbers = #tpu.dot_dimension_numbers<[1], [0], [0], [1], [0, 0, 1, 1], [], []>} : vector<1x144xbf16>, vector<144x32xbf16>, vector<1x32xf32> -> vector<1x32xf32>
    %97 = vector.extract_strided_slice %91 {offsets = [1, 0], sizes = [1, 144], strides = [1, 1]} : vector<5x144xf32> to vector<1x144xf32>
    %98 = arith.truncf %97 : vector<1x144xf32> to vector<1x144xbf16>
    %c1_55 = arith.constant 1 : index
    %c0_56 = arith.constant 0 : index
    %c0_57 = arith.constant 0 : index
    %99 = vector.load %arg8[%c1_55, %c0_56, %c0_57] : memref<5x144x32xbf16, #tpu.memory_space<vmem>>, vector<1x144x32xbf16>
    %100 = vector.shape_cast %99 : vector<1x144x32xbf16> to vector<144x32xbf16>
    %cst_58 = arith.constant dense<0.000000e+00> : vector<1x32xf32>
    %101 = tpu.matmul %98, %100, %cst_58 {dimension_numbers = #tpu.dot_dimension_numbers<[1], [0], [0], [1], [0, 0, 1, 1], [], []>} : vector<1x144xbf16>, vector<144x32xbf16>, vector<1x32xf32> -> vector<1x32xf32>
    %102 = arith.addf %96, %101 : vector<1x32xf32>
    %103 = vector.extract_strided_slice %91 {offsets = [2, 0], sizes = [1, 144], strides = [1, 1]} : vector<5x144xf32> to vector<1x144xf32>
    %104 = arith.truncf %103 : vector<1x144xf32> to vector<1x144xbf16>
    %c2_59 = arith.constant 2 : index
    %c0_60 = arith.constant 0 : index
    %c0_61 = arith.constant 0 : index
    %105 = vector.load %arg8[%c2_59, %c0_60, %c0_61] : memref<5x144x32xbf16, #tpu.memory_space<vmem>>, vector<1x144x32xbf16>
    %106 = vector.shape_cast %105 : vector<1x144x32xbf16> to vector<144x32xbf16>
    %cst_62 = arith.constant dense<0.000000e+00> : vector<1x32xf32>
    %107 = tpu.matmul %104, %106, %cst_62 {dimension_numbers = #tpu.dot_dimension_numbers<[1], [0], [0], [1], [0, 0, 1, 1], [], []>} : vector<1x144xbf16>, vector<144x32xbf16>, vector<1x32xf32> -> vector<1x32xf32>
    %108 = arith.addf %102, %107 : vector<1x32xf32>
    %109 = vector.extract_strided_slice %91 {offsets = [3, 0], sizes = [1, 144], strides = [1, 1]} : vector<5x144xf32> to vector<1x144xf32>
    %110 = arith.truncf %109 : vector<1x144xf32> to vector<1x144xbf16>
    %c3_63 = arith.constant 3 : index
    %c0_64 = arith.constant 0 : index
    %c0_65 = arith.constant 0 : index
    %111 = vector.load %arg8[%c3_63, %c0_64, %c0_65] : memref<5x144x32xbf16, #tpu.memory_space<vmem>>, vector<1x144x32xbf16>
    %112 = vector.shape_cast %111 : vector<1x144x32xbf16> to vector<144x32xbf16>
    %cst_66 = arith.constant dense<0.000000e+00> : vector<1x32xf32>
    %113 = tpu.matmul %110, %112, %cst_66 {dimension_numbers = #tpu.dot_dimension_numbers<[1], [0], [0], [1], [0, 0, 1, 1], [], []>} : vector<1x144xbf16>, vector<144x32xbf16>, vector<1x32xf32> -> vector<1x32xf32>
    %114 = arith.addf %108, %113 : vector<1x32xf32>
    %115 = vector.extract_strided_slice %91 {offsets = [4, 0], sizes = [1, 144], strides = [1, 1]} : vector<5x144xf32> to vector<1x144xf32>
    %116 = arith.truncf %115 : vector<1x144xf32> to vector<1x144xbf16>
    %c4_67 = arith.constant 4 : index
    %c0_68 = arith.constant 0 : index
    %c0_69 = arith.constant 0 : index
    %117 = vector.load %arg8[%c4_67, %c0_68, %c0_69] : memref<5x144x32xbf16, #tpu.memory_space<vmem>>, vector<1x144x32xbf16>
    %118 = vector.shape_cast %117 : vector<1x144x32xbf16> to vector<144x32xbf16>
    %cst_70 = arith.constant dense<0.000000e+00> : vector<1x32xf32>
    %119 = tpu.matmul %116, %118, %cst_70 {dimension_numbers = #tpu.dot_dimension_numbers<[1], [0], [0], [1], [0, 0, 1, 1], [], []>} : vector<1x144xbf16>, vector<144x32xbf16>, vector<1x32xf32> -> vector<1x32xf32>
    %120 = arith.addf %114, %119 : vector<1x32xf32>
    %c0_71 = arith.constant 0 : index
    %c0_72 = arith.constant 0 : index
    %121 = vector.load %arg9[%c0_71, %c0_72] : memref<1x32xf32, #tpu.memory_space<vmem>>, vector<1x32xf32>
    %122 = arith.addf %120, %121 : vector<1x32xf32>
    %cst_73 = arith.constant 0.000000e+00 : f32
    %123 = vector.broadcast %cst_73 : f32 to vector<1x32xf32>
    %124 = arith.cmpf oge, %122, %123 : vector<1x32xf32>
    %cst_74 = arith.constant 0.00999999977 : f32
    %125 = vector.broadcast %cst_74 : f32 to vector<1x32xf32>
    %126 = arith.mulf %125, %122 : vector<1x32xf32>
    %127 = arith.select %124, %122, %126 : vector<1x32xi1>, vector<1x32xf32>
    %128 = arith.truncf %127 : vector<1x32xf32> to vector<1x32xbf16>
    %c0_75 = arith.constant 0 : index
    %c0_76 = arith.constant 0 : index
    %129 = vector.load %arg10[%c0_75, %c0_76] : memref<32x32xbf16, #tpu.memory_space<vmem>>, vector<32x32xbf16>
    %cst_77 = arith.constant dense<0.000000e+00> : vector<1x32xf32>
    %130 = tpu.matmul %128, %129, %cst_77 {dimension_numbers = #tpu.dot_dimension_numbers<[1], [0], [0], [1], [0, 0, 1, 1], [], []>} : vector<1x32xbf16>, vector<32x32xbf16>, vector<1x32xf32> -> vector<1x32xf32>
    %c0_78 = arith.constant 0 : index
    %c0_79 = arith.constant 0 : index
    %131 = vector.load %arg11[%c0_78, %c0_79] : memref<1x32xf32, #tpu.memory_space<vmem>>, vector<1x32xf32>
    %132 = arith.addf %130, %131 : vector<1x32xf32>
    %cst_80 = arith.constant 0.000000e+00 : f32
    %133 = vector.broadcast %cst_80 : f32 to vector<1x32xf32>
    %134 = arith.cmpf oge, %132, %133 : vector<1x32xf32>
    %cst_81 = arith.constant 0.00999999977 : f32
    %135 = vector.broadcast %cst_81 : f32 to vector<1x32xf32>
    %136 = arith.mulf %135, %132 : vector<1x32xf32>
    %137 = arith.select %134, %132, %136 : vector<1x32xi1>, vector<1x32xf32>
    %138 = arith.truncf %137 : vector<1x32xf32> to vector<1x32xbf16>
    %c0_82 = arith.constant 0 : index
    %c0_83 = arith.constant 0 : index
    %139 = vector.load %arg12[%c0_82, %c0_83] : memref<32x10xbf16, #tpu.memory_space<vmem>>, vector<32x10xbf16>
    %cst_84 = arith.constant dense<0.000000e+00> : vector<1x10xf32>
    %140 = tpu.matmul %138, %139, %cst_84 {dimension_numbers = #tpu.dot_dimension_numbers<[1], [0], [0], [1], [0, 0, 1, 1], [], []>} : vector<1x32xbf16>, vector<32x10xbf16>, vector<1x10xf32> -> vector<1x10xf32>
    %c0_85 = arith.constant 0 : index
    %c0_86 = arith.constant 0 : index
    %141 = vector.load %arg13[%c0_85, %c0_86] : memref<1x10xf32, #tpu.memory_space<vmem>>, vector<1x10xf32>
    %142 = arith.addf %140, %141 : vector<1x10xf32>
    %c0_87 = arith.constant 0 : index
    %c0_88 = arith.constant 0 : index
    %c0_89 = arith.constant 0 : index
    %143 = vector.load %arg14[%c0_87, %c0_88, %c0_89] : memref<1x1x10xf32, #tpu.memory_space<vmem>>, vector<1x1x10xf32>
    %144 = vector.shape_cast %143 : vector<1x1x10xf32> to vector<1x10xf32>
    %145 = vector.shape_cast %142 : vector<1x10xf32> to vector<1x1x10xf32>
    tpu.vector_store %arg14[%c0_87, %c0_88, %c0_89], %145 {strides = array<i32>} : memref<1x1x10xf32, #tpu.memory_space<vmem>>, vector<1x1x10xf32>,
    return
  }
  func.func @transform_0(%arg0: i32) -> (i32, i32, i32) {
    %c0_i32 = arith.constant 0 : i32
    %c0_i32_0 = arith.constant 0 : i32
    %c0_i32_1 = arith.constant 0 : i32
    return %arg0, %c0_i32, %c0_i32_0 : i32, i32, i32
  }
  func.func @transform_1(%arg0: i32) -> (i32, i32, i32) {
    %c0_i32 = arith.constant 0 : i32
    %c0_i32_0 = arith.constant 0 : i32
    %c0_i32_1 = arith.constant 0 : i32
    %c0_i32_2 = arith.constant 0 : i32
    return %c0_i32, %c0_i32_0, %c0_i32_1 : i32, i32, i32
  }
  func.func @transform_2(%arg0: i32) -> (i32, i32) {
    %c0_i32 = arith.constant 0 : i32
    %c0_i32_0 = arith.constant 0 : i32
    %c0_i32_1 = arith.constant 0 : i32
    return %c0_i32, %c0_i32_0 : i32, i32
  }
  func.func @transform_3(%arg0: i32) -> (i32, i32, i32) {
    %c0_i32 = arith.constant 0 : i32
    %c0_i32_0 = arith.constant 0 : i32
    %c0_i32_1 = arith.constant 0 : i32
    %c0_i32_2 = arith.constant 0 : i32
    return %c0_i32, %c0_i32_0, %c0_i32_1 : i32, i32, i32
  }
  func.func @transform_4(%arg0: i32) -> (i32, i32) {
    %c0_i32 = arith.constant 0 : i32
    %c0_i32_0 = arith.constant 0 : i32
    %c0_i32_1 = arith.constant 0 : i32
    return %c0_i32, %c0_i32_0 : i32, i32
  }
  func.func @transform_5(%arg0: i32) -> (i32, i32) {
    %c0_i32 = arith.constant 0 : i32
    %c0_i32_0 = arith.constant 0 : i32
    %c0_i32_1 = arith.constant 0 : i32
    return %c0_i32, %c0_i32_0 : i32, i32
  }
  func.func @transform_6(%arg0: i32) -> (i32, i32) {
    %c0_i32 = arith.constant 0 : i32
    %c0_i32_0 = arith.constant 0 : i32
    %c0_i32_1 = arith.constant 0 : i32
    return %c0_i32, %c0_i32_0 : i32, i32
  }
  func.func @transform_7(%arg0: i32) -> (i32, i32, i32) {
    %c0_i32 = arith.constant 0 : i32
    %c0_i32_0 = arith.constant 0 : i32
    %c0_i32_1 = arith.constant 0 : i32
    %c0_i32_2 = arith.constant 0 : i32
    return %c0_i32, %c0_i32_0, %c0_i32_1 : i32, i32, i32
  }
  func.func @transform_8(%arg0: i32) -> (i32, i32) {
    %c0_i32 = arith.constant 0 : i32
    %c0_i32_0 = arith.constant 0 : i32
    %c0_i32_1 = arith.constant 0 : i32
    return %c0_i32, %c0_i32_0 : i32, i32
  }
  func.func @transform_9(%arg0: i32) -> (i32, i32) {
    %c0_i32 = arith.constant 0 : i32
    %c0_i32_0 = arith.constant 0 : i32
    %c0_i32_1 = arith.constant 0 : i32
    return %c0_i32, %c0_i32_0 : i32, i32
  }
  func.func @transform_10(%arg0: i32) -> (i32, i32) {
    %c0_i32 = arith.constant 0 : i32
    %c0_i32_0 = arith.constant 0 : i32
    %c0_i32_1 = arith.constant 0 : i32
    return %c0_i32, %c0_i32_0 : i32, i32
  }
  func.func @transform_11(%arg0: i32) -> (i32, i32) {
    %c0_i32 = arith.constant 0 : i32
    %c0_i32_0 = arith.constant 0 : i32
    %c0_i32_1 = arith.constant 0 : i32
    return %c0_i32, %c0_i32_0 : i32, i32
  }
  func.func @transform_12(%arg0: i32) -> (i32, i32) {
    %c0_i32 = arith.constant 0 : i32
    %c0_i32_0 = arith.constant 0 : i32
    %c0_i32_1 = arith.constant 0 : i32
    return %c0_i32, %c0_i32_0 : i32, i32
  }
  func.func @transform_13(%arg0: i32) -> (i32, i32, i32) {
    %c0_i32 = arith.constant 0 : i32
    %c0_i32_0 = arith.constant 0 : i32
    %c0_i32_1 = arith.constant 0 : i32
    return %arg0, %c0_i32, %c0_i32_0 : i32, i32, i32
  }
}

</mosaic_0001>

<llo_original>
// kernel: cifar_forward.1
$region0: #{cifar_forward.1}
  #allocation0 [shape = 'u32[]', space=smem, size = 0x4, offset = 0x4, fixed_abs, tag = 'smem constant byte address 0x4 - core index']
  #allocation1 [shape = 'u32[144,128]{1,0:T(1,128)}', space=vmem, size = 0x12000, scoped, tag = 'internal scratch']
  %s0 = inlined_call_operand.vmem [shape: f32[2,32,96], index: 0, kind: input, shape index: {}]
  %s1 = inlined_call_operand.vmem [shape: bf16[5,96,224], index: 1, kind: input, shape index: {}]
  %s2 = inlined_call_operand.vmem [shape: f32[1,224], index: 2, kind: input, shape index: {}]
  %s3 = inlined_call_operand.vmem [shape: bf16[5,216,160], index: 3, kind: input, shape index: {}]
  %s4 = inlined_call_operand.vmem [shape: f32[1,160], index: 4, kind: input, shape index: {}]
  %s5 = inlined_call_operand.vmem [shape: f32[14,27], index: 5, kind: input, shape index: {}]
  %s6 = inlined_call_operand.vmem [shape: f32[5,9], index: 6, kind: input, shape index: {}]
  %s7 = inlined_call_operand.vmem [shape: bf16[5,144,32], index: 7, kind: input, shape index: {}]
  %s8 = inlined_call_operand.vmem [shape: f32[1,32], index: 8, kind: input, shape index: {}]
  %s9 = inlined_call_operand.vmem [shape: bf16[32,32], index: 9, kind: input, shape index: {}]
  %s10 = inlined_call_operand.vmem [shape: f32[1,32], index: 10, kind: input, shape index: {}]
  %s11 = inlined_call_operand.vmem [shape: bf16[32,10], index: 11, kind: input, shape index: {}]
  %s12 = inlined_call_operand.vmem [shape: f32[1,10], index: 12, kind: input, shape index: {}]
  %s13 = inlined_call_operand.hbm [shape: f32[2,1,10], index: 13, kind: output, shape index: {}]
  %s14 = sld [smem:[#allocation0]]
  $region85: #{cifar_forward.1} parent=0
    _
  %s16 = ssub.s32 1, %s14
  %s17 = scalar_select 0, %s16, %s14
  $region1: #{cifar_forward.1} parent=0
    #allocation2 [shape = 'u8[1024]{0}', space=vmem, size = 0x400, scoped, tag = 'output window, operand 0']
    #allocation3 [shape = 's32[2]{0}', space=sflag, size = 0x8, scoped, tag = 'scoped memory for cifar_forward.1']
    %18 = vsyncpa [#allocation3], 0
    %s19 = scalar_lea.sflag [#allocation3], 1
    %20 = vsyncpa %s19, 0
    loop: start=0, step=1, limit=4
    $region2: #{cifar_forward.1} parent=1 // loop_pre_header
      _
    $region3: #{cifar_forward.1} parent=1 // loop_header
      %s22 = sphi 0, %s26
      %p23 = scmp.ge.s32.totalorder %s22, 4
      %s32 = sphi 0, %s34
      %s35 = sphi 0, %s32
      %s36 = sphi 0, %s35
      %s52 = sphi 0, %s36
      %s56 = sphi 0, %s56
      %s58 = sphi 0, %s56
      %s59 = sphi 0, %s58
      %s73 = sphi 0, %s59
      %s77 = sphi 0, %s77
      %s79 = sphi 0, %s77
      %s80 = sphi 0, %s79
      %s94 = sphi 0, %s80
      %s98 = sphi 0, %s98
      %s100 = sphi 0, %s98
      %s101 = sphi 0, %s100
      %s115 = sphi 0, %s101
      %s119 = sphi 0, %s119
      %s121 = sphi 0, %s119
      %s122 = sphi 0, %s121
      %s136 = sphi 0, %s122
      %s140 = sphi 0, %s140
      %s142 = sphi 0, %s140
      %s143 = sphi 0, %s142
      %s157 = sphi 0, %s143
      %s161 = sphi 0, %s161
      %s163 = sphi 0, %s161
      %s164 = sphi 0, %s163
      %s178 = sphi 0, %s164
      %s182 = sphi 0, %s182
      %s184 = sphi 0, %s182
      %s185 = sphi 0, %s184
      %s199 = sphi 0, %s185
      %s203 = sphi 0, %s203
      %s205 = sphi 0, %s203
      %s206 = sphi 0, %s205
      %s220 = sphi 0, %s206
      %s224 = sphi 0, %s224
      %s226 = sphi 0, %s224
      %s227 = sphi 0, %s226
      %s241 = sphi 0, %s227
      %s245 = sphi 0, %s245
      %s247 = sphi 0, %s245
      %s248 = sphi 0, %s247
      %s262 = sphi 0, %s248
      %s266 = sphi 0, %s266
      %s268 = sphi 0, %s266
      %s269 = sphi 0, %s268
      %s283 = sphi 0, %s269
      %s287 = sphi 0, %s287
      %s289 = sphi 0, %s287
      %s290 = sphi 0, %s289
      %s304 = sphi 0, %s290
      %s310 = sphi 0, %s312
      %s313 = sphi 0, %s310
      %s314 = sphi 0, %s313
      %s330 = sphi 0, %s314
    $region4: #{cifar_forward.1} parent=1 // loop_header_branch
      %25 = sbr.rel (%p23) target = $region8
    $region5: #{cifar_forward.1} parent=1 // loop_body
      %s27 = ssub.s32 %s22, 1
      %s28 = ssub.s32 %s22, 2
      %s29 = sadd.s32 %s22, 1
      %s30 = ssub.s32 %s22, %s29
      %p31 = scmp.eq.s32.totalorder %s30, 0
      %s33 = sadd.s32 %s32, 1
      %s34 = scalar_select %p31, %s32, %s33
      %p37 = pneg %p31
      %p38 = scmp.eq.s32.totalorder %s22, 1
      %p39 = por %p37, %p38
      %p40 = scmp.ne.s32.totalorder %s32, %s35
      %p41 = scmp.eq.s32.totalorder %s22, 0
      %p42 = por %p40, %p41
      %p43 = scmp.ne.s32.totalorder %s32, %s35
      %p44 = scmp.eq.s32.totalorder %s27, 1
      %p45 = por %p43, %p44
      %p46 = scmp.ne.s32.totalorder %s35, %s36
      %p47 = scmp.eq.s32.totalorder %s27, 0
      %p48 = por %p46, %p47
      %p49 = scmp.ne.s32.totalorder %s35, %s36
      %p50 = scmp.eq.s32.totalorder %s28, 1
      %p51 = por %p49, %p50
      %p53 = scmp.ne.s32.totalorder %s36, %s52
      %p54 = scmp.eq.s32.totalorder %s28, 0
      %p55 = por %p53, %p54
      %s57 = sadd.s32 %s56, 1
      %p60 = scmp.eq.s32.totalorder %s22, 1
      %p61 = scmp.ne.s32.totalorder %s56, %s58
      %p62 = scmp.eq.s32.totalorder %s22, 0
      %p63 = por %p61, %p62
      %p64 = scmp.ne.s32.totalorder %s56, %s58
      %p65 = scmp.eq.s32.totalorder %s27, 1
      %p66 = por %p64, %p65
      %p67 = scmp.ne.s32.totalorder %s58, %s59
      %p68 = scmp.eq.s32.totalorder %s27, 0
      %p69 = por %p67, %p68
      %p70 = scmp.ne.s32.totalorder %s58, %s59
      %p71 = scmp.eq.s32.totalorder %s28, 1
      %p72 = por %p70, %p71
      %p74 = scmp.ne.s32.totalorder %s59, %s73
      %p75 = scmp.eq.s32.totalorder %s28, 0
      %p76 = por %p74, %p75
      %s78 = sadd.s32 %s77, 1
      %p81 = scmp.eq.s32.totalorder %s22, 1
      %p82 = scmp.ne.s32.totalorder %s77, %s79
      %p83 = scmp.eq.s32.totalorder %s22, 0
      %p84 = por %p82, %p83
      %p85 = scmp.ne.s32.totalorder %s77, %s79
      %p86 = scmp.eq.s32.totalorder %s27, 1
      %p87 = por %p85, %p86
      %p88 = scmp.ne.s32.totalorder %s79, %s80
      %p89 = scmp.eq.s32.totalorder %s27, 0
      %p90 = por %p88, %p89
      %p91 = scmp.ne.s32.totalorder %s79, %s80
      %p92 = scmp.eq.s32.totalorder %s28, 1
      %p93 = por %p91, %p92
      %p95 = scmp.ne.s32.totalorder %s80, %s94
      %p96 = scmp.eq.s32.totalorder %s28, 0
      %p97 = por %p95, %p96
      %s99 = sadd.s32 %s98, 1
      %p102 = scmp.eq.s32.totalorder %s22, 1
      %p103 = scmp.ne.s32.totalorder %s98, %s100
      %p104 = scmp.eq.s32.totalorder %s22, 0
      %p105 = por %p103, %p104
      %p106 = scmp.ne.s32.totalorder %s98, %s100
      %p107 = scmp.eq.s32.totalorder %s27, 1
      %p108 = por %p106, %p107
      %p109 = scmp.ne.s32.totalorder %s100, %s101
      %p110 = scmp.eq.s32.totalorder %s27, 0
      %p111 = por %p109, %p110
      %p112 = scmp.ne.s32.totalorder %s100, %s101
      %p113 = scmp.eq.s32.totalorder %s28, 1
      %p114 = por %p112, %p113
      %p116 = scmp.ne.s32.totalorder %s101, %s115
      %p117 = scmp.eq.s32.totalorder %s28, 0
      %p118 = por %p116, %p117
      %s120 = sadd.s32 %s119, 1
      %p123 = scmp.eq.s32.totalorder %s22, 1
      %p124 = scmp.ne.s32.totalorder %s119, %s121
      %p125 = scmp.eq.s32.totalorder %s22, 0
      %p126 = por %p124, %p125
      %p127 = scmp.ne.s32.totalorder %s119, %s121
      %p128 = scmp.eq.s32.totalorder %s27, 1
      %p129 = por %p127, %p128
      %p130 = scmp.ne.s32.totalorder %s121, %s122
      %p131 = scmp.eq.s32.totalorder %s27, 0
      %p132 = por %p130, %p131
      %p133 = scmp.ne.s32.totalorder %s121, %s122
      %p134 = scmp.eq.s32.totalorder %s28, 1
      %p135 = por %p133, %p134
      %p137 = scmp.ne.s32.totalorder %s122, %s136
      %p138 = scmp.eq.s32.totalorder %s28, 0
      %p139 = por %p137, %p138
      %s141 = sadd.s32 %s140, 1
      %p144 = scmp.eq.s32.totalorder %s22, 1
      %p145 = scmp.ne.s32.totalorder %s140, %s142
      %p146 = scmp.eq.s32.totalorder %s22, 0
      %p147 = por %p145, %p146
      %p148 = scmp.ne.s32.totalorder %s140, %s142
      %p149 = scmp.eq.s32.totalorder %s27, 1
      %p150 = por %p148, %p149
      %p151 = scmp.ne.s32.totalorder %s142, %s143
      %p152 = scmp.eq.s32.totalorder %s27, 0
      %p153 = por %p151, %p152
      %p154 = scmp.ne.s32.totalorder %s142, %s143
      %p155 = scmp.eq.s32.totalorder %s28, 1
      %p156 = por %p154, %p155
      %p158 = scmp.ne.s32.totalorder %s143, %s157
      %p159 = scmp.eq.s32.totalorder %s28, 0
      %p160 = por %p158, %p159
      %s162 = sadd.s32 %s161, 1
      %p165 = scmp.eq.s32.totalorder %s22, 1
      %p166 = scmp.ne.s32.totalorder %s161, %s163
      %p167 = scmp.eq.s32.totalorder %s22, 0
      %p168 = por %p166, %p167
      %p169 = scmp.ne.s32.totalorder %s161, %s163
      %p170 = scmp.eq.s32.totalorder %s27, 1
      %p171 = por %p169, %p170
      %p172 = scmp.ne.s32.totalorder %s163, %s164
      %p173 = scmp.eq.s32.totalorder %s27, 0
      %p174 = por %p172, %p173
      %p175 = scmp.ne.s32.totalorder %s163, %s164
      %p176 = scmp.eq.s32.totalorder %s28, 1
      %p177 = por %p175, %p176
      %p179 = scmp.ne.s32.totalorder %s164, %s178
      %p180 = scmp.eq.s32.totalorder %s28, 0
      %p181 = por %p179, %p180
      %s183 = sadd.s32 %s182, 1
      %p186 = scmp.eq.s32.totalorder %s22, 1
      %p187 = scmp.ne.s32.totalorder %s182, %s184
      %p188 = scmp.eq.s32.totalorder %s22, 0
      %p189 = por %p187, %p188
      %p190 = scmp.ne.s32.totalorder %s182, %s184
      %p191 = scmp.eq.s32.totalorder %s27, 1
      %p192 = por %p190, %p191
      %p193 = scmp.ne.s32.totalorder %s184, %s185
      %p194 = scmp.eq.s32.totalorder %s27, 0
      %p195 = por %p193, %p194
      %p196 = scmp.ne.s32.totalorder %s184, %s185
      %p197 = scmp.eq.s32.totalorder %s28, 1
      %p198 = por %p196, %p197
      %p200 = scmp.ne.s32.totalorder %s185, %s199
      %p201 = scmp.eq.s32.totalorder %s28, 0
      %p202 = por %p200, %p201
      %s204 = sadd.s32 %s203, 1
      %p207 = scmp.eq.s32.totalorder %s22, 1
      %p208 = scmp.ne.s32.totalorder %s203, %s205
      %p209 = scmp.eq.s32.totalorder %s22, 0
      %p210 = por %p208, %p209
      %p211 = scmp.ne.s32.totalorder %s203, %s205
      %p212 = scmp.eq.s32.totalorder %s27, 1
      %p213 = por %p211, %p212
      %p214 = scmp.ne.s32.totalorder %s205, %s206
      %p215 = scmp.eq.s32.totalorder %s27, 0
      %p216 = por %p214, %p215
      %p217 = scmp.ne.s32.totalorder %s205, %s206
      %p218 = scmp.eq.s32.totalorder %s28, 1
      %p219 = por %p217, %p218
      %p221 = scmp.ne.s32.totalorder %s206, %s220
      %p222 = scmp.eq.s32.totalorder %s28, 0
      %p223 = por %p221, %p222
      %s225 = sadd.s32 %s224, 1
      %p228 = scmp.eq.s32.totalorder %s22, 1
      %p229 = scmp.ne.s32.totalorder %s224, %s226
      %p230 = scmp.eq.s32.totalorder %s22, 0
      %p231 = por %p229, %p230
      %p232 = scmp.ne.s32.totalorder %s224, %s226
      %p233 = scmp.eq.s32.totalorder %s27, 1
      %p234 = por %p232, %p233
      %p235 = scmp.ne.s32.totalorder %s226, %s227
      %p236 = scmp.eq.s32.totalorder %s27, 0
      %p237 = por %p235, %p236
      %p238 = scmp.ne.s32.totalorder %s226, %s227
      %p239 = scmp.eq.s32.totalorder %s28, 1
      %p240 = por %p238, %p239
      %p242 = scmp.ne.s32.totalorder %s227, %s241
      %p243 = scmp.eq.s32.totalorder %s28, 0
      %p244 = por %p242, %p243
      %s246 = sadd.s32 %s245, 1
      %p249 = scmp.eq.s32.totalorder %s22, 1
      %p250 = scmp.ne.s32.totalorder %s245, %s247
      %p251 = scmp.eq.s32.totalorder %s22, 0
      %p252 = por %p250, %p251
      %p253 = scmp.ne.s32.totalorder %s245, %s247
      %p254 = scmp.eq.s32.totalorder %s27, 1
      %p255 = por %p253, %p254
      %p256 = scmp.ne.s32.totalorder %s247, %s248
      %p257 = scmp.eq.s32.totalorder %s27, 0
      %p258 = por %p256, %p257
      %p259 = scmp.ne.s32.totalorder %s247, %s248
      %p260 = scmp.eq.s32.totalorder %s28, 1
      %p261 = por %p259, %p260
      %p263 = scmp.ne.s32.totalorder %s248, %s262
      %p264 = scmp.eq.s32.totalorder %s28, 0
      %p265 = por %p263, %p264
      %s267 = sadd.s32 %s266, 1
      %p270 = scmp.eq.s32.totalorder %s22, 1
      %p271 = scmp.ne.s32.totalorder %s266, %s268
      %p272 = scmp.eq.s32.totalorder %s22, 0
      %p273 = por %p271, %p272
      %p274 = scmp.ne.s32.totalorder %s266, %s268
      %p275 = scmp.eq.s32.totalorder %s27, 1
      %p276 = por %p274, %p275
      %p277 = scmp.ne.s32.totalorder %s268, %s269
      %p278 = scmp.eq.s32.totalorder %s27, 0
      %p279 = por %p277, %p278
      %p280 = scmp.ne.s32.totalorder %s268, %s269
      %p281 = scmp.eq.s32.totalorder %s28, 1
      %p282 = por %p280, %p281
      %p284 = scmp.ne.s32.totalorder %s269, %s283
      %p285 = scmp.eq.s32.totalorder %s28, 0
      %p286 = por %p284, %p285
      %s288 = sadd.s32 %s287, 1
      %p291 = scmp.eq.s32.totalorder %s22, 1
      %p292 = scmp.ne.s32.totalorder %s287, %s289
      %p293 = scmp.eq.s32.totalorder %s22, 0
      %p294 = por %p292, %p293
      %p295 = scmp.ne.s32.totalorder %s287, %s289
      %p296 = scmp.eq.s32.totalorder %s27, 1
      %p297 = por %p295, %p296
      %p298 = scmp.ne.s32.totalorder %s289, %s290
      %p299 = scmp.eq.s32.totalorder %s27, 0
      %p300 = por %p298, %p299
      %p301 = scmp.ne.s32.totalorder %s289, %s290
      %p302 = scmp.eq.s32.totalorder %s28, 1
      %p303 = por %p301, %p302
      %p305 = scmp.ne.s32.totalorder %s290, %s304
      %p306 = scmp.eq.s32.totalorder %s28, 0
      %p307 = por %p305, %p306
      %s308 = ssub.s32 %s22, %s29
      %p309 = scmp.eq.s32.totalorder %s308, 0
      %s311 = sadd.s32 %s310, 1
      %s312 = scalar_select %p309, %s310, %s311
      %p315 = pneg %p309
      %p316 = scmp.eq.s32.totalorder %s22, 1
      %p317 = por %p315, %p316
      %p318 = scmp.ne.s32.totalorder %s310, %s313
      %p319 = scmp.eq.s32.totalorder %s22, 0
      %p320 = por %p318, %p319
      %p321 = scmp.ne.s32.totalorder %s310, %s313
      %p322 = scmp.eq.s32.totalorder %s27, 1
      %p323 = por %p321, %p322
      %p324 = scmp.ne.s32.totalorder %s313, %s314
      %p325 = scmp.eq.s32.totalorder %s27, 0
      %p326 = por %p324, %p325
      %p327 = scmp.ne.s32.totalorder %s313, %s314
      %p328 = scmp.eq.s32.totalorder %s28, 1
      %p329 = por %p327, %p328
      %p331 = scmp.ne.s32.totalorder %s314, %s330
      %p332 = scmp.eq.s32.totalorder %s28, 0
      %p333 = por %p331, %p332
      %p334 = scmp.le.s32.totalorder 1, %s22
      %p335 = scmp.lt.s32.totalorder %s22, 3
      %p336 = pnand %p334, %p335
      %p337 = pneg %p336
      // Predicated region
      $region9: #{cifar_forward.1} parent=5 // pred_check
        _
      $region10: #{cifar_forward.1} parent=5 // pred_check_branch
        %339 = sbr.rel (%p336) target = $region12
      $region11: #{cifar_forward.1} parent=5 // pred_region
        %s340 = ssub.s32 %s22, 1
        // Predicated region
        $region13: #{cifar_forward.1} parent=11 // pred_check
          %p341 = pneg %p69
        $region14: #{cifar_forward.1} parent=11 // pred_check_branch
          %343 = sbr.rel (%p341) target = $region16
        $region15: #{cifar_forward.1} parent=11 // pred_region
          _
        $region16: #{cifar_forward.1} parent=11 // pred_fallthru
          _
        // Predicated region
        $region17: #{cifar_forward.1} parent=11 // pred_check
          %p344 = pneg %p90
        $region18: #{cifar_forward.1} parent=11 // pred_check_branch
          %346 = sbr.rel (%p344) target = $region20
        $region19: #{cifar_forward.1} parent=11 // pred_region
          _
        $region20: #{cifar_forward.1} parent=11 // pred_fallthru
          _
        // Predicated region
        $region21: #{cifar_forward.1} parent=11 // pred_check
          %p347 = pneg %p111
        $region22: #{cifar_forward.1} parent=11 // pred_check_branch
          %349 = sbr.rel (%p347) target = $region24
        $region23: #{cifar_forward.1} parent=11 // pred_region
          _
        $region24: #{cifar_forward.1} parent=11 // pred_fallthru
          _
        // Predicated region
        $region25: #{cifar_forward.1} parent=11 // pred_check
          %p350 = pneg %p132
        $region26: #{cifar_forward.1} parent=11 // pred_check_branch
          %352 = sbr.rel (%p350) target = $region28
        $region27: #{cifar_forward.1} parent=11 // pred_region
          _
        $region28: #{cifar_forward.1} parent=11 // pred_fallthru
          _
        // Predicated region
        $region29: #{cifar_forward.1} parent=11 // pred_check
          %p353 = pneg %p153
        $region30: #{cifar_forward.1} parent=11 // pred_check_branch
          %355 = sbr.rel (%p353) target = $region32
        $region31: #{cifar_forward.1} parent=11 // pred_region
          _
        $region32: #{cifar_forward.1} parent=11 // pred_fallthru
          _
        // Predicated region
        $region33: #{cifar_forward.1} parent=11 // pred_check
          %p356 = pneg %p174
        $region34: #{cifar_forward.1} parent=11 // pred_check_branch
          %358 = sbr.rel (%p356) target = $region36
        $region35: #{cifar_forward.1} parent=11 // pred_region
          _
        $region36: #{cifar_forward.1} parent=11 // pred_fallthru
          _
        // Predicated region
        $region37: #{cifar_forward.1} parent=11 // pred_check
          %p359 = pneg %p195
        $region38: #{cifar_forward.1} parent=11 // pred_check_branch
          %361 = sbr.rel (%p359) target = $region40
        $region39: #{cifar_forward.1} parent=11 // pred_region
          _
        $region40: #{cifar_forward.1} parent=11 // pred_fallthru
          _
        // Predicated region
        $region41: #{cifar_forward.1} parent=11 // pred_check
          %p362 = pneg %p216
        $region42: #{cifar_forward.1} parent=11 // pred_check_branch
          %364 = sbr.rel (%p362) target = $region44
        $region43: #{cifar_forward.1} parent=11 // pred_region
          _
        $region44: #{cifar_forward.1} parent=11 // pred_fallthru
          _
        // Predicated region
        $region45: #{cifar_forward.1} parent=11 // pred_check
          %p365 = pneg %p237
        $region46: #{cifar_forward.1} parent=11 // pred_check_branch
          %367 = sbr.rel (%p365) target = $region48
        $region47: #{cifar_forward.1} parent=11 // pred_region
          _
        $region48: #{cifar_forward.1} parent=11 // pred_fallthru
          _
        // Predicated region
        $region49: #{cifar_forward.1} parent=11 // pred_check
          %p368 = pneg %p258
        $region50: #{cifar_forward.1} parent=11 // pred_check_branch
          %370 = sbr.rel (%p368) target = $region52
        $region51: #{cifar_forward.1} parent=11 // pred_region
          _
        $region52: #{cifar_forward.1} parent=11 // pred_fallthru
          _
        // Predicated region
        $region53: #{cifar_forward.1} parent=11 // pred_check
          %p371 = pneg %p279
        $region54: #{cifar_forward.1} parent=11 // pred_check_branch
          %373 = sbr.rel (%p371) target = $region56
        $region55: #{cifar_forward.1} parent=11 // pred_region
          _
        $region56: #{cifar_forward.1} parent=11 // pred_fallthru
          _
        // Predicated region
        $region57: #{cifar_forward.1} parent=11 // pred_check
          %p374 = pneg %p300
        $region58: #{cifar_forward.1} parent=11 // pred_check_branch
          %376 = sbr.rel (%p374) target = $region60
        $region59: #{cifar_forward.1} parent=11 // pred_region
          _
        $region60: #{cifar_forward.1} parent=11 // pred_fallthru
          _
      $region12: #{cifar_forward.1} parent=5 // pred_fallthru
        _
      %p377 = scmp.lt.s32.totalorder %s22, 2
      // Predicated region
      $region61: #{cifar_forward.1} parent=5 // pred_check
        %p378 = pneg %p377
      $region62: #{cifar_forward.1} parent=5 // pred_check_branch
        %380 = sbr.rel (%p378) target = $region64
      $region63: #{cifar_forward.1} parent=5 // pred_region
        // Predicated region
        $region65: #{cifar_forward.1} parent=63 // pred_check
          %p381 = pneg %p42
        $region66: #{cifar_forward.1} parent=63 // pred_check_branch
          %383 = sbr.rel (%p381) target = $region68
        $region67: #{cifar_forward.1} parent=63 // pred_region
          %p384 = scmp.lt.s32.totalorder %s22, 1
          %s385 = scalar_select %p384, %s22, 1
          %s386 = smul.addr %s385, 4
          %s387 = smul.addr %s386, 8
          %s388 = scalar_lea.vmem %s0, %s387
        $region68: #{cifar_forward.1} parent=63 // pred_fallthru
          _
      $region64: #{cifar_forward.1} parent=5 // pred_fallthru
        _
      %p389 = scmp.le.s32.totalorder 1, %s22
      %p390 = scmp.lt.s32.totalorder %s22, 3
      %p391 = pnand %p389, %p390
      %p392 = pneg %p391
      // Predicated region
      $region69: #{cifar_forward.1} parent=5 // pred_check
        _
      $region70: #{cifar_forward.1} parent=5 // pred_check_branch
        %394 = sbr.rel (%p391) target = $region72
      $region71: #{cifar_forward.1} parent=5 // pred_region
        %s395 = ssub.s32 %s22, 1
        %p396 = scmp.lt.s32.totalorder %s27, 1
        %s397 = scalar_select %p396, %s27, 1
        %s398 = smul.addr %s397, 4
        %s399 = smul.addr %s398, 8
        %s400 = scalar_lea.vmem %s0, %s399
        %p401 = pneg %p48
        %p402 = pneg %p45
        %p403 = pneg %p69
        %p404 = pneg %p66
        %p405 = pneg %p90
        %p406 = pneg %p87
        %p407 = pneg %p111
        %p408 = pneg %p108
        %p409 = pneg %p132
        %p410 = pneg %p129
        %p411 = pneg %p153
        %p412 = pneg %p150
        %p413 = pneg %p174
        %p414 = pneg %p171
        %p415 = pneg %p195
        %p416 = pneg %p192
        %p417 = pneg %p216
        %p418 = pneg %p213
        %p419 = pneg %p237
        %p420 = pneg %p234
        %p421 = pneg %p258
        %p422 = pneg %p255
        %p423 = pneg %p279
        %p424 = pneg %p276
        %p425 = pneg %p300
        %p426 = pneg %p297
        %p427 = pneg %p326
        %p428 = pneg %p323
        %s429 = sand.u32 %s313, 1
        %s430 = scalar_lea.sflag [#allocation3], %s429
        %s431 = sand.u32 %s313, 1
        %s432 = scalar_lea.vmem [#allocation2], %s431
        %p433 = scmp.lt.s32.totalorder %s27, 1
        %s434 = scalar_select %p433, %s27, 1
        %s435 = smul.addr %s434, 4
        %s436 = smul.addr %s435, 8
        %s437 = scalar_lea.vmem %s0, %s436
        %v439 = vld [vmem:[%s437] sm:$0xff]
        %v440 = vld [vmem:[%s437 + $0x8] sm:$0xff]
        %v441 = vld [vmem:[%s437 + $0x10] sm:$0xff]
        %v442 = vld [vmem:[%s437 + $0x18] sm:$0xff]
        %v443 = vpack.c.bf16 %v440, %v439
        %v444 = vpack.c.bf16 %v442, %v441
        %v445 = vld [vmem:[%s1] sm:$0xff]
        %v446 = vld [vmem:[%s1 + $0x8] sm:$0xff]
        %v447 = vld [vmem:[%s1 + $0x10] sm:$0xff]
        %v448 = vld [vmem:[%s1 + $0x18] sm:$0xff]
        %v449 = vld [vmem:[%s1 + $0x20] sm:$0xff]
        %v450 = vld [vmem:[%s1 + $0x28] sm:$0xff]
        %v451 = vld [vmem:[%s1 + $0x30] sm:$0xff]
        %v452 = vld [vmem:[%s1 + $0x38] sm:$0xff]
        %v453 = vld [vmem:[%s1 + $0x40] sm:$0xff]
        %v454 = vld [vmem:[%s1 + $0x48] sm:$0xff]
        %v455 = vld [vmem:[%s1 + $0x50] sm:$0xff]
        %v456 = vld [vmem:[%s1 + $0x58] sm:$0xff]
        %s457 = scalar_lea.vmem %s1, 96
        %v458 = vld [vmem:[%s457] sm:$0xff]
        %v459 = vld [vmem:[%s457 + $0x8] sm:$0xff]
        %v460 = vld [vmem:[%s457 + $0x10] sm:$0xff]
        %v461 = vld [vmem:[%s457 + $0x18] sm:$0xff]
        %v462 = vld [vmem:[%s457 + $0x20] sm:$0xff]
        %v463 = vld [vmem:[%s457 + $0x28] sm:$0xff]
        %v464 = vld [vmem:[%s457 + $0x30] sm:$0xff]
        %v465 = vld [vmem:[%s457 + $0x38] sm:$0xff]
        %v466 = vld [vmem:[%s457 + $0x40] sm:$0xff]
        %v467 = vld [vmem:[%s457 + $0x48] sm:$0xff]
        %v468 = vld [vmem:[%s457 + $0x50] sm:$0xff]
        %v469 = vld [vmem:[%s457 + $0x58] sm:$0xff]
        %vm470 = vsmask.f32 7424
        %v472 = vshrl.u32 %v443, 16
        %v474 = vshll.u32 %v443, 16
        %v476 = vrot.slane %v474, 1
        %v477 = vor.u32 %v472, %v476
        %v479 = vshll.u32 %v444, 16
        %v481 = vrot.slane %v479, 1
        %v482 = vsel %vm470, %v477, %v481
        %v483 = vshrl.u32 %v444, 16
        %v485 = vor.u32 %v483, %v481
        %v498 = vunpack.c.l.b16 %v458
        %v499 = vunpack.c.h.b16 %v458
        %v500 = vunpack.c.l.b16 %v459
        %v501 = vunpack.c.h.b16 %v459
        %v502 = vunpack.c.l.b16 %v460
        %v503 = vunpack.c.h.b16 %v460
        %v504 = vunpack.c.l.b16 %v461
        %v505 = vunpack.c.h.b16 %v461
        %v506 = vunpack.c.l.b16 %v462
        %v507 = vunpack.c.h.b16 %v462
        %v508 = vunpack.c.l.b16 %v463
        %v509 = vunpack.c.h.b16 %v463
        %v510 = vunpack.c.l.b16 %v464
        %v511 = vunpack.c.h.b16 %v464
        %v512 = vunpack.c.l.b16 %v465
        %v513 = vunpack.c.h.b16 %v465
        %v514 = vunpack.c.l.b16 %v466
        %v515 = vunpack.c.h.b16 %v466
        %v516 = vunpack.c.l.b16 %v467
        %v517 = vunpack.c.h.b16 %v467
        %v518 = vunpack.c.l.b16 %v468
        %v519 = vunpack.c.h.b16 %v468
        %v520 = vunpack.c.l.b16 %v469
        %v521 = vunpack.c.h.b16 %v469
        %v522 = vpack.c.b16 %v500, %v498
        %v523 = vpack.c.b16 %v501, %v499
        %v524 = vpack.c.b16 %v504, %v502
        %v525 = vpack.c.b16 %v505, %v503
        %v526 = vpack.c.b16 %v508, %v506
        %v527 = vpack.c.b16 %v509, %v507
        %v528 = vpack.c.b16 %v512, %v510
        %v529 = vpack.c.b16 %v513, %v511
        %v530 = vpack.c.b16 %v516, %v514
        %v531 = vpack.c.b16 %v517, %v515
        %v532 = vpack.c.b16 %v520, %v518
        %v533 = vpack.c.b16 %v521, %v519
        %vm546 = vcmask 785408
        %v548 = vsel %vm546, %v482, 0
        %v551 = vsel %vm546, %v485, 0
        %553 = vmatprep.subr.bf16.mxu0 %v523
        %554 = vmatpush1.bf16.msra.mxu0 %v522
        %555 = vmatprep.subr.bf16.mxu0 %v525
        %556 = vmatpush1.bf16.msra.mxu0 %v524
        %557 = vmatprep.subr.bf16.mxu0 %v527
        %558 = vmatpush1.bf16.msra.mxu0 %v526
        %559 = vmatprep.subr.bf16.mxu0 %v529
        %560 = vmatpush1.bf16.msra.mxu0 %v528
        %561 = vmatprep.subr.bf16.mxu0 %v531
        %562 = vmatpush1.bf16.msra.mxu0 %v530
        %563 = vmatprep.subr.bf16.mxu0 %v533
        %564 = vmatpush1.bf16.msra.mxu0 %v532
        %565 = vmatprep.subr.bf16.mxu0 0
        %566 = vmatpush1.bf16.msra.mxu0 0
        %567 = vmatprep.subr.bf16.mxu0 0
        %568 = vmatpush1.bf16.msra.mxu0 0
        %569 = vmatprep.subr.bf16.mxu0 0
        %570 = vmatpush1.bf16.msra.mxu0 0
        %571 = vmatprep.subr.bf16.mxu0 0
        %572 = vmatpush1.bf16.msra.mxu0 0
        %573 = vmatprep.subr.bf16.mxu0 0
        %574 = vmatpush1.bf16.msra.mxu0 0
        %575 = vmatprep.subr.bf16.mxu0 0
        %576 = vmatpush1.bf16.msra.mxu0 0
        %577 = vmatprep.subr.bf16.mxu0 0
        %578 = vmatpush1.bf16.msra.mxu0 0
        %579 = vmatprep.subr.bf16.mxu0 0
        %580 = vmatpush1.bf16.msra.mxu0 0
        %581 = vmatprep.subr.bf16.mxu0 0
        %582 = vmatpush1.bf16.msra.mxu0 0
        %583 = vmatprep.subr.bf16.mxu0 0
        %584 = vmatpush1.bf16.msra.mxu0 0
        %585 = vmatprep.mubr.bf16.mxu0 0
        %586 = vmatmul.mubr.bf16.gmra.mrb[0].mxu0 %v548
        %v587 = vpop.f32.mrb[0].mxu0
        %v588 = vadd.f32 0.0, %v587
        %v589 = vpop.f32.mrb[0].mxu0
        %v590 = vadd.f32 0.0, %v589
        %v591 = vpop.f32.mrb[0].mxu0
        %v592 = vadd.f32 0.0, %v591
        %v593 = vpop.f32.mrb[0].mxu0
        %v594 = vadd.f32 0.0, %v593
        %595 = vmatprep.mubr.bf16.mxu0 0
        %596 = vmatmul.mubr.bf16.gmra.mrb[0].mxu0 %v551
        %v597 = vpop.f32.mrb[0].mxu0
        %v598 = vadd.f32 0.0, %v597
        %v599 = vpop.f32.mrb[0].mxu0
        %v600 = vadd.f32 0.0, %v599
        %v601 = vpop.f32.mrb[0].mxu0
        %v602 = vadd.f32 0.0, %v601
        %v603 = vpop.f32.mrb[0].mxu0
        %v604 = vadd.f32 0.0, %v603
        %605 = vdwg.mxu0
        %v618 = vunpack.c.l.b16 %v445
        %v619 = vunpack.c.h.b16 %v445
        %v620 = vunpack.c.l.b16 %v446
        %v621 = vunpack.c.h.b16 %v446
        %v622 = vunpack.c.l.b16 %v447
        %v623 = vunpack.c.h.b16 %v447
        %v624 = vunpack.c.l.b16 %v448
        %v625 = vunpack.c.h.b16 %v448
        %v626 = vunpack.c.l.b16 %v449
        %v627 = vunpack.c.h.b16 %v449
        %v628 = vunpack.c.l.b16 %v450
        %v629 = vunpack.c.h.b16 %v450
        %v630 = vunpack.c.l.b16 %v451
        %v631 = vunpack.c.h.b16 %v451
        %v632 = vunpack.c.l.b16 %v452
        %v633 = vunpack.c.h.b16 %v452
        %v634 = vunpack.c.l.b16 %v453
        %v635 = vunpack.c.h.b16 %v453
        %v636 = vunpack.c.l.b16 %v454
        %v637 = vunpack.c.h.b16 %v454
        %v638 = vunpack.c.l.b16 %v455
        %v639 = vunpack.c.h.b16 %v455
        %v640 = vunpack.c.l.b16 %v456
        %v641 = vunpack.c.h.b16 %v456
        %v642 = vpack.c.b16 %v620, %v618
        %v643 = vpack.c.b16 %v621, %v619
        %v644 = vpack.c.b16 %v624, %v622
        %v645 = vpack.c.b16 %v625, %v623
        %v646 = vpack.c.b16 %v628, %v626
        %v647 = vpack.c.b16 %v629, %v627
        %v648 = vpack.c.b16 %v632, %v630
        %v649 = vpack.c.b16 %v633, %v631
        %v650 = vpack.c.b16 %v636, %v634
        %v651 = vpack.c.b16 %v637, %v635
        %v652 = vpack.c.b16 %v640, %v638
        %v653 = vpack.c.b16 %v641, %v639
        %v666 = vsel %vm546, %v443, 0
        %v668 = vsel %vm546, %v444, 0
        %670 = vmatprep.subr.bf16.mxu0 %v643
        %671 = vmatpush1.bf16.msra.mxu0 %v642
        %672 = vmatprep.subr.bf16.mxu0 %v645
        %673 = vmatpush1.bf16.msra.mxu0 %v644
        %674 = vmatprep.subr.bf16.mxu0 %v647
        %675 = vmatpush1.bf16.msra.mxu0 %v646
        %676 = vmatprep.subr.bf16.mxu0 %v649
        %677 = vmatpush1.bf16.msra.mxu0 %v648
        %678 = vmatprep.subr.bf16.mxu0 %v651
        %679 = vmatpush1.bf16.msra.mxu0 %v650
        %680 = vmatprep.subr.bf16.mxu0 %v653
        %681 = vmatpush1.bf16.msra.mxu0 %v652
        %682 = vmatprep.subr.bf16.mxu0 0
        %683 = vmatpush1.bf16.msra.mxu0 0
        %684 = vmatprep.subr.bf16.mxu0 0
        %685 = vmatpush1.bf16.msra.mxu0 0
        %686 = vmatprep.subr.bf16.mxu0 0
        %687 = vmatpush1.bf16.msra.mxu0 0
        %688 = vmatprep.subr.bf16.mxu0 0
        %689 = vmatpush1.bf16.msra.mxu0 0
        %690 = vmatprep.subr.bf16.mxu0 0
        %691 = vmatpush1.bf16.msra.mxu0 0
        %692 = vmatprep.subr.bf16.mxu0 0
        %693 = vmatpush1.bf16.msra.mxu0 0
        %694 = vmatprep.subr.bf16.mxu0 0
        %695 = vmatpush1.bf16.msra.mxu0 0
        %696 = vmatprep.subr.bf16.mxu0 0
        %697 = vmatpush1.bf16.msra.mxu0 0
        %698 = vmatprep.subr.bf16.mxu0 0
        %699 = vmatpush1.bf16.msra.mxu0 0
        %700 = vmatprep.subr.bf16.mxu0 0
        %701 = vmatpush1.bf16.msra.mxu0 0
        %702 = vmatprep.mubr.bf16.mxu0 0
        %703 = vmatmul.mubr.bf16.gmra.mrb[0].mxu0 %v666
        %v704 = vpop.f32.mrb[0].mxu0
        %v705 = vadd.f32 %v588, %v704
        %v706 = vpop.f32.mrb[0].mxu0
        %v707 = vadd.f32 %v590, %v706
        %v708 = vpop.f32.mrb[0].mxu0
        %v709 = vadd.f32 %v592, %v708
        %v710 = vpop.f32.mrb[0].mxu0
        %v711 = vadd.f32 %v594, %v710
        %712 = vmatprep.mubr.bf16.mxu0 0
        %713 = vmatmul.mubr.bf16.gmra.mrb[0].mxu0 %v668
        %v714 = vpop.f32.mrb[0].mxu0
        %v715 = vadd.f32 %v598, %v714
        %v716 = vpop.f32.mrb[0].mxu0
        %v717 = vadd.f32 %v600, %v716
        %v718 = vpop.f32.mrb[0].mxu0
        %v719 = vadd.f32 %v602, %v718
        %v720 = vpop.f32.mrb[0].mxu0
        %v721 = vadd.f32 %v604, %v720
        %722 = vdwg.mxu0
        %s723 = scalar_lea.vmem %s1, 192
        %v724 = vld [vmem:[%s723] sm:$0xff]
        %v725 = vld [vmem:[%s723 + $0x8] sm:$0xff]
        %v726 = vld [vmem:[%s723 + $0x10] sm:$0xff]
        %v727 = vld [vmem:[%s723 + $0x18] sm:$0xff]
        %v728 = vld [vmem:[%s723 + $0x20] sm:$0xff]
        %v729 = vld [vmem:[%s723 + $0x28] sm:$0xff]
        %v730 = vld [vmem:[%s723 + $0x30] sm:$0xff]
        %v731 = vld [vmem:[%s723 + $0x38] sm:$0xff]
        %v732 = vld [vmem:[%s723 + $0x40] sm:$0xff]
        %v733 = vld [vmem:[%s723 + $0x48] sm:$0xff]
        %v734 = vld [vmem:[%s723 + $0x50] sm:$0xff]
        %v735 = vld [vmem:[%s723 + $0x58] sm:$0xff]
        %vm738 = vcmask 1046528
        %v739 = vrot.slane %v443, 1
        %v740 = vrot.slane %v444, 1
        %v741 = vsel %vm738, %v739, %v740
        %v754 = vunpack.c.l.b16 %v724
        %v755 = vunpack.c.h.b16 %v724
        %v756 = vunpack.c.l.b16 %v725
        %v757 = vunpack.c.h.b16 %v725
        %v758 = vunpack.c.l.b16 %v726
        %v759 = vunpack.c.h.b16 %v726
        %v760 = vunpack.c.l.b16 %v727
        %v761 = vunpack.c.h.b16 %v727
        %v762 = vunpack.c.l.b16 %v728
        %v763 = vunpack.c.h.b16 %v728
        %v764 = vunpack.c.l.b16 %v729
        %v765 = vunpack.c.h.b16 %v729
        %v766 = vunpack.c.l.b16 %v730
        %v767 = vunpack.c.h.b16 %v730
        %v768 = vunpack.c.l.b16 %v731
        %v769 = vunpack.c.h.b16 %v731
        %v770 = vunpack.c.l.b16 %v732
        %v771 = vunpack.c.h.b16 %v732
        %v772 = vunpack.c.l.b16 %v733
        %v773 = vunpack.c.h.b16 %v733
        %v774 = vunpack.c.l.b16 %v734
        %v775 = vunpack.c.h.b16 %v734
        %v776 = vunpack.c.l.b16 %v735
        %v777 = vunpack.c.h.b16 %v735
        %v778 = vpack.c.b16 %v756, %v754
        %v779 = vpack.c.b16 %v757, %v755
        %v780 = vpack.c.b16 %v760, %v758
        %v781 = vpack.c.b16 %v761, %v759
        %v782 = vpack.c.b16 %v764, %v762
        %v783 = vpack.c.b16 %v765, %v763
        %v784 = vpack.c.b16 %v768, %v766
        %v785 = vpack.c.b16 %v769, %v767
        %v786 = vpack.c.b16 %v772, %v770
        %v787 = vpack.c.b16 %v773, %v771
        %v788 = vpack.c.b16 %v776, %v774
        %v789 = vpack.c.b16 %v777, %v775
        %v803 = vsel %vm546, %v741, 0
        %v806 = vsel %vm546, %v740, 0
        %808 = vmatprep.subr.bf16.mxu0 %v779
        %809 = vmatpush1.bf16.msra.mxu0 %v778
        %810 = vmatprep.subr.bf16.mxu0 %v781
        %811 = vmatpush1.bf16.msra.mxu0 %v780
        %812 = vmatprep.subr.bf16.mxu0 %v783
        %813 = vmatpush1.bf16.msra.mxu0 %v782
        %814 = vmatprep.subr.bf16.mxu0 %v785
        %815 = vmatpush1.bf16.msra.mxu0 %v784
        %816 = vmatprep.subr.bf16.mxu0 %v787
        %817 = vmatpush1.bf16.msra.mxu0 %v786
        %818 = vmatprep.subr.bf16.mxu0 %v789
        %819 = vmatpush1.bf16.msra.mxu0 %v788
        %820 = vmatprep.subr.bf16.mxu0 0
        %821 = vmatpush1.bf16.msra.mxu0 0
        %822 = vmatprep.subr.bf16.mxu0 0
        %823 = vmatpush1.bf16.msra.mxu0 0
        %824 = vmatprep.subr.bf16.mxu0 0
        %825 = vmatpush1.bf16.msra.mxu0 0
        %826 = vmatprep.subr.bf16.mxu0 0
        %827 = vmatpush1.bf16.msra.mxu0 0
        %828 = vmatprep.subr.bf16.mxu0 0
        %829 = vmatpush1.bf16.msra.mxu0 0
        %830 = vmatprep.subr.bf16.mxu0 0
        %831 = vmatpush1.bf16.msra.mxu0 0
        %832 = vmatprep.subr.bf16.mxu0 0
        %833 = vmatpush1.bf16.msra.mxu0 0
        %834 = vmatprep.subr.bf16.mxu0 0
        %835 = vmatpush1.bf16.msra.mxu0 0
        %836 = vmatprep.subr.bf16.mxu0 0
        %837 = vmatpush1.bf16.msra.mxu0 0
        %838 = vmatprep.subr.bf16.mxu0 0
        %839 = vmatpush1.bf16.msra.mxu0 0
        %840 = vmatprep.mubr.bf16.mxu0 0
        %841 = vmatmul.mubr.bf16.gmra.mrb[0].mxu0 %v803
        %v842 = vpop.f32.mrb[0].mxu0
        %v843 = vadd.f32 0.0, %v842
        %v844 = vpop.f32.mrb[0].mxu0
        %v845 = vadd.f32 0.0, %v844
        %v846 = vpop.f32.mrb[0].mxu0
        %v847 = vadd.f32 0.0, %v846
        %v848 = vpop.f32.mrb[0].mxu0
        %v849 = vadd.f32 0.0, %v848
        %850 = vmatprep.mubr.bf16.mxu0 0
        %851 = vmatmul.mubr.bf16.gmra.mrb[0].mxu0 %v806
        %v852 = vpop.f32.mrb[0].mxu0
        %v853 = vadd.f32 0.0, %v852
        %v854 = vpop.f32.mrb[0].mxu0
        %v855 = vadd.f32 0.0, %v854
        %v856 = vpop.f32.mrb[0].mxu0
        %v857 = vadd.f32 0.0, %v856
        %v858 = vpop.f32.mrb[0].mxu0
        %v859 = vadd.f32 0.0, %v858
        %860 = vdwg.mxu0
        %v861 = vadd.f32 %v705, %v843
        %v862 = vadd.f32 %v707, %v845
        %v863 = vadd.f32 %v709, %v847
        %v864 = vadd.f32 %v711, %v849
        %v865 = vadd.f32 %v715, %v853
        %v866 = vadd.f32 %v717, %v855
        %v867 = vadd.f32 %v719, %v857
        %v868 = vadd.f32 %v721, %v859
        %s869 = scalar_lea.vmem %s1, 288
        %v870 = vld [vmem:[%s869] sm:$0xff]
        %v871 = vld [vmem:[%s869 + $0x8] sm:$0xff]
        %v872 = vld [vmem:[%s869 + $0x10] sm:$0xff]
        %v873 = vld [vmem:[%s869 + $0x18] sm:$0xff]
        %v874 = vld [vmem:[%s869 + $0x20] sm:$0xff]
        %v875 = vld [vmem:[%s869 + $0x28] sm:$0xff]
        %v876 = vld [vmem:[%s869 + $0x30] sm:$0xff]
        %v877 = vld [vmem:[%s869 + $0x38] sm:$0xff]
        %v878 = vld [vmem:[%s869 + $0x40] sm:$0xff]
        %v879 = vld [vmem:[%s869 + $0x48] sm:$0xff]
        %v880 = vld [vmem:[%s869 + $0x50] sm:$0xff]
        %v881 = vld [vmem:[%s869 + $0x58] sm:$0xff]
        %vm882 = vsmask.f32 6400
        %v883 = vrot.slane %v472, 1
        %v884 = vrot.slane %v474, 2
        %v885 = vor.u32 %v883, %v884
        %v886 = vrot.slane %v483, 1
        %v887 = vrot.slane %v479, 2
        %v888 = vor.u32 %v886, %v887
        %v889 = vsel %vm882, %v885, %v888
        %v902 = vunpack.c.l.b16 %v870
        %v903 = vunpack.c.h.b16 %v870
        %v904 = vunpack.c.l.b16 %v871
        %v905 = vunpack.c.h.b16 %v871
        %v906 = vunpack.c.l.b16 %v872
        %v907 = vunpack.c.h.b16 %v872
        %v908 = vunpack.c.l.b16 %v873
        %v909 = vunpack.c.h.b16 %v873
        %v910 = vunpack.c.l.b16 %v874
        %v911 = vunpack.c.h.b16 %v874
        %v912 = vunpack.c.l.b16 %v875
        %v913 = vunpack.c.h.b16 %v875
        %v914 = vunpack.c.l.b16 %v876
        %v915 = vunpack.c.h.b16 %v876
        %v916 = vunpack.c.l.b16 %v877
        %v917 = vunpack.c.h.b16 %v877
        %v918 = vunpack.c.l.b16 %v878
        %v919 = vunpack.c.h.b16 %v878
        %v920 = vunpack.c.l.b16 %v879
        %v921 = vunpack.c.h.b16 %v879
        %v922 = vunpack.c.l.b16 %v880
        %v923 = vunpack.c.h.b16 %v880
        %v924 = vunpack.c.l.b16 %v881
        %v925 = vunpack.c.h.b16 %v881
        %v926 = vpack.c.b16 %v904, %v902
        %v927 = vpack.c.b16 %v905, %v903
        %v928 = vpack.c.b16 %v908, %v906
        %v929 = vpack.c.b16 %v909, %v907
        %v930 = vpack.c.b16 %v912, %v910
        %v931 = vpack.c.b16 %v913, %v911
        %v932 = vpack.c.b16 %v916, %v914
        %v933 = vpack.c.b16 %v917, %v915
        %v934 = vpack.c.b16 %v920, %v918
        %v935 = vpack.c.b16 %v921, %v919
        %v936 = vpack.c.b16 %v924, %v922
        %v937 = vpack.c.b16 %v925, %v923
        %v951 = vsel %vm546, %v889, 0
        %v954 = vsel %vm546, %v888, 0
        %956 = vmatprep.subr.bf16.mxu0 %v927
        %957 = vmatpush1.bf16.msra.mxu0 %v926
        %958 = vmatprep.subr.bf16.mxu0 %v929
        %959 = vmatpush1.bf16.msra.mxu0 %v928
        %960 = vmatprep.subr.bf16.mxu0 %v931
        %961 = vmatpush1.bf16.msra.mxu0 %v930
        %962 = vmatprep.subr.bf16.mxu0 %v933
        %963 = vmatpush1.bf16.msra.mxu0 %v932
        %964 = vmatprep.subr.bf16.mxu0 %v935
        %965 = vmatpush1.bf16.msra.mxu0 %v934
        %966 = vmatprep.subr.bf16.mxu0 %v937
        %967 = vmatpush1.bf16.msra.mxu0 %v936
        %968 = vmatprep.subr.bf16.mxu0 0
        %969 = vmatpush1.bf16.msra.mxu0 0
        %970 = vmatprep.subr.bf16.mxu0 0
        %971 = vmatpush1.bf16.msra.mxu0 0
        %972 = vmatprep.subr.bf16.mxu0 0
        %973 = vmatpush1.bf16.msra.mxu0 0
        %974 = vmatprep.subr.bf16.mxu0 0
        %975 = vmatpush1.bf16.msra.mxu0 0
        %976 = vmatprep.subr.bf16.mxu0 0
        %977 = vmatpush1.bf16.msra.mxu0 0
        %978 = vmatprep.subr.bf16.mxu0 0
        %979 = vmatpush1.bf16.msra.mxu0 0
        %980 = vmatprep.subr.bf16.mxu0 0
        %981 = vmatpush1.bf16.msra.mxu0 0
        %982 = vmatprep.subr.bf16.mxu0 0
        %983 = vmatpush1.bf16.msra.mxu0 0
        %984 = vmatprep.subr.bf16.mxu0 0
        %985 = vmatpush1.bf16.msra.mxu0 0
        %986 = vmatprep.subr.bf16.mxu0 0
        %987 = vmatpush1.bf16.msra.mxu0 0
        %988 = vmatprep.mubr.bf16.mxu0 0
        %989 = vmatmul.mubr.bf16.gmra.mrb[0].mxu0 %v951
        %v990 = vpop.f32.mrb[0].mxu0
        %v991 = vadd.f32 0.0, %v990
        %v992 = vpop.f32.mrb[0].mxu0
        %v993 = vadd.f32 0.0, %v992
        %v994 = vpop.f32.mrb[0].mxu0
        %v995 = vadd.f32 0.0, %v994
        %v996 = vpop.f32.mrb[0].mxu0
        %v997 = vadd.f32 0.0, %v996
        %998 = vmatprep.mubr.bf16.mxu0 0
        %999 = vmatmul.mubr.bf16.gmra.mrb[0].mxu0 %v954
        %v1000 = vpop.f32.mrb[0].mxu0
        %v1001 = vadd.f32 0.0, %v1000
        %v1002 = vpop.f32.mrb[0].mxu0
        %v1003 = vadd.f32 0.0, %v1002
        %v1004 = vpop.f32.mrb[0].mxu0
        %v1005 = vadd.f32 0.0, %v1004
        %v1006 = vpop.f32.mrb[0].mxu0
        %v1007 = vadd.f32 0.0, %v1006
        %1008 = vdwg.mxu0
        %v1009 = vadd.f32 %v861, %v991
        %v1010 = vadd.f32 %v862, %v993
        %v1011 = vadd.f32 %v863, %v995
        %v1012 = vadd.f32 %v864, %v997
        %v1013 = vadd.f32 %v865, %v1001
        %v1014 = vadd.f32 %v866, %v1003
        %v1015 = vadd.f32 %v867, %v1005
        %v1016 = vadd.f32 %v868, %v1007
        %s1017 = scalar_lea.vmem %s1, 384
        %v1018 = vld [vmem:[%s1017] sm:$0xff]
        %v1019 = vld [vmem:[%s1017 + $0x8] sm:$0xff]
        %v1020 = vld [vmem:[%s1017 + $0x10] sm:$0xff]
        %v1021 = vld [vmem:[%s1017 + $0x18] sm:$0xff]
        %v1022 = vld [vmem:[%s1017 + $0x20] sm:$0xff]
        %v1023 = vld [vmem:[%s1017 + $0x28] sm:$0xff]
        %v1024 = vld [vmem:[%s1017 + $0x30] sm:$0xff]
        %v1025 = vld [vmem:[%s1017 + $0x38] sm:$0xff]
        %v1026 = vld [vmem:[%s1017 + $0x40] sm:$0xff]
        %v1027 = vld [vmem:[%s1017 + $0x48] sm:$0xff]
        %v1028 = vld [vmem:[%s1017 + $0x50] sm:$0xff]
        %v1029 = vld [vmem:[%s1017 + $0x58] sm:$0xff]
        %vm1030 = vcmask 1045504
        %v1031 = vrot.slane %v443, 2
        %v1032 = vrot.slane %v444, 2
        %v1033 = vsel %vm1030, %v1031, %v1032
        %v1046 = vunpack.c.l.b16 %v1018
        %v1047 = vunpack.c.h.b16 %v1018
        %v1048 = vunpack.c.l.b16 %v1019
        %v1049 = vunpack.c.h.b16 %v1019
        %v1050 = vunpack.c.l.b16 %v1020
        %v1051 = vunpack.c.h.b16 %v1020
        %v1052 = vunpack.c.l.b16 %v1021
        %v1053 = vunpack.c.h.b16 %v1021
        %v1054 = vunpack.c.l.b16 %v1022
        %v1055 = vunpack.c.h.b16 %v1022
        %v1056 = vunpack.c.l.b16 %v1023
        %v1057 = vunpack.c.h.b16 %v1023
        %v1058 = vunpack.c.l.b16 %v1024
        %v1059 = vunpack.c.h.b16 %v1024
        %v1060 = vunpack.c.l.b16 %v1025
        %v1061 = vunpack.c.h.b16 %v1025
        %v1062 = vunpack.c.l.b16 %v1026
        %v1063 = vunpack.c.h.b16 %v1026
        %v1064 = vunpack.c.l.b16 %v1027
        %v1065 = vunpack.c.h.b16 %v1027
        %v1066 = vunpack.c.l.b16 %v1028
        %v1067 = vunpack.c.h.b16 %v1028
        %v1068 = vunpack.c.l.b16 %v1029
        %v1069 = vunpack.c.h.b16 %v1029
        %v1070 = vpack.c.b16 %v1048, %v1046
        %v1071 = vpack.c.b16 %v1049, %v1047
        %v1072 = vpack.c.b16 %v1052, %v1050
        %v1073 = vpack.c.b16 %v1053, %v1051
        %v1074 = vpack.c.b16 %v1056, %v1054
        %v1075 = vpack.c.b16 %v1057, %v1055
        %v1076 = vpack.c.b16 %v1060, %v1058
        %v1077 = vpack.c.b16 %v1061, %v1059
        %v1078 = vpack.c.b16 %v1064, %v1062
        %v1079 = vpack.c.b16 %v1065, %v1063
        %v1080 = vpack.c.b16 %v1068, %v1066
        %v1081 = vpack.c.b16 %v1069, %v1067
        %v1095 = vsel %vm546, %v1033, 0
        %v1098 = vsel %vm546, %v1032, 0
        %1100 = vmatprep.subr.bf16.mxu0 %v1071
        %1101 = vmatpush1.bf16.msra.mxu0 %v1070
        %1102 = vmatprep.subr.bf16.mxu0 %v1073
        %1103 = vmatpush1.bf16.msra.mxu0 %v1072
        %1104 = vmatprep.subr.bf16.mxu0 %v1075
        %1105 = vmatpush1.bf16.msra.mxu0 %v1074
        %1106 = vmatprep.subr.bf16.mxu0 %v1077
        %1107 = vmatpush1.bf16.msra.mxu0 %v1076
        %1108 = vmatprep.subr.bf16.mxu0 %v1079
        %1109 = vmatpush1.bf16.msra.mxu0 %v1078
        %1110 = vmatprep.subr.bf16.mxu0 %v1081
        %1111 = vmatpush1.bf16.msra.mxu0 %v1080
        %1112 = vmatprep.subr.bf16.mxu0 0
        %1113 = vmatpush1.bf16.msra.mxu0 0
        %1114 = vmatprep.subr.bf16.mxu0 0
        %1115 = vmatpush1.bf16.msra.mxu0 0
        %1116 = vmatprep.subr.bf16.mxu0 0
        %1117 = vmatpush1.bf16.msra.mxu0 0
        %1118 = vmatprep.subr.bf16.mxu0 0
        %1119 = vmatpush1.bf16.msra.mxu0 0
        %1120 = vmatprep.subr.bf16.mxu0 0
        %1121 = vmatpush1.bf16.msra.mxu0 0
        %1122 = vmatprep.subr.bf16.mxu0 0
        %1123 = vmatpush1.bf16.msra.mxu0 0
        %1124 = vmatprep.subr.bf16.mxu0 0
        %1125 = vmatpush1.bf16.msra.mxu0 0
        %1126 = vmatprep.subr.bf16.mxu0 0
        %1127 = vmatpush1.bf16.msra.mxu0 0
        %1128 = vmatprep.subr.bf16.mxu0 0
        %1129 = vmatpush1.bf16.msra.mxu0 0
        %1130 = vmatprep.subr.bf16.mxu0 0
        %1131 = vmatpush1.bf16.msra.mxu0 0
        %1132 = vmatprep.mubr.bf16.mxu0 0
        %1133 = vmatmul.mubr.bf16.gmra.mrb[0].mxu0 %v1095
        %v1134 = vpop.f32.mrb[0].mxu0
        %v1135 = vadd.f32 0.0, %v1134
        %v1136 = vpop.f32.mrb[0].mxu0
        %v1137 = vadd.f32 0.0, %v1136
        %v1138 = vpop.f32.mrb[0].mxu0
        %v1139 = vadd.f32 0.0, %v1138
        %v1140 = vpop.f32.mrb[0].mxu0
        %v1141 = vadd.f32 0.0, %v1140
        %1142 = vmatprep.mubr.bf16.mxu0 0
        %1143 = vmatmul.mubr.bf16.gmra.mrb[0].mxu0 %v1098
        %v1144 = vpop.f32.mrb[0].mxu0
        %v1145 = vadd.f32 0.0, %v1144
        %v1146 = vpop.f32.mrb[0].mxu0
        %v1147 = vadd.f32 0.0, %v1146
        %v1148 = vpop.f32.mrb[0].mxu0
        %v1149 = vadd.f32 0.0, %v1148
        %v1150 = vpop.f32.mrb[0].mxu0
        %v1151 = vadd.f32 0.0, %v1150
        %1152 = vdwg.mxu0
        %v1153 = vadd.f32 %v1009, %v1135
        %v1154 = vadd.f32 %v1010, %v1137
        %v1155 = vadd.f32 %v1011, %v1139
        %v1156 = vadd.f32 %v1012, %v1141
        %v1157 = vadd.f32 %v1013, %v1145
        %v1158 = vadd.f32 %v1014, %v1147
        %v1159 = vadd.f32 %v1015, %v1149
        %v1160 = vadd.f32 %v1016, %v1151
        %v1161 = vld [vmem:[%s2] sm:$0x3]
        %v1163 = vlaneseq
        %v1164 = vshrl.u32 %v1163, 7
        %v1165 = vsub.s32 0, %v1164
        %v1166 = vrot.slane %v1161, %v1165
        %v1167 = vlaneseq
        %v1168 = vshrl.u32 %v1167, 7
        %v1169 = vsub.s32 1, %v1168
        %v1170 = vrot.slane %v1161, %v1169
        %v1173 = vadd.f32 %v1153, %v1166
        %v1174 = vadd.f32 %v1154, %v1170
        %v1175 = vadd.f32 %v1155, %v1166
        %v1176 = vadd.f32 %v1156, %v1170
        %v1177 = vadd.f32 %v1157, %v1166
        %v1178 = vadd.f32 %v1158, %v1170
        %v1179 = vadd.f32 %v1159, %v1166
        %v1180 = vadd.f32 %v1160, %v1170
        %vm1181 = vcmp.ge.f32.partialorder %v1173, 0.0
        %vm1182 = vcmp.ge.f32.partialorder %v1174, 0.0
        %vm1183 = vcmp.ge.f32.partialorder %v1175, 0.0
        %vm1184 = vcmp.ge.f32.partialorder %v1176, 0.0
        %vm1185 = vcmp.ge.f32.partialorder %v1177, 0.0
        %vm1186 = vcmp.ge.f32.partialorder %v1178, 0.0
        %vm1187 = vcmp.ge.f32.partialorder %v1179, 0.0
        %vm1188 = vcmp.ge.f32.partialorder %v1180, 0.0
        %v1189 = vmul.f32 %v1173, 0.01
        %v1190 = vmul.f32 %v1174, 0.01
        %v1191 = vmul.f32 %v1175, 0.01
        %v1192 = vmul.f32 %v1176, 0.01
        %v1193 = vmul.f32 %v1177, 0.01
        %v1194 = vmul.f32 %v1178, 0.01
        %v1195 = vmul.f32 %v1179, 0.01
        %v1196 = vmul.f32 %v1180, 0.01
        %v1197 = vsel %vm1181, %v1173, %v1189
        %v1198 = vsel %vm1182, %v1174, %v1190
        %v1199 = vsel %vm1183, %v1175, %v1191
        %v1200 = vsel %vm1184, %v1176, %v1192
        %v1201 = vsel %vm1185, %v1177, %v1193
        %v1202 = vsel %vm1186, %v1178, %v1194
        %v1203 = vsel %vm1187, %v1179, %v1195
        %v1204 = vsel %vm1188, %v1180, %v1196
        %vm1213 = vcmask 1046528
        %v1214 = vrot.slane %v1197, 1
        %v1215 = vrot.slane %v1199, 1
        %v1216 = vsel %vm1213, %v1214, %v1215
        %v1217 = vrot.slane %v1198, 1
        %v1218 = vrot.slane %v1200, 1
        %v1219 = vsel %vm1213, %v1217, %v1218
        %v1220 = vrot.slane %v1201, 1
        %v1221 = vsel %vm1213, %v1215, %v1220
        %v1222 = vrot.slane %v1202, 1
        %v1223 = vsel %vm1213, %v1218, %v1222
        %v1224 = vrot.slane %v1203, 1
        %v1225 = vsel %vm1213, %v1220, %v1224
        %v1226 = vrot.slane %v1204, 1
        %v1227 = vsel %vm1213, %v1222, %v1226
        %v1236 = vmax.f32 %v1197, %v1216
        %v1237 = vmax.f32 %v1198, %v1219
        %v1238 = vmax.f32 %v1199, %v1221
        %v1239 = vmax.f32 %v1200, %v1223
        %v1240 = vmax.f32 %v1201, %v1225
        %v1241 = vmax.f32 %v1202, %v1227
        %v1242 = vmax.f32 %v1203, %v1224
        %v1243 = vmax.f32 %v1204, %v1226
        %v1244 = vld [vmem:[%s5] sm:$0xff]
        %v1245 = vld [vmem:[%s5 + $0x8] sm:$0x3f]
        %vm1246 = vcmask 220160
        %v1248 = vsel %vm1246, %v1244, 0
        %v1251 = vsel %vm1246, %v1245, 0
        %vm1253 = vcmask 1042432
        %v1255 = vsel %vm1253, %v1242, 0
        %v1258 = vsel %vm1253, %v1243, 0
        %1260 = vmatprep.subr.mxu0 %v1237
        %1261 = vmatpush1.msra.mxu0 %v1236
        %1262 = vmatprep.subr.mxu0 %v1239
        %1263 = vmatpush1.msra.mxu0 %v1238
        %1264 = vmatprep.subr.mxu0 %v1241
        %1265 = vmatpush1.msra.mxu0 %v1240
        %1266 = vmatprep.subr.mxu0 %v1258
        %1267 = vmatpush1.msra.mxu0 %v1255
        %1268 = vmatprep.subr.mxu0 0.0
        %1269 = vmatpush1.msra.mxu0 0.0
        %1270 = vmatprep.subr.mxu0 0.0
        %1271 = vmatpush1.msra.mxu0 0.0
        %1272 = vmatprep.subr.mxu0 0.0
        %1273 = vmatpush1.msra.mxu0 0.0
        %1274 = vmatprep.subr.mxu0 0.0
        %1275 = vmatpush1.msra.mxu0 0.0
        %1276 = vmatprep.subr.mxu0 0.0
        %1277 = vmatpush1.msra.mxu0 0.0
        %1278 = vmatprep.subr.mxu0 0.0
        %1279 = vmatpush1.msra.mxu0 0.0
        %1280 = vmatprep.subr.mxu0 0.0
        %1281 = vmatpush1.msra.mxu0 0.0
        %1282 = vmatprep.subr.mxu0 0.0
        %1283 = vmatpush1.msra.mxu0 0.0
        %1284 = vmatprep.subr.mxu0 0.0
        %1285 = vmatpush1.msra.mxu0 0.0
        %1286 = vmatprep.subr.mxu0 0.0
        %1287 = vmatpush1.msra.mxu0 0.0
        %1288 = vmatprep.subr.mxu0 0.0
        %1289 = vmatpush1.msra.mxu0 0.0
        %1290 = vmatprep.subr.mxu0 0.0
        %1291 = vmatpush1.msra.mxu0 0.0
        %1292 = vmatprep.subr.mxu0 0.0
        %1293 = vmatpush1.msra.mxu0 0.0
        %1294 = vmatprep.subr.mxu0 0.0
        %1295 = vmatpush1.msra.mxu0 0.0
        %1296 = vmatprep.subr.mxu0 0.0
        %1297 = vmatpush1.msra.mxu0 0.0
        %1298 = vmatprep.subr.mxu0 0.0
        %1299 = vmatpush1.msra.mxu0 0.0
        %1300 = vmatprep.subr.mxu0 0.0
        %1301 = vmatpush1.msra.mxu0 0.0
        %1302 = vmatprep.subr.mxu0 0.0
        %1303 = vmatpush1.msra.mxu0 0.0
        %1304 = vmatprep.subr.mxu0 0.0
        %1305 = vmatpush1.msra.mxu0 0.0
        %1306 = vmatprep.subr.mxu0 0.0
        %1307 = vmatpush1.msra.mxu0 0.0
        %1308 = vmatprep.subr.mxu0 0.0
        %1309 = vmatpush1.msra.mxu0 0.0
        %1310 = vmatprep.subr.mxu0 0.0
        %1311 = vmatpush1.msra.mxu0 0.0
        %1312 = vmatprep.subr.mxu0 0.0
        %1313 = vmatpush1.msra.mxu0 0.0
        %1314 = vmatprep.subr.mxu0 0.0
        %1315 = vmatpush1.msra.mxu0 0.0
        %1316 = vmatprep.subr.mxu0 0.0
        %1317 = vmatpush1.msra.mxu0 0.0
        %1318 = vmatprep.subr.mxu0 0.0
        %1319 = vmatpush1.msra.mxu0 0.0
        %1320 = vmatprep.subr.mxu0 0.0
        %1321 = vmatpush1.msra.mxu0 0.0
        %1322 = vmatprep.subr.mxu0 0.0
        %1323 = vmatpush1.msra.mxu0 0.0
        %1324 = vmatprep.mubr.f32.mxu0 0.0
        %1325 = vmatmul.mubr.f32.gmra.mrb[0].mxu0 %v1248
        %v1326 = vpop.f32.mrb[0].mxu0
        %v1327 = vadd.f32 0.0, %v1326
        %v1328 = vpop.f32.mrb[0].mxu0
        %v1329 = vadd.f32 0.0, %v1328
        %1330 = vmatprep.mubr.f32.mxu0 0.0
        %1331 = vmatmul.mubr.f32.gmra.mrb[0].mxu0 %v1251
        %v1332 = vpop.f32.mrb[0].mxu0
        %v1333 = vadd.f32 0.0, %v1332
        %v1334 = vpop.f32.mrb[0].mxu0
        %v1335 = vadd.f32 0.0, %v1334
        %1336 = vdwg.mxu0
        %1341 = vrot.lane.b32.xlu0 %v1327, 120
        %v1342 = vpop.permute.xlu0 %1341
        %1343 = vrot.lane.b32.xlu0 %v1329, 120
        %v1344 = vpop.permute.xlu0 %1343
        %1345 = vrot.lane.b32.xlu0 %v1333, 120
        %v1346 = vpop.permute.xlu0 %1345
        %1347 = vrot.lane.b32.xlu0 %v1335, 120
        %v1348 = vpop.permute.xlu0 %1347
        %vm1349 = vcmask 982016
        %v1350 = vsel %vm1349, %v1342, %v1344
        %v1351 = vsel %vm1349, %v1346, %v1348
        %v1356 = vmax.f32 %v1327, %v1350
        %v1357 = vmax.f32 %v1329, %v1344
        %v1358 = vmax.f32 %v1333, %v1351
        %v1359 = vmax.f32 %v1335, %v1348
        %v1360 = vpack.c.bf16 %v1358, %v1356
        %v1361 = vpack.c.bf16 %v1359, %v1357
        %v1362 = vld [vmem:[%s3] sm:$0xff]
        %v1363 = vld [vmem:[%s3 + $0x8] sm:$0xff]
        %v1364 = vld [vmem:[%s3 + $0x10] sm:$0xff]
        %v1365 = vld [vmem:[%s3 + $0x18] sm:$0xff]
        %v1366 = vld [vmem:[%s3 + $0x20] sm:$0xff]
        %v1367 = vld [vmem:[%s3 + $0x28] sm:$0xff]
        %v1368 = vld [vmem:[%s3 + $0x30] sm:$0xff]
        %v1369 = vld [vmem:[%s3 + $0x38] sm:$0xff]
        %v1370 = vld [vmem:[%s3 + $0x40] sm:$0xff]
        %v1371 = vld [vmem:[%s3 + $0x48] sm:$0xff]
        %v1372 = vld [vmem:[%s3 + $0x50] sm:$0xff]
        %v1373 = vld [vmem:[%s3 + $0x58] sm:$0xff]
        %v1374 = vld [vmem:[%s3 + $0x60] sm:$0xff]
        %v1375 = vld [vmem:[%s3 + $0x68] sm:$0xff]
        %v1376 = vld [vmem:[%s3 + $0x70] sm:$0xff]
        %v1377 = vld [vmem:[%s3 + $0x78] sm:$0xff]
        %v1378 = vld [vmem:[%s3 + $0x80] sm:$0xff]
        %v1379 = vld [vmem:[%s3 + $0x88] sm:$0xff]
        %v1380 = vld [vmem:[%s3 + $0x90] sm:$0xff]
        %v1381 = vld [vmem:[%s3 + $0x98] sm:$0xff]
        %v1382 = vld [vmem:[%s3 + $0xa0] sm:$0xff]
        %v1383 = vld [vmem:[%s3 + $0xa8] sm:$0xff]
        %v1384 = vld [vmem:[%s3 + $0xb0] sm:$0xff]
        %v1385 = vld [vmem:[%s3 + $0xb8] sm:$0xff]
        %v1386 = vld [vmem:[%s3 + $0xc0] sm:$0xff]
        %v1387 = vld [vmem:[%s3 + $0xc8] sm:$0xff]
        %v1388 = vld [vmem:[%s3 + $0xd0] sm:$0xff]
        %s1389 = scalar_lea.vmem %s3, 216
        %v1390 = vld [vmem:[%s1389] sm:$0xff]
        %v1391 = vld [vmem:[%s1389 + $0x8] sm:$0xff]
        %v1392 = vld [vmem:[%s1389 + $0x10] sm:$0xff]
        %v1393 = vld [vmem:[%s1389 + $0x18] sm:$0xff]
        %v1394 = vld [vmem:[%s1389 + $0x20] sm:$0xff]
        %v1395 = vld [vmem:[%s1389 + $0x28] sm:$0xff]
        %v1396 = vld [vmem:[%s1389 + $0x30] sm:$0xff]
        %v1397 = vld [vmem:[%s1389 + $0x38] sm:$0xff]
        %v1398 = vld [vmem:[%s1389 + $0x40] sm:$0xff]
        %v1399 = vld [vmem:[%s1389 + $0x48] sm:$0xff]
        %v1400 = vld [vmem:[%s1389 + $0x50] sm:$0xff]
        %v1401 = vld [vmem:[%s1389 + $0x58] sm:$0xff]
        %v1402 = vld [vmem:[%s1389 + $0x60] sm:$0xff]
        %v1403 = vld [vmem:[%s1389 + $0x68] sm:$0xff]
        %v1404 = vld [vmem:[%s1389 + $0x70] sm:$0xff]
        %v1405 = vld [vmem:[%s1389 + $0x78] sm:$0xff]
        %v1406 = vld [vmem:[%s1389 + $0x80] sm:$0xff]
        %v1407 = vld [vmem:[%s1389 + $0x88] sm:$0xff]
        %v1408 = vld [vmem:[%s1389 + $0x90] sm:$0xff]
        %v1409 = vld [vmem:[%s1389 + $0x98] sm:$0xff]
        %v1410 = vld [vmem:[%s1389 + $0xa0] sm:$0xff]
        %v1411 = vld [vmem:[%s1389 + $0xa8] sm:$0xff]
        %v1412 = vld [vmem:[%s1389 + $0xb0] sm:$0xff]
        %v1413 = vld [vmem:[%s1389 + $0xb8] sm:$0xff]
        %v1414 = vld [vmem:[%s1389 + $0xc0] sm:$0xff]
        %v1415 = vld [vmem:[%s1389 + $0xc8] sm:$0xff]
        %v1416 = vld [vmem:[%s1389 + $0xd0] sm:$0xff]
        %v1418 = vshrl.u32 %v1360, 16
        %v1420 = vshll.u32 %v1360, 16
        %v1422 = vrot.slane %v1420, 1
        %v1423 = vor.u32 %v1418, %v1422
        %v1425 = vshrl.u32 %v1361, 16
        %v1427 = vshll.u32 %v1361, 16
        %v1429 = vrot.slane %v1427, 1
        %v1430 = vor.u32 %v1425, %v1429
        %v1459 = vunpack.c.l.b16 %v1390
        %v1460 = vunpack.c.h.b16 %v1390
        %v1461 = vunpack.c.l.b16 %v1391
        %v1462 = vunpack.c.h.b16 %v1391
        %v1463 = vunpack.c.l.b16 %v1392
        %v1464 = vunpack.c.h.b16 %v1392
        %v1465 = vunpack.c.l.b16 %v1393
        %v1466 = vunpack.c.h.b16 %v1393
        %v1467 = vunpack.c.l.b16 %v1394
        %v1468 = vunpack.c.h.b16 %v1394
        %v1469 = vunpack.c.l.b16 %v1395
        %v1470 = vunpack.c.h.b16 %v1395
        %v1471 = vunpack.c.l.b16 %v1396
        %v1472 = vunpack.c.h.b16 %v1396
        %v1473 = vunpack.c.l.b16 %v1397
        %v1474 = vunpack.c.h.b16 %v1397
        %v1475 = vunpack.c.l.b16 %v1398
        %v1476 = vunpack.c.h.b16 %v1398
        %v1477 = vunpack.c.l.b16 %v1399
        %v1478 = vunpack.c.h.b16 %v1399
        %v1479 = vunpack.c.l.b16 %v1400
        %v1480 = vunpack.c.h.b16 %v1400
        %v1481 = vunpack.c.l.b16 %v1401
        %v1482 = vunpack.c.h.b16 %v1401
        %v1483 = vunpack.c.l.b16 %v1402
        %v1484 = vunpack.c.h.b16 %v1402
        %v1485 = vunpack.c.l.b16 %v1403
        %v1486 = vunpack.c.h.b16 %v1403
        %v1487 = vunpack.c.l.b16 %v1404
        %v1488 = vunpack.c.h.b16 %v1404
        %v1489 = vunpack.c.l.b16 %v1405
        %v1490 = vunpack.c.h.b16 %v1405
        %v1491 = vunpack.c.l.b16 %v1406
        %v1492 = vunpack.c.h.b16 %v1406
        %v1493 = vunpack.c.l.b16 %v1407
        %v1494 = vunpack.c.h.b16 %v1407
        %v1495 = vunpack.c.l.b16 %v1408
        %v1496 = vunpack.c.h.b16 %v1408
        %v1497 = vunpack.c.l.b16 %v1409
        %v1498 = vunpack.c.h.b16 %v1409
        %v1499 = vunpack.c.l.b16 %v1410
        %v1500 = vunpack.c.h.b16 %v1410
        %v1501 = vunpack.c.l.b16 %v1411
        %v1502 = vunpack.c.h.b16 %v1411
        %v1503 = vunpack.c.l.b16 %v1412
        %v1504 = vunpack.c.h.b16 %v1412
        %v1505 = vunpack.c.l.b16 %v1413
        %v1506 = vunpack.c.h.b16 %v1413
        %v1507 = vunpack.c.l.b16 %v1414
        %v1508 = vunpack.c.h.b16 %v1414
        %v1509 = vunpack.c.l.b16 %v1415
        %v1510 = vunpack.c.h.b16 %v1415
        %v1511 = vunpack.c.l.b16 %v1416
        %v1512 = vunpack.c.h.b16 %v1416
        %v1513 = vpack.c.b16 %v1461, %v1459
        %v1514 = vpack.c.b16 %v1462, %v1460
        %v1515 = vpack.c.b16 %v1465, %v1463
        %v1516 = vpack.c.b16 %v1466, %v1464
        %v1517 = vpack.c.b16 %v1469, %v1467
        %v1518 = vpack.c.b16 %v1470, %v1468
        %v1519 = vpack.c.b16 %v1473, %v1471
        %v1520 = vpack.c.b16 %v1474, %v1472
        %v1521 = vpack.c.b16 %v1477, %v1475
        %v1522 = vpack.c.b16 %v1478, %v1476
        %v1523 = vpack.c.b16 %v1481, %v1479
        %v1524 = vpack.c.b16 %v1482, %v1480
        %v1525 = vpack.c.b16 %v1485, %v1483
        %v1526 = vpack.c.b16 %v1486, %v1484
        %v1527 = vpack.c.b16 %v1489, %v1487
        %v1528 = vpack.c.b16 %v1490, %v1488
        %v1529 = vpack.c.b16 %v1493, %v1491
        %v1530 = vpack.c.b16 %v1494, %v1492
        %v1531 = vpack.c.b16 %v1497, %v1495
        %v1532 = vpack.c.b16 %v1498, %v1496
        %v1533 = vpack.c.b16 %v1501, %v1499
        %v1534 = vpack.c.b16 %v1502, %v1500
        %v1535 = vpack.c.b16 %v1505, %v1503
        %v1536 = vpack.c.b16 %v1506, %v1504
        %v1537 = vpack.c.b16 %v1509, %v1507
        %v1538 = vpack.c.b16 %v1510, %v1508
        %v1539 = vpack.c.b16 %v1511, %v1511
        %v1540 = vpack.c.b16 %v1512, %v1512
        %vm1567 = vcmask 719872
        %v1569 = vsel %vm1567, %v1430, 0
        %vm1571 = vcmask 1043456
        %v1573 = vsel %vm1571, %v1539, 0
        %v1576 = vsel %vm1571, %v1540, 0
        %1578 = vmatprep.subr.bf16.mxu0 %v1514
        %1579 = vmatpush1.bf16.msra.mxu0 %v1513
        %1580 = vmatprep.subr.bf16.mxu0 %v1516
        %1581 = vmatpush1.bf16.msra.mxu0 %v1515
        %1582 = vmatprep.subr.bf16.mxu0 %v1518
        %1583 = vmatpush1.bf16.msra.mxu0 %v1517
        %1584 = vmatprep.subr.bf16.mxu0 %v1520
        %1585 = vmatpush1.bf16.msra.mxu0 %v1519
        %1586 = vmatprep.subr.bf16.mxu0 %v1522
        %1587 = vmatpush1.bf16.msra.mxu0 %v1521
        %1588 = vmatprep.subr.bf16.mxu0 %v1524
        %1589 = vmatpush1.bf16.msra.mxu0 %v1523
        %1590 = vmatprep.subr.bf16.mxu0 %v1526
        %1591 = vmatpush1.bf16.msra.mxu0 %v1525
        %1592 = vmatprep.subr.bf16.mxu0 %v1528
        %1593 = vmatpush1.bf16.msra.mxu0 %v1527
        %1594 = vmatprep.subr.bf16.mxu0 %v1530
        %1595 = vmatpush1.bf16.msra.mxu0 %v1529
        %1596 = vmatprep.subr.bf16.mxu0 %v1532
        %1597 = vmatpush1.bf16.msra.mxu0 %v1531
        %1598 = vmatprep.subr.bf16.mxu0 %v1534
        %1599 = vmatpush1.bf16.msra.mxu0 %v1533
        %1600 = vmatprep.subr.bf16.mxu0 %v1536
        %1601 = vmatpush1.bf16.msra.mxu0 %v1535
        %1602 = vmatprep.subr.bf16.mxu0 %v1538
        %1603 = vmatpush1.bf16.msra.mxu0 %v1537
        %1604 = vmatprep.subr.bf16.mxu0 %v1576
        %1605 = vmatpush1.bf16.msra.mxu0 %v1573
        %1606 = vmatprep.subr.bf16.mxu0 0
        %1607 = vmatpush1.bf16.msra.mxu0 0
        %1608 = vmatprep.subr.bf16.mxu0 0
        %1609 = vmatpush1.bf16.msra.mxu0 0
        %1610 = vmatprep.mubr.bf16.mxu0 %v1569
        %1611 = vmatmul.mubr.bf16.gmra.mrb[0].mxu0 %v1423
        %v1612 = vpop.f32.mrb[0].mxu0
        %v1613 = vadd.f32 0.0, %v1612
        %v1614 = vpop.f32.mrb[0].mxu0
        %v1615 = vadd.f32 0.0, %v1614
        %v1616 = vpop.f32.mrb[0].mxu0
        %v1617 = vadd.f32 0.0, %v1616
        %v1618 = vpop.f32.mrb[0].mxu0
        %v1619 = vadd.f32 0.0, %v1618
        %1620 = vdwg.mxu0
        %v1648 = vunpack.c.l.b16 %v1362
        %v1649 = vunpack.c.h.b16 %v1362
        %v1650 = vunpack.c.l.b16 %v1363
        %v1651 = vunpack.c.h.b16 %v1363
        %v1652 = vunpack.c.l.b16 %v1364
        %v1653 = vunpack.c.h.b16 %v1364
        %v1654 = vunpack.c.l.b16 %v1365
        %v1655 = vunpack.c.h.b16 %v1365
        %v1656 = vunpack.c.l.b16 %v1366
        %v1657 = vunpack.c.h.b16 %v1366
        %v1658 = vunpack.c.l.b16 %v1367
        %v1659 = vunpack.c.h.b16 %v1367
        %v1660 = vunpack.c.l.b16 %v1368
        %v1661 = vunpack.c.h.b16 %v1368
        %v1662 = vunpack.c.l.b16 %v1369
        %v1663 = vunpack.c.h.b16 %v1369
        %v1664 = vunpack.c.l.b16 %v1370
        %v1665 = vunpack.c.h.b16 %v1370
        %v1666 = vunpack.c.l.b16 %v1371
        %v1667 = vunpack.c.h.b16 %v1371
        %v1668 = vunpack.c.l.b16 %v1372
        %v1669 = vunpack.c.h.b16 %v1372
        %v1670 = vunpack.c.l.b16 %v1373
        %v1671 = vunpack.c.h.b16 %v1373
        %v1672 = vunpack.c.l.b16 %v1374
        %v1673 = vunpack.c.h.b16 %v1374
        %v1674 = vunpack.c.l.b16 %v1375
        %v1675 = vunpack.c.h.b16 %v1375
        %v1676 = vunpack.c.l.b16 %v1376
        %v1677 = vunpack.c.h.b16 %v1376
        %v1678 = vunpack.c.l.b16 %v1377
        %v1679 = vunpack.c.h.b16 %v1377
        %v1680 = vunpack.c.l.b16 %v1378
        %v1681 = vunpack.c.h.b16 %v1378
        %v1682 = vunpack.c.l.b16 %v1379
        %v1683 = vunpack.c.h.b16 %v1379
        %v1684 = vunpack.c.l.b16 %v1380
        %v1685 = vunpack.c.h.b16 %v1380
        %v1686 = vunpack.c.l.b16 %v1381
        %v1687 = vunpack.c.h.b16 %v1381
        %v1688 = vunpack.c.l.b16 %v1382
        %v1689 = vunpack.c.h.b16 %v1382
        %v1690 = vunpack.c.l.b16 %v1383
        %v1691 = vunpack.c.h.b16 %v1383
        %v1692 = vunpack.c.l.b16 %v1384
        %v1693 = vunpack.c.h.b16 %v1384
        %v1694 = vunpack.c.l.b16 %v1385
        %v1695 = vunpack.c.h.b16 %v1385
        %v1696 = vunpack.c.l.b16 %v1386
        %v1697 = vunpack.c.h.b16 %v1386
        %v1698 = vunpack.c.l.b16 %v1387
        %v1699 = vunpack.c.h.b16 %v1387
        %v1700 = vunpack.c.l.b16 %v1388
        %v1701 = vunpack.c.h.b16 %v1388
        %v1702 = vpack.c.b16 %v1650, %v1648
        %v1703 = vpack.c.b16 %v1651, %v1649
        %v1704 = vpack.c.b16 %v1654, %v1652
        %v1705 = vpack.c.b16 %v1655, %v1653
        %v1706 = vpack.c.b16 %v1658, %v1656
        %v1707 = vpack.c.b16 %v1659, %v1657
        %v1708 = vpack.c.b16 %v1662, %v1660
        %v1709 = vpack.c.b16 %v1663, %v1661
        %v1710 = vpack.c.b16 %v1666, %v1664
        %v1711 = vpack.c.b16 %v1667, %v1665
        %v1712 = vpack.c.b16 %v1670, %v1668
        %v1713 = vpack.c.b16 %v1671, %v1669
        %v1714 = vpack.c.b16 %v1674, %v1672
        %v1715 = vpack.c.b16 %v1675, %v1673
        %v1716 = vpack.c.b16 %v1678, %v1676
        %v1717 = vpack.c.b16 %v1679, %v1677
        %v1718 = vpack.c.b16 %v1682, %v1680
        %v1719 = vpack.c.b16 %v1683, %v1681
        %v1720 = vpack.c.b16 %v1686, %v1684
        %v1721 = vpack.c.b16 %v1687, %v1685
        %v1722 = vpack.c.b16 %v1690, %v1688
        %v1723 = vpack.c.b16 %v1691, %v1689
        %v1724 = vpack.c.b16 %v1694, %v1692
        %v1725 = vpack.c.b16 %v1695, %v1693
        %v1726 = vpack.c.b16 %v1698, %v1696
        %v1727 = vpack.c.b16 %v1699, %v1697
        %v1728 = vpack.c.b16 %v1700, %v1700
        %v1729 = vpack.c.b16 %v1701, %v1701
        %v1756 = vsel %vm1567, %v1361, 0
        %v1759 = vsel %vm1571, %v1728, 0
        %v1762 = vsel %vm1571, %v1729, 0
        %1764 = vmatprep.subr.bf16.mxu0 %v1703
        %1765 = vmatpush1.bf16.msra.mxu0 %v1702
        %1766 = vmatprep.subr.bf16.mxu0 %v1705
        %1767 = vmatpush1.bf16.msra.mxu0 %v1704
        %1768 = vmatprep.subr.bf16.mxu0 %v1707
        %1769 = vmatpush1.bf16.msra.mxu0 %v1706
        %1770 = vmatprep.subr.bf16.mxu0 %v1709
        %1771 = vmatpush1.bf16.msra.mxu0 %v1708
        %1772 = vmatprep.subr.bf16.mxu0 %v1711
        %1773 = vmatpush1.bf16.msra.mxu0 %v1710
        %1774 = vmatprep.subr.bf16.mxu0 %v1713
        %1775 = vmatpush1.bf16.msra.mxu0 %v1712
        %1776 = vmatprep.subr.bf16.mxu0 %v1715
        %1777 = vmatpush1.bf16.msra.mxu0 %v1714
        %1778 = vmatprep.subr.bf16.mxu0 %v1717
        %1779 = vmatpush1.bf16.msra.mxu0 %v1716
        %1780 = vmatprep.subr.bf16.mxu0 %v1719
        %1781 = vmatpush1.bf16.msra.mxu0 %v1718
        %1782 = vmatprep.subr.bf16.mxu0 %v1721
        %1783 = vmatpush1.bf16.msra.mxu0 %v1720
        %1784 = vmatprep.subr.bf16.mxu0 %v1723
        %1785 = vmatpush1.bf16.msra.mxu0 %v1722
        %1786 = vmatprep.subr.bf16.mxu0 %v1725
        %1787 = vmatpush1.bf16.msra.mxu0 %v1724
        %1788 = vmatprep.subr.bf16.mxu0 %v1727
        %1789 = vmatpush1.bf16.msra.mxu0 %v1726
        %1790 = vmatprep.subr.bf16.mxu0 %v1762
        %1791 = vmatpush1.bf16.msra.mxu0 %v1759
        %1792 = vmatprep.subr.bf16.mxu0 0
        %1793 = vmatpush1.bf16.msra.mxu0 0
        %1794 = vmatprep.subr.bf16.mxu0 0
        %1795 = vmatpush1.bf16.msra.mxu0 0
        %1796 = vmatprep.mubr.bf16.mxu0 %v1756
        %1797 = vmatmul.mubr.bf16.gmra.mrb[0].mxu0 %v1360
        %v1798 = vpop.f32.mrb[0].mxu0
        %v1799 = vadd.f32 %v1613, %v1798
        %v1800 = vpop.f32.mrb[0].mxu0
        %v1801 = vadd.f32 %v1615, %v1800
        %v1802 = vpop.f32.mrb[0].mxu0
        %v1803 = vadd.f32 %v1617, %v1802
        %v1804 = vpop.f32.mrb[0].mxu0
        %v1805 = vadd.f32 %v1619, %v1804
        %1806 = vdwg.mxu0
        %s1807 = scalar_lea.vmem %s3, 432
        %v1808 = vld [vmem:[%s1807] sm:$0xff]
        %v1809 = vld [vmem:[%s1807 + $0x8] sm:$0xff]
        %v1810 = vld [vmem:[%s1807 + $0x10] sm:$0xff]
        %v1811 = vld [vmem:[%s1807 + $0x18] sm:$0xff]
        %v1812 = vld [vmem:[%s1807 + $0x20] sm:$0xff]
        %v1813 = vld [vmem:[%s1807 + $0x28] sm:$0xff]
        %v1814 = vld [vmem:[%s1807 + $0x30] sm:$0xff]
        %v1815 = vld [vmem:[%s1807 + $0x38] sm:$0xff]
        %v1816 = vld [vmem:[%s1807 + $0x40] sm:$0xff]
        %v1817 = vld [vmem:[%s1807 + $0x48] sm:$0xff]
        %v1818 = vld [vmem:[%s1807 + $0x50] sm:$0xff]
        %v1819 = vld [vmem:[%s1807 + $0x58] sm:$0xff]
        %v1820 = vld [vmem:[%s1807 + $0x60] sm:$0xff]
        %v1821 = vld [vmem:[%s1807 + $0x68] sm:$0xff]
        %v1822 = vld [vmem:[%s1807 + $0x70] sm:$0xff]
        %v1823 = vld [vmem:[%s1807 + $0x78] sm:$0xff]
        %v1824 = vld [vmem:[%s1807 + $0x80] sm:$0xff]
        %v1825 = vld [vmem:[%s1807 + $0x88] sm:$0xff]
        %v1826 = vld [vmem:[%s1807 + $0x90] sm:$0xff]
        %v1827 = vld [vmem:[%s1807 + $0x98] sm:$0xff]
        %v1828 = vld [vmem:[%s1807 + $0xa0] sm:$0xff]
        %v1829 = vld [vmem:[%s1807 + $0xa8] sm:$0xff]
        %v1830 = vld [vmem:[%s1807 + $0xb0] sm:$0xff]
        %v1831 = vld [vmem:[%s1807 + $0xb8] sm:$0xff]
        %v1832 = vld [vmem:[%s1807 + $0xc0] sm:$0xff]
        %v1833 = vld [vmem:[%s1807 + $0xc8] sm:$0xff]
        %v1834 = vld [vmem:[%s1807 + $0xd0] sm:$0xff]
        %v1837 = vrot.slane %v1360, 1
        %v1838 = vrot.slane %v1361, 1
        %v1867 = vunpack.c.l.b16 %v1808
        %v1868 = vunpack.c.h.b16 %v1808
        %v1869 = vunpack.c.l.b16 %v1809
        %v1870 = vunpack.c.h.b16 %v1809
        %v1871 = vunpack.c.l.b16 %v1810
        %v1872 = vunpack.c.h.b16 %v1810
        %v1873 = vunpack.c.l.b16 %v1811
        %v1874 = vunpack.c.h.b16 %v1811
        %v1875 = vunpack.c.l.b16 %v1812
        %v1876 = vunpack.c.h.b16 %v1812
        %v1877 = vunpack.c.l.b16 %v1813
        %v1878 = vunpack.c.h.b16 %v1813
        %v1879 = vunpack.c.l.b16 %v1814
        %v1880 = vunpack.c.h.b16 %v1814
        %v1881 = vunpack.c.l.b16 %v1815
        %v1882 = vunpack.c.h.b16 %v1815
        %v1883 = vunpack.c.l.b16 %v1816
        %v1884 = vunpack.c.h.b16 %v1816
        %v1885 = vunpack.c.l.b16 %v1817
        %v1886 = vunpack.c.h.b16 %v1817
        %v1887 = vunpack.c.l.b16 %v1818
        %v1888 = vunpack.c.h.b16 %v1818
        %v1889 = vunpack.c.l.b16 %v1819
        %v1890 = vunpack.c.h.b16 %v1819
        %v1891 = vunpack.c.l.b16 %v1820
        %v1892 = vunpack.c.h.b16 %v1820
        %v1893 = vunpack.c.l.b16 %v1821
        %v1894 = vunpack.c.h.b16 %v1821
        %v1895 = vunpack.c.l.b16 %v1822
        %v1896 = vunpack.c.h.b16 %v1822
        %v1897 = vunpack.c.l.b16 %v1823
        %v1898 = vunpack.c.h.b16 %v1823
        %v1899 = vunpack.c.l.b16 %v1824
        %v1900 = vunpack.c.h.b16 %v1824
        %v1901 = vunpack.c.l.b16 %v1825
        %v1902 = vunpack.c.h.b16 %v1825
        %v1903 = vunpack.c.l.b16 %v1826
        %v1904 = vunpack.c.h.b16 %v1826
        %v1905 = vunpack.c.l.b16 %v1827
        %v1906 = vunpack.c.h.b16 %v1827
        %v1907 = vunpack.c.l.b16 %v1828
        %v1908 = vunpack.c.h.b16 %v1828
        %v1909 = vunpack.c.l.b16 %v1829
        %v1910 = vunpack.c.h.b16 %v1829
        %v1911 = vunpack.c.l.b16 %v1830
        %v1912 = vunpack.c.h.b16 %v1830
        %v1913 = vunpack.c.l.b16 %v1831
        %v1914 = vunpack.c.h.b16 %v1831
        %v1915 = vunpack.c.l.b16 %v1832
        %v1916 = vunpack.c.h.b16 %v1832
        %v1917 = vunpack.c.l.b16 %v1833
        %v1918 = vunpack.c.h.b16 %v1833
        %v1919 = vunpack.c.l.b16 %v1834
        %v1920 = vunpack.c.h.b16 %v1834
        %v1921 = vpack.c.b16 %v1869, %v1867
        %v1922 = vpack.c.b16 %v1870, %v1868
        %v1923 = vpack.c.b16 %v1873, %v1871
        %v1924 = vpack.c.b16 %v1874, %v1872
        %v1925 = vpack.c.b16 %v1877, %v1875
        %v1926 = vpack.c.b16 %v1878, %v1876
        %v1927 = vpack.c.b16 %v1881, %v1879
        %v1928 = vpack.c.b16 %v1882, %v1880
        %v1929 = vpack.c.b16 %v1885, %v1883
        %v1930 = vpack.c.b16 %v1886, %v1884
        %v1931 = vpack.c.b16 %v1889, %v1887
        %v1932 = vpack.c.b16 %v1890, %v1888
        %v1933 = vpack.c.b16 %v1893, %v1891
        %v1934 = vpack.c.b16 %v1894, %v1892
        %v1935 = vpack.c.b16 %v1897, %v1895
        %v1936 = vpack.c.b16 %v1898, %v1896
        %v1937 = vpack.c.b16 %v1901, %v1899
        %v1938 = vpack.c.b16 %v1902, %v1900
        %v1939 = vpack.c.b16 %v1905, %v1903
        %v1940 = vpack.c.b16 %v1906, %v1904
        %v1941 = vpack.c.b16 %v1909, %v1907
        %v1942 = vpack.c.b16 %v1910, %v1908
        %v1943 = vpack.c.b16 %v1913, %v1911
        %v1944 = vpack.c.b16 %v1914, %v1912
        %v1945 = vpack.c.b16 %v1917, %v1915
        %v1946 = vpack.c.b16 %v1918, %v1916
        %v1947 = vpack.c.b16 %v1919, %v1919
        %v1948 = vpack.c.b16 %v1920, %v1920
        %v1976 = vsel %vm1567, %v1838, 0
        %v1979 = vsel %vm1571, %v1947, 0
        %v1982 = vsel %vm1571, %v1948, 0
        %1984 = vmatprep.subr.bf16.mxu0 %v1922
        %1985 = vmatpush1.bf16.msra.mxu0 %v1921
        %1986 = vmatprep.subr.bf16.mxu0 %v1924
        %1987 = vmatpush1.bf16.msra.mxu0 %v1923
        %1988 = vmatprep.subr.bf16.mxu0 %v1926
        %1989 = vmatpush1.bf16.msra.mxu0 %v1925
        %1990 = vmatprep.subr.bf16.mxu0 %v1928
        %1991 = vmatpush1.bf16.msra.mxu0 %v1927
        %1992 = vmatprep.subr.bf16.mxu0 %v1930
        %1993 = vmatpush1.bf16.msra.mxu0 %v1929
        %1994 = vmatprep.subr.bf16.mxu0 %v1932
        %1995 = vmatpush1.bf16.msra.mxu0 %v1931
        %1996 = vmatprep.subr.bf16.mxu0 %v1934
        %1997 = vmatpush1.bf16.msra.mxu0 %v1933
        %1998 = vmatprep.subr.bf16.mxu0 %v1936
        %1999 = vmatpush1.bf16.msra.mxu0 %v1935
        %2000 = vmatprep.subr.bf16.mxu0 %v1938
        %2001 = vmatpush1.bf16.msra.mxu0 %v1937
        %2002 = vmatprep.subr.bf16.mxu0 %v1940
        %2003 = vmatpush1.bf16.msra.mxu0 %v1939
        %2004 = vmatprep.subr.bf16.mxu0 %v1942
        %2005 = vmatpush1.bf16.msra.mxu0 %v1941
        %2006 = vmatprep.subr.bf16.mxu0 %v1944
        %2007 = vmatpush1.bf16.msra.mxu0 %v1943
        %2008 = vmatprep.subr.bf16.mxu0 %v1946
        %2009 = vmatpush1.bf16.msra.mxu0 %v1945
        %2010 = vmatprep.subr.bf16.mxu0 %v1982
        %2011 = vmatpush1.bf16.msra.mxu0 %v1979
        %2012 = vmatprep.subr.bf16.mxu0 0
        %2013 = vmatpush1.bf16.msra.mxu0 0
        %2014 = vmatprep.subr.bf16.mxu0 0
        %2015 = vmatpush1.bf16.msra.mxu0 0
        %2016 = vmatprep.mubr.bf16.mxu0 %v1976
        %2017 = vmatmul.mubr.bf16.gmra.mrb[0].mxu0 %v1837
        %v2018 = vpop.f32.mrb[0].mxu0
        %v2019 = vadd.f32 0.0, %v2018
        %v2020 = vpop.f32.mrb[0].mxu0
        %v2021 = vadd.f32 0.0, %v2020
        %v2022 = vpop.f32.mrb[0].mxu0
        %v2023 = vadd.f32 0.0, %v2022
        %v2024 = vpop.f32.mrb[0].mxu0
        %v2025 = vadd.f32 0.0, %v2024
        %2026 = vdwg.mxu0
        %v2027 = vadd.f32 %v1799, %v2019
        %v2028 = vadd.f32 %v1801, %v2021
        %v2029 = vadd.f32 %v1803, %v2023
        %v2030 = vadd.f32 %v1805, %v2025
        %s2031 = scalar_lea.vmem %s3, 648
        %v2032 = vld [vmem:[%s2031] sm:$0xff]
        %v2033 = vld [vmem:[%s2031 + $0x8] sm:$0xff]
        %v2034 = vld [vmem:[%s2031 + $0x10] sm:$0xff]
        %v2035 = vld [vmem:[%s2031 + $0x18] sm:$0xff]
        %v2036 = vld [vmem:[%s2031 + $0x20] sm:$0xff]
        %v2037 = vld [vmem:[%s2031 + $0x28] sm:$0xff]
        %v2038 = vld [vmem:[%s2031 + $0x30] sm:$0xff]
        %v2039 = vld [vmem:[%s2031 + $0x38] sm:$0xff]
        %v2040 = vld [vmem:[%s2031 + $0x40] sm:$0xff]
        %v2041 = vld [vmem:[%s2031 + $0x48] sm:$0xff]
        %v2042 = vld [vmem:[%s2031 + $0x50] sm:$0xff]
        %v2043 = vld [vmem:[%s2031 + $0x58] sm:$0xff]
        %v2044 = vld [vmem:[%s2031 + $0x60] sm:$0xff]
        %v2045 = vld [vmem:[%s2031 + $0x68] sm:$0xff]
        %v2046 = vld [vmem:[%s2031 + $0x70] sm:$0xff]
        %v2047 = vld [vmem:[%s2031 + $0x78] sm:$0xff]
        %v2048 = vld [vmem:[%s2031 + $0x80] sm:$0xff]
        %v2049 = vld [vmem:[%s2031 + $0x88] sm:$0xff]
        %v2050 = vld [vmem:[%s2031 + $0x90] sm:$0xff]
        %v2051 = vld [vmem:[%s2031 + $0x98] sm:$0xff]
        %v2052 = vld [vmem:[%s2031 + $0xa0] sm:$0xff]
        %v2053 = vld [vmem:[%s2031 + $0xa8] sm:$0xff]
        %v2054 = vld [vmem:[%s2031 + $0xb0] sm:$0xff]
        %v2055 = vld [vmem:[%s2031 + $0xb8] sm:$0xff]
        %v2056 = vld [vmem:[%s2031 + $0xc0] sm:$0xff]
        %v2057 = vld [vmem:[%s2031 + $0xc8] sm:$0xff]
        %v2058 = vld [vmem:[%s2031 + $0xd0] sm:$0xff]
        %v2059 = vrot.slane %v1418, 1
        %v2060 = vrot.slane %v1420, 2
        %v2061 = vor.u32 %v2059, %v2060
        %v2062 = vrot.slane %v1425, 1
        %v2063 = vrot.slane %v1427, 2
        %v2064 = vor.u32 %v2062, %v2063
        %v2093 = vunpack.c.l.b16 %v2032
        %v2094 = vunpack.c.h.b16 %v2032
        %v2095 = vunpack.c.l.b16 %v2033
        %v2096 = vunpack.c.h.b16 %v2033
        %v2097 = vunpack.c.l.b16 %v2034
        %v2098 = vunpack.c.h.b16 %v2034
        %v2099 = vunpack.c.l.b16 %v2035
        %v2100 = vunpack.c.h.b16 %v2035
        %v2101 = vunpack.c.l.b16 %v2036
        %v2102 = vunpack.c.h.b16 %v2036
        %v2103 = vunpack.c.l.b16 %v2037
        %v2104 = vunpack.c.h.b16 %v2037
        %v2105 = vunpack.c.l.b16 %v2038
        %v2106 = vunpack.c.h.b16 %v2038
        %v2107 = vunpack.c.l.b16 %v2039
        %v2108 = vunpack.c.h.b16 %v2039
        %v2109 = vunpack.c.l.b16 %v2040
        %v2110 = vunpack.c.h.b16 %v2040
        %v2111 = vunpack.c.l.b16 %v2041
        %v2112 = vunpack.c.h.b16 %v2041
        %v2113 = vunpack.c.l.b16 %v2042
        %v2114 = vunpack.c.h.b16 %v2042
        %v2115 = vunpack.c.l.b16 %v2043
        %v2116 = vunpack.c.h.b16 %v2043
        %v2117 = vunpack.c.l.b16 %v2044
        %v2118 = vunpack.c.h.b16 %v2044
        %v2119 = vunpack.c.l.b16 %v2045
        %v2120 = vunpack.c.h.b16 %v2045
        %v2121 = vunpack.c.l.b16 %v2046
        %v2122 = vunpack.c.h.b16 %v2046
        %v2123 = vunpack.c.l.b16 %v2047
        %v2124 = vunpack.c.h.b16 %v2047
        %v2125 = vunpack.c.l.b16 %v2048
        %v2126 = vunpack.c.h.b16 %v2048
        %v2127 = vunpack.c.l.b16 %v2049
        %v2128 = vunpack.c.h.b16 %v2049
        %v2129 = vunpack.c.l.b16 %v2050
        %v2130 = vunpack.c.h.b16 %v2050
        %v2131 = vunpack.c.l.b16 %v2051
        %v2132 = vunpack.c.h.b16 %v2051
        %v2133 = vunpack.c.l.b16 %v2052
        %v2134 = vunpack.c.h.b16 %v2052
        %v2135 = vunpack.c.l.b16 %v2053
        %v2136 = vunpack.c.h.b16 %v2053
        %v2137 = vunpack.c.l.b16 %v2054
        %v2138 = vunpack.c.h.b16 %v2054
        %v2139 = vunpack.c.l.b16 %v2055
        %v2140 = vunpack.c.h.b16 %v2055
        %v2141 = vunpack.c.l.b16 %v2056
        %v2142 = vunpack.c.h.b16 %v2056
        %v2143 = vunpack.c.l.b16 %v2057
        %v2144 = vunpack.c.h.b16 %v2057
        %v2145 = vunpack.c.l.b16 %v2058
        %v2146 = vunpack.c.h.b16 %v2058
        %v2147 = vpack.c.b16 %v2095, %v2093
        %v2148 = vpack.c.b16 %v2096, %v2094
        %v2149 = vpack.c.b16 %v2099, %v2097
        %v2150 = vpack.c.b16 %v2100, %v2098
        %v2151 = vpack.c.b16 %v2103, %v2101
        %v2152 = vpack.c.b16 %v2104, %v2102
        %v2153 = vpack.c.b16 %v2107, %v2105
        %v2154 = vpack.c.b16 %v2108, %v2106
        %v2155 = vpack.c.b16 %v2111, %v2109
        %v2156 = vpack.c.b16 %v2112, %v2110
        %v2157 = vpack.c.b16 %v2115, %v2113
        %v2158 = vpack.c.b16 %v2116, %v2114
        %v2159 = vpack.c.b16 %v2119, %v2117
        %v2160 = vpack.c.b16 %v2120, %v2118
        %v2161 = vpack.c.b16 %v2123, %v2121
        %v2162 = vpack.c.b16 %v2124, %v2122
        %v2163 = vpack.c.b16 %v2127, %v2125
        %v2164 = vpack.c.b16 %v2128, %v2126
        %v2165 = vpack.c.b16 %v2131, %v2129
        %v2166 = vpack.c.b16 %v2132, %v2130
        %v2167 = vpack.c.b16 %v2135, %v2133
        %v2168 = vpack.c.b16 %v2136, %v2134
        %v2169 = vpack.c.b16 %v2139, %v2137
        %v2170 = vpack.c.b16 %v2140, %v2138
        %v2171 = vpack.c.b16 %v2143, %v2141
        %v2172 = vpack.c.b16 %v2144, %v2142
        %v2173 = vpack.c.b16 %v2145, %v2145
        %v2174 = vpack.c.b16 %v2146, %v2146
        %v2202 = vsel %vm1567, %v2064, 0
        %v2205 = vsel %vm1571, %v2173, 0
        %v2208 = vsel %vm1571, %v2174, 0
        %2210 = vmatprep.subr.bf16.mxu0 %v2148
        %2211 = vmatpush1.bf16.msra.mxu0 %v2147
        %2212 = vmatprep.subr.bf16.mxu0 %v2150
        %2213 = vmatpush1.bf16.msra.mxu0 %v2149
        %2214 = vmatprep.subr.bf16.mxu0 %v2152
        %2215 = vmatpush1.bf16.msra.mxu0 %v2151
        %2216 = vmatprep.subr.bf16.mxu0 %v2154
        %2217 = vmatpush1.bf16.msra.mxu0 %v2153
        %2218 = vmatprep.subr.bf16.mxu0 %v2156
        %2219 = vmatpush1.bf16.msra.mxu0 %v2155
        %2220 = vmatprep.subr.bf16.mxu0 %v2158
        %2221 = vmatpush1.bf16.msra.mxu0 %v2157
        %2222 = vmatprep.subr.bf16.mxu0 %v2160
        %2223 = vmatpush1.bf16.msra.mxu0 %v2159
        %2224 = vmatprep.subr.bf16.mxu0 %v2162
        %2225 = vmatpush1.bf16.msra.mxu0 %v2161
        %2226 = vmatprep.subr.bf16.mxu0 %v2164
        %2227 = vmatpush1.bf16.msra.mxu0 %v2163
        %2228 = vmatprep.subr.bf16.mxu0 %v2166
        %2229 = vmatpush1.bf16.msra.mxu0 %v2165
        %2230 = vmatprep.subr.bf16.mxu0 %v2168
        %2231 = vmatpush1.bf16.msra.mxu0 %v2167
        %2232 = vmatprep.subr.bf16.mxu0 %v2170
        %2233 = vmatpush1.bf16.msra.mxu0 %v2169
        %2234 = vmatprep.subr.bf16.mxu0 %v2172
        %2235 = vmatpush1.bf16.msra.mxu0 %v2171
        %2236 = vmatprep.subr.bf16.mxu0 %v2208
        %2237 = vmatpush1.bf16.msra.mxu0 %v2205
        %2238 = vmatprep.subr.bf16.mxu0 0
        %2239 = vmatpush1.bf16.msra.mxu0 0
        %2240 = vmatprep.subr.bf16.mxu0 0
        %2241 = vmatpush1.bf16.msra.mxu0 0
        %2242 = vmatprep.mubr.bf16.mxu0 %v2202
        %2243 = vmatmul.mubr.bf16.gmra.mrb[0].mxu0 %v2061
        %v2244 = vpop.f32.mrb[0].mxu0
        %v2245 = vadd.f32 0.0, %v2244
        %v2246 = vpop.f32.mrb[0].mxu0
        %v2247 = vadd.f32 0.0, %v2246
        %v2248 = vpop.f32.mrb[0].mxu0
        %v2249 = vadd.f32 0.0, %v2248
        %v2250 = vpop.f32.mrb[0].mxu0
        %v2251 = vadd.f32 0.0, %v2250
        %2252 = vdwg.mxu0
        %v2253 = vadd.f32 %v2027, %v2245
        %v2254 = vadd.f32 %v2028, %v2247
        %v2255 = vadd.f32 %v2029, %v2249
        %v2256 = vadd.f32 %v2030, %v2251
        %s2257 = scalar_lea.vmem %s3, 864
        %v2258 = vld [vmem:[%s2257] sm:$0xff]
        %v2259 = vld [vmem:[%s2257 + $0x8] sm:$0xff]
        %v2260 = vld [vmem:[%s2257 + $0x10] sm:$0xff]
        %v2261 = vld [vmem:[%s2257 + $0x18] sm:$0xff]
        %v2262 = vld [vmem:[%s2257 + $0x20] sm:$0xff]
        %v2263 = vld [vmem:[%s2257 + $0x28] sm:$0xff]
        %v2264 = vld [vmem:[%s2257 + $0x30] sm:$0xff]
        %v2265 = vld [vmem:[%s2257 + $0x38] sm:$0xff]
        %v2266 = vld [vmem:[%s2257 + $0x40] sm:$0xff]
        %v2267 = vld [vmem:[%s2257 + $0x48] sm:$0xff]
        %v2268 = vld [vmem:[%s2257 + $0x50] sm:$0xff]
        %v2269 = vld [vmem:[%s2257 + $0x58] sm:$0xff]
        %v2270 = vld [vmem:[%s2257 + $0x60] sm:$0xff]
        %v2271 = vld [vmem:[%s2257 + $0x68] sm:$0xff]
        %v2272 = vld [vmem:[%s2257 + $0x70] sm:$0xff]
        %v2273 = vld [vmem:[%s2257 + $0x78] sm:$0xff]
        %v2274 = vld [vmem:[%s2257 + $0x80] sm:$0xff]
        %v2275 = vld [vmem:[%s2257 + $0x88] sm:$0xff]
        %v2276 = vld [vmem:[%s2257 + $0x90] sm:$0xff]
        %v2277 = vld [vmem:[%s2257 + $0x98] sm:$0xff]
        %v2278 = vld [vmem:[%s2257 + $0xa0] sm:$0xff]
        %v2279 = vld [vmem:[%s2257 + $0xa8] sm:$0xff]
        %v2280 = vld [vmem:[%s2257 + $0xb0] sm:$0xff]
        %v2281 = vld [vmem:[%s2257 + $0xb8] sm:$0xff]
        %v2282 = vld [vmem:[%s2257 + $0xc0] sm:$0xff]
        %v2283 = vld [vmem:[%s2257 + $0xc8] sm:$0xff]
        %v2284 = vld [vmem:[%s2257 + $0xd0] sm:$0xff]
        %v2285 = vrot.slane %v1360, 2
        %v2286 = vrot.slane %v1361, 2
        %v2315 = vunpack.c.l.b16 %v2258
        %v2316 = vunpack.c.h.b16 %v2258
        %v2317 = vunpack.c.l.b16 %v2259
        %v2318 = vunpack.c.h.b16 %v2259
        %v2319 = vunpack.c.l.b16 %v2260
        %v2320 = vunpack.c.h.b16 %v2260
        %v2321 = vunpack.c.l.b16 %v2261
        %v2322 = vunpack.c.h.b16 %v2261
        %v2323 = vunpack.c.l.b16 %v2262
        %v2324 = vunpack.c.h.b16 %v2262
        %v2325 = vunpack.c.l.b16 %v2263
        %v2326 = vunpack.c.h.b16 %v2263
        %v2327 = vunpack.c.l.b16 %v2264
        %v2328 = vunpack.c.h.b16 %v2264
        %v2329 = vunpack.c.l.b16 %v2265
        %v2330 = vunpack.c.h.b16 %v2265
        %v2331 = vunpack.c.l.b16 %v2266
        %v2332 = vunpack.c.h.b16 %v2266
        %v2333 = vunpack.c.l.b16 %v2267
        %v2334 = vunpack.c.h.b16 %v2267
        %v2335 = vunpack.c.l.b16 %v2268
        %v2336 = vunpack.c.h.b16 %v2268
        %v2337 = vunpack.c.l.b16 %v2269
        %v2338 = vunpack.c.h.b16 %v2269
        %v2339 = vunpack.c.l.b16 %v2270
        %v2340 = vunpack.c.h.b16 %v2270
        %v2341 = vunpack.c.l.b16 %v2271
        %v2342 = vunpack.c.h.b16 %v2271
        %v2343 = vunpack.c.l.b16 %v2272
        %v2344 = vunpack.c.h.b16 %v2272
        %v2345 = vunpack.c.l.b16 %v2273
        %v2346 = vunpack.c.h.b16 %v2273
        %v2347 = vunpack.c.l.b16 %v2274
        %v2348 = vunpack.c.h.b16 %v2274
        %v2349 = vunpack.c.l.b16 %v2275
        %v2350 = vunpack.c.h.b16 %v2275
        %v2351 = vunpack.c.l.b16 %v2276
        %v2352 = vunpack.c.h.b16 %v2276
        %v2353 = vunpack.c.l.b16 %v2277
        %v2354 = vunpack.c.h.b16 %v2277
        %v2355 = vunpack.c.l.b16 %v2278
        %v2356 = vunpack.c.h.b16 %v2278
        %v2357 = vunpack.c.l.b16 %v2279
        %v2358 = vunpack.c.h.b16 %v2279
        %v2359 = vunpack.c.l.b16 %v2280
        %v2360 = vunpack.c.h.b16 %v2280
        %v2361 = vunpack.c.l.b16 %v2281
        %v2362 = vunpack.c.h.b16 %v2281
        %v2363 = vunpack.c.l.b16 %v2282
        %v2364 = vunpack.c.h.b16 %v2282
        %v2365 = vunpack.c.l.b16 %v2283
        %v2366 = vunpack.c.h.b16 %v2283
        %v2367 = vunpack.c.l.b16 %v2284
        %v2368 = vunpack.c.h.b16 %v2284
        %v2369 = vpack.c.b16 %v2317, %v2315
        %v2370 = vpack.c.b16 %v2318, %v2316
        %v2371 = vpack.c.b16 %v2321, %v2319
        %v2372 = vpack.c.b16 %v2322, %v2320
        %v2373 = vpack.c.b16 %v2325, %v2323
        %v2374 = vpack.c.b16 %v2326, %v2324
        %v2375 = vpack.c.b16 %v2329, %v2327
        %v2376 = vpack.c.b16 %v2330, %v2328
        %v2377 = vpack.c.b16 %v2333, %v2331
        %v2378 = vpack.c.b16 %v2334, %v2332
        %v2379 = vpack.c.b16 %v2337, %v2335
        %v2380 = vpack.c.b16 %v2338, %v2336
        %v2381 = vpack.c.b16 %v2341, %v2339
        %v2382 = vpack.c.b16 %v2342, %v2340
        %v2383 = vpack.c.b16 %v2345, %v2343
        %v2384 = vpack.c.b16 %v2346, %v2344
        %v2385 = vpack.c.b16 %v2349, %v2347
        %v2386 = vpack.c.b16 %v2350, %v2348
        %v2387 = vpack.c.b16 %v2353, %v2351
        %v2388 = vpack.c.b16 %v2354, %v2352
        %v2389 = vpack.c.b16 %v2357, %v2355
        %v2390 = vpack.c.b16 %v2358, %v2356
        %v2391 = vpack.c.b16 %v2361, %v2359
        %v2392 = vpack.c.b16 %v2362, %v2360
        %v2393 = vpack.c.b16 %v2365, %v2363
        %v2394 = vpack.c.b16 %v2366, %v2364
        %v2395 = vpack.c.b16 %v2367, %v2367
        %v2396 = vpack.c.b16 %v2368, %v2368
        %v2424 = vsel %vm1567, %v2286, 0
        %v2427 = vsel %vm1571, %v2395, 0
        %v2430 = vsel %vm1571, %v2396, 0
        %2432 = vmatprep.subr.bf16.mxu0 %v2370
        %2433 = vmatpush1.bf16.msra.mxu0 %v2369
        %2434 = vmatprep.subr.bf16.mxu0 %v2372
        %2435 = vmatpush1.bf16.msra.mxu0 %v2371
        %2436 = vmatprep.subr.bf16.mxu0 %v2374
        %2437 = vmatpush1.bf16.msra.mxu0 %v2373
        %2438 = vmatprep.subr.bf16.mxu0 %v2376
        %2439 = vmatpush1.bf16.msra.mxu0 %v2375
        %2440 = vmatprep.subr.bf16.mxu0 %v2378
        %2441 = vmatpush1.bf16.msra.mxu0 %v2377
        %2442 = vmatprep.subr.bf16.mxu0 %v2380
        %2443 = vmatpush1.bf16.msra.mxu0 %v2379
        %2444 = vmatprep.subr.bf16.mxu0 %v2382
        %2445 = vmatpush1.bf16.msra.mxu0 %v2381
        %2446 = vmatprep.subr.bf16.mxu0 %v2384
        %2447 = vmatpush1.bf16.msra.mxu0 %v2383
        %2448 = vmatprep.subr.bf16.mxu0 %v2386
        %2449 = vmatpush1.bf16.msra.mxu0 %v2385
        %2450 = vmatprep.subr.bf16.mxu0 %v2388
        %2451 = vmatpush1.bf16.msra.mxu0 %v2387
        %2452 = vmatprep.subr.bf16.mxu0 %v2390
        %2453 = vmatpush1.bf16.msra.mxu0 %v2389
        %2454 = vmatprep.subr.bf16.mxu0 %v2392
        %2455 = vmatpush1.bf16.msra.mxu0 %v2391
        %2456 = vmatprep.subr.bf16.mxu0 %v2394
        %2457 = vmatpush1.bf16.msra.mxu0 %v2393
        %2458 = vmatprep.subr.bf16.mxu0 %v2430
        %2459 = vmatpush1.bf16.msra.mxu0 %v2427
        %2460 = vmatprep.subr.bf16.mxu0 0
        %2461 = vmatpush1.bf16.msra.mxu0 0
        %2462 = vmatprep.subr.bf16.mxu0 0
        %2463 = vmatpush1.bf16.msra.mxu0 0
        %2464 = vmatprep.mubr.bf16.mxu0 %v2424
        %2465 = vmatmul.mubr.bf16.gmra.mrb[0].mxu0 %v2285
        %v2466 = vpop.f32.mrb[0].mxu0
        %v2467 = vadd.f32 0.0, %v2466
        %v2468 = vpop.f32.mrb[0].mxu0
        %v2469 = vadd.f32 0.0, %v2468
        %v2470 = vpop.f32.mrb[0].mxu0
        %v2471 = vadd.f32 0.0, %v2470
        %v2472 = vpop.f32.mrb[0].mxu0
        %v2473 = vadd.f32 0.0, %v2472
        %2474 = vdwg.mxu0
        %v2475 = vadd.f32 %v2253, %v2467
        %v2476 = vadd.f32 %v2254, %v2469
        %v2477 = vadd.f32 %v2255, %v2471
        %v2478 = vadd.f32 %v2256, %v2473
        %v2479 = vld [vmem:[%s4] sm:$0x3]
        %v2481 = vlaneseq
        %v2482 = vshrl.u32 %v2481, 7
        %v2483 = vsub.s32 0, %v2482
        %v2484 = vrot.slane %v2479, %v2483
        %v2485 = vlaneseq
        %v2486 = vshrl.u32 %v2485, 7
        %v2487 = vsub.s32 1, %v2486
        %v2488 = vrot.slane %v2479, %v2487
        %v2491 = vadd.f32 %v2475, %v2484
        %v2492 = vadd.f32 %v2476, %v2488
        %v2493 = vadd.f32 %v2477, %v2484
        %v2494 = vadd.f32 %v2478, %v2488
        %vm2495 = vcmp.ge.f32.partialorder %v2491, 0.0
        %vm2496 = vcmp.ge.f32.partialorder %v2492, 0.0
        %vm2497 = vcmp.ge.f32.partialorder %v2493, 0.0
        %vm2498 = vcmp.ge.f32.partialorder %v2494, 0.0
        %v2499 = vmul.f32 %v2491, 0.01
        %v2500 = vmul.f32 %v2492, 0.01
        %v2501 = vmul.f32 %v2493, 0.01
        %v2502 = vmul.f32 %v2494, 0.01
        %v2503 = vsel %vm2495, %v2491, %v2499
        %v2504 = vsel %vm2496, %v2492, %v2500
        %v2505 = vsel %vm2497, %v2493, %v2501
        %v2506 = vsel %vm2498, %v2494, %v2502
        %v2511 = vrot.slane %v2503, 1
        %v2512 = vrot.slane %v2505, 1
        %v2513 = vsel %vm1213, %v2511, %v2512
        %v2514 = vrot.slane %v2504, 1
        %v2515 = vrot.slane %v2506, 1
        %v2516 = vsel %vm1213, %v2514, %v2515
        %v2521 = vmax.f32 %v2503, %v2513
        %v2522 = vmax.f32 %v2504, %v2516
        %v2523 = vmax.f32 %v2505, %v2512
        %v2524 = vmax.f32 %v2506, %v2515
        %v2525 = vld [vmem:[%s6] sm:$0x1f]
        %vm2526 = vcmask 72704
        %v2528 = vsel %vm2526, %v2525, 0
        %vm2530 = vcmask 1040384
        %v2532 = vsel %vm2530, %v2523, 0
        %v2535 = vsel %vm2530, %v2524, 0
        %2537 = vmatprep.subr.mxu0 %v2522
        %2538 = vmatpush1.msra.mxu0 %v2521
        %2539 = vmatprep.subr.mxu0 %v2535
        %2540 = vmatpush1.msra.mxu0 %v2532
        %2541 = vmatprep.subr.mxu0 0.0
        %2542 = vmatpush1.msra.mxu0 0.0
        %2543 = vmatprep.subr.mxu0 0.0
        %2544 = vmatpush1.msra.mxu0 0.0
        %2545 = vmatprep.subr.mxu0 0.0
        %2546 = vmatpush1.msra.mxu0 0.0
        %2547 = vmatprep.subr.mxu0 0.0
        %2548 = vmatpush1.msra.mxu0 0.0
        %2549 = vmatprep.subr.mxu0 0.0
        %2550 = vmatpush1.msra.mxu0 0.0
        %2551 = vmatprep.subr.mxu0 0.0
        %2552 = vmatpush1.msra.mxu0 0.0
        %2553 = vmatprep.subr.mxu0 0.0
        %2554 = vmatpush1.msra.mxu0 0.0
        %2555 = vmatprep.subr.mxu0 0.0
        %2556 = vmatpush1.msra.mxu0 0.0
        %2557 = vmatprep.subr.mxu0 0.0
        %2558 = vmatpush1.msra.mxu0 0.0
        %2559 = vmatprep.subr.mxu0 0.0
        %2560 = vmatpush1.msra.mxu0 0.0
        %2561 = vmatprep.subr.mxu0 0.0
        %2562 = vmatpush1.msra.mxu0 0.0
        %2563 = vmatprep.subr.mxu0 0.0
        %2564 = vmatpush1.msra.mxu0 0.0
        %2565 = vmatprep.subr.mxu0 0.0
        %2566 = vmatpush1.msra.mxu0 0.0
        %2567 = vmatprep.subr.mxu0 0.0
        %2568 = vmatpush1.msra.mxu0 0.0
        %2569 = vmatprep.subr.mxu0 0.0
        %2570 = vmatpush1.msra.mxu0 0.0
        %2571 = vmatprep.subr.mxu0 0.0
        %2572 = vmatpush1.msra.mxu0 0.0
        %2573 = vmatprep.subr.mxu0 0.0
        %2574 = vmatpush1.msra.mxu0 0.0
        %2575 = vmatprep.subr.mxu0 0.0
        %2576 = vmatpush1.msra.mxu0 0.0
        %2577 = vmatprep.subr.mxu0 0.0
        %2578 = vmatpush1.msra.mxu0 0.0
        %2579 = vmatprep.subr.mxu0 0.0
        %2580 = vmatpush1.msra.mxu0 0.0
        %2581 = vmatprep.subr.mxu0 0.0
        %2582 = vmatpush1.msra.mxu0 0.0
        %2583 = vmatprep.subr.mxu0 0.0
        %2584 = vmatpush1.msra.mxu0 0.0
        %2585 = vmatprep.subr.mxu0 0.0
        %2586 = vmatpush1.msra.mxu0 0.0
        %2587 = vmatprep.subr.mxu0 0.0
        %2588 = vmatpush1.msra.mxu0 0.0
        %2589 = vmatprep.subr.mxu0 0.0
        %2590 = vmatpush1.msra.mxu0 0.0
        %2591 = vmatprep.subr.mxu0 0.0
        %2592 = vmatpush1.msra.mxu0 0.0
        %2593 = vmatprep.subr.mxu0 0.0
        %2594 = vmatpush1.msra.mxu0 0.0
        %2595 = vmatprep.subr.mxu0 0.0
        %2596 = vmatpush1.msra.mxu0 0.0
        %2597 = vmatprep.subr.mxu0 0.0
        %2598 = vmatpush1.msra.mxu0 0.0
        %2599 = vmatprep.subr.mxu0 0.0
        %2600 = vmatpush1.msra.mxu0 0.0
        %2601 = vmatprep.mubr.f32.mxu0 0.0
        %2602 = vmatmul.mubr.f32.gmra.mrb[0].mxu0 %v2528
        %v2603 = vpop.f32.mrb[0].mxu0
        %v2604 = vadd.f32 0.0, %v2603
        %v2605 = vpop.f32.mrb[0].mxu0
        %v2606 = vadd.f32 0.0, %v2605
        %2607 = vdwg.mxu0
        %2610 = vrot.lane.b32.xlu0 %v2604, 112
        %v2611 = vpop.permute.xlu0 %2610
        %2612 = vrot.lane.b32.xlu0 %v2606, 112
        %v2613 = vpop.permute.xlu0 %2612
        %vm2614 = vcmask 916480
        %v2615 = vsel %vm2614, %v2611, %v2613
        %v2618 = vmax.f32 %v2604, %v2615
        %v2619 = vmax.f32 %v2606, %v2613
        %v2620 = vpack.c.bf16 %v2618, %v2618
        %v2621 = vpack.c.bf16 %v2619, %v2619
        %v2622 = vld [vmem:[%s7] sm:$0xf]
        %v2623 = vld [vmem:[%s7 + $0x4] sm:$0xf]
        %v2624 = vld [vmem:[%s7 + $0x8] sm:$0xf]
        %v2625 = vld [vmem:[%s7 + $0xc] sm:$0xf]
        %v2626 = vld [vmem:[%s7 + $0x10] sm:$0xf]
        %v2627 = vld [vmem:[%s7 + $0x14] sm:$0xf]
        %v2628 = vld [vmem:[%s7 + $0x18] sm:$0xf]
        %v2629 = vld [vmem:[%s7 + $0x1c] sm:$0xf]
        %v2630 = vld [vmem:[%s7 + $0x20] sm:$0xf]
        %v2631 = vld [vmem:[%s7 + $0x24] sm:$0xf]
        %v2632 = vld [vmem:[%s7 + $0x28] sm:$0xf]
        %v2633 = vld [vmem:[%s7 + $0x2c] sm:$0xf]
        %v2634 = vld [vmem:[%s7 + $0x30] sm:$0xf]
        %v2635 = vld [vmem:[%s7 + $0x34] sm:$0xf]
        %v2636 = vld [vmem:[%s7 + $0x38] sm:$0xf]
        %v2637 = vld [vmem:[%s7 + $0x3c] sm:$0xf]
        %v2638 = vld [vmem:[%s7 + $0x40] sm:$0xf]
        %v2639 = vld [vmem:[%s7 + $0x44] sm:$0xf]
        %s2640 = scalar_lea.vmem %s7, 72
        %v2641 = vld [vmem:[%s2640] sm:$0xf]
        %v2642 = vld [vmem:[%s2640 + $0x4] sm:$0xf]
        %v2643 = vld [vmem:[%s2640 + $0x8] sm:$0xf]
        %v2644 = vld [vmem:[%s2640 + $0xc] sm:$0xf]
        %v2645 = vld [vmem:[%s2640 + $0x10] sm:$0xf]
        %v2646 = vld [vmem:[%s2640 + $0x14] sm:$0xf]
        %v2647 = vld [vmem:[%s2640 + $0x18] sm:$0xf]
        %v2648 = vld [vmem:[%s2640 + $0x1c] sm:$0xf]
        %v2649 = vld [vmem:[%s2640 + $0x20] sm:$0xf]
        %v2650 = vld [vmem:[%s2640 + $0x24] sm:$0xf]
        %v2651 = vld [vmem:[%s2640 + $0x28] sm:$0xf]
        %v2652 = vld [vmem:[%s2640 + $0x2c] sm:$0xf]
        %v2653 = vld [vmem:[%s2640 + $0x30] sm:$0xf]
        %v2654 = vld [vmem:[%s2640 + $0x34] sm:$0xf]
        %v2655 = vld [vmem:[%s2640 + $0x38] sm:$0xf]
        %v2656 = vld [vmem:[%s2640 + $0x3c] sm:$0xf]
        %v2657 = vld [vmem:[%s2640 + $0x40] sm:$0xf]
        %v2658 = vld [vmem:[%s2640 + $0x44] sm:$0xf]
        %v2660 = vshrl.u32 %v2620, 16
        %v2663 = vshrl.u32 %v2621, 16
        %v2684 = vunpack.c.l.b16 %v2641
        %v2685 = vunpack.c.l.b16 %v2642
        %v2686 = vunpack.c.l.b16 %v2643
        %v2687 = vunpack.c.l.b16 %v2644
        %v2688 = vunpack.c.l.b16 %v2645
        %v2689 = vunpack.c.l.b16 %v2646
        %v2690 = vunpack.c.l.b16 %v2647
        %v2691 = vunpack.c.l.b16 %v2648
        %v2692 = vunpack.c.l.b16 %v2649
        %v2693 = vunpack.c.l.b16 %v2650
        %v2694 = vunpack.c.l.b16 %v2651
        %v2695 = vunpack.c.l.b16 %v2652
        %v2696 = vunpack.c.l.b16 %v2653
        %v2697 = vunpack.c.l.b16 %v2654
        %v2698 = vunpack.c.l.b16 %v2655
        %v2699 = vunpack.c.l.b16 %v2656
        %v2700 = vunpack.c.l.b16 %v2657
        %v2701 = vunpack.c.l.b16 %v2658
        %v2702 = vpack.c.b16 %v2685, %v2684
        %v2703 = vpack.c.b16 %v2687, %v2686
        %v2704 = vpack.c.b16 %v2689, %v2688
        %v2705 = vpack.c.b16 %v2691, %v2690
        %v2706 = vpack.c.b16 %v2693, %v2692
        %v2707 = vpack.c.b16 %v2695, %v2694
        %v2708 = vpack.c.b16 %v2697, %v2696
        %v2709 = vpack.c.b16 %v2699, %v2698
        %v2710 = vpack.c.b16 %v2701, %v2700
        %vm2720 = vcmask 130048
        %v2722 = vsel %vm2720, %v2663, 0
        %2724 = vmatprep.subr.bf16.mxu0 0
        %2725 = vmatpush1.bf16.msra.mxu0 %v2702
        %2726 = vmatprep.subr.bf16.mxu0 0
        %2727 = vmatpush1.bf16.msra.mxu0 %v2703
        %2728 = vmatprep.subr.bf16.mxu0 0
        %2729 = vmatpush1.bf16.msra.mxu0 %v2704
        %2730 = vmatprep.subr.bf16.mxu0 0
        %2731 = vmatpush1.bf16.msra.mxu0 %v2705
        %2732 = vmatprep.subr.bf16.mxu0 0
        %2733 = vmatpush1.bf16.msra.mxu0 %v2706
        %2734 = vmatprep.subr.bf16.mxu0 0
        %2735 = vmatpush1.bf16.msra.mxu0 %v2707
        %2736 = vmatprep.subr.bf16.mxu0 0
        %2737 = vmatpush1.bf16.msra.mxu0 %v2708
        %2738 = vmatprep.subr.bf16.mxu0 0
        %2739 = vmatpush1.bf16.msra.mxu0 %v2709
        %2740 = vmatprep.subr.bf16.mxu0 0
        %2741 = vmatpush1.bf16.msra.mxu0 %v2710
        %2742 = vmatprep.subr.bf16.mxu0 0
        %2743 = vmatpush1.bf16.msra.mxu0 0
        %2744 = vmatprep.subr.bf16.mxu0 0
        %2745 = vmatpush1.bf16.msra.mxu0 0
        %2746 = vmatprep.subr.bf16.mxu0 0
        %2747 = vmatpush1.bf16.msra.mxu0 0
        %2748 = vmatprep.subr.bf16.mxu0 0
        %2749 = vmatpush1.bf16.msra.mxu0 0
        %2750 = vmatprep.subr.bf16.mxu0 0
        %2751 = vmatpush1.bf16.msra.mxu0 0
        %2752 = vmatprep.subr.bf16.mxu0 0
        %2753 = vmatpush1.bf16.msra.mxu0 0
        %2754 = vmatprep.subr.bf16.mxu0 0
        %2755 = vmatpush1.bf16.msra.mxu0 0
        %2756 = vmatprep.mubr.bf16.mxu0 %v2722
        %2757 = vmatmul.mubr.bf16.gmra.mrb[0].mxu0 %v2660
        %v2758 = vpop.f32.mrb[0].mxu0
        %v2759 = vadd.f32 0.0, %v2758
        %v2760 = vpop.f32.mrb[0].mxu0
        %v2761 = vpop.f32.mrb[0].mxu0
        %v2762 = vpop.f32.mrb[0].mxu0
        %2763 = vdwg.mxu0
        %v2782 = vunpack.c.l.b16 %v2622
        %v2783 = vunpack.c.l.b16 %v2623
        %v2784 = vunpack.c.l.b16 %v2624
        %v2785 = vunpack.c.l.b16 %v2625
        %v2786 = vunpack.c.l.b16 %v2626
        %v2787 = vunpack.c.l.b16 %v2627
        %v2788 = vunpack.c.l.b16 %v2628
        %v2789 = vunpack.c.l.b16 %v2629
        %v2790 = vunpack.c.l.b16 %v2630
        %v2791 = vunpack.c.l.b16 %v2631
        %v2792 = vunpack.c.l.b16 %v2632
        %v2793 = vunpack.c.l.b16 %v2633
        %v2794 = vunpack.c.l.b16 %v2634
        %v2795 = vunpack.c.l.b16 %v2635
        %v2796 = vunpack.c.l.b16 %v2636
        %v2797 = vunpack.c.l.b16 %v2637
        %v2798 = vunpack.c.l.b16 %v2638
        %v2799 = vunpack.c.l.b16 %v2639
        %v2800 = vpack.c.b16 %v2783, %v2782
        %v2801 = vpack.c.b16 %v2785, %v2784
        %v2802 = vpack.c.b16 %v2787, %v2786
        %v2803 = vpack.c.b16 %v2789, %v2788
        %v2804 = vpack.c.b16 %v2791, %v2790
        %v2805 = vpack.c.b16 %v2793, %v2792
        %v2806 = vpack.c.b16 %v2795, %v2794
        %v2807 = vpack.c.b16 %v2797, %v2796
        %v2808 = vpack.c.b16 %v2799, %v2798
        %v2818 = vsel %vm2720, %v2621, 0
        %2820 = vmatprep.subr.bf16.mxu0 0
        %2821 = vmatpush1.bf16.msra.mxu0 %v2800
        %2822 = vmatprep.subr.bf16.mxu0 0
        %2823 = vmatpush1.bf16.msra.mxu0 %v2801
        %2824 = vmatprep.subr.bf16.mxu0 0
        %2825 = vmatpush1.bf16.msra.mxu0 %v2802
        %2826 = vmatprep.subr.bf16.mxu0 0
        %2827 = vmatpush1.bf16.msra.mxu0 %v2803
        %2828 = vmatprep.subr.bf16.mxu0 0
        %2829 = vmatpush1.bf16.msra.mxu0 %v2804
        %2830 = vmatprep.subr.bf16.mxu0 0
        %2831 = vmatpush1.bf16.msra.mxu0 %v2805
        %2832 = vmatprep.subr.bf16.mxu0 0
        %2833 = vmatpush1.bf16.msra.mxu0 %v2806
        %2834 = vmatprep.subr.bf16.mxu0 0
        %2835 = vmatpush1.bf16.msra.mxu0 %v2807
        %2836 = vmatprep.subr.bf16.mxu0 0
        %2837 = vmatpush1.bf16.msra.mxu0 %v2808
        %2838 = vmatprep.subr.bf16.mxu0 0
        %2839 = vmatpush1.bf16.msra.mxu0 0
        %2840 = vmatprep.subr.bf16.mxu0 0
        %2841 = vmatpush1.bf16.msra.mxu0 0
        %2842 = vmatprep.subr.bf16.mxu0 0
        %2843 = vmatpush1.bf16.msra.mxu0 0
        %2844 = vmatprep.subr.bf16.mxu0 0
        %2845 = vmatpush1.bf16.msra.mxu0 0
        %2846 = vmatprep.subr.bf16.mxu0 0
        %2847 = vmatpush1.bf16.msra.mxu0 0
        %2848 = vmatprep.subr.bf16.mxu0 0
        %2849 = vmatpush1.bf16.msra.mxu0 0
        %2850 = vmatprep.subr.bf16.mxu0 0
        %2851 = vmatpush1.bf16.msra.mxu0 0
        %2852 = vmatprep.mubr.bf16.mxu0 %v2818
        %2853 = vmatmul.mubr.bf16.gmra.mrb[0].mxu0 %v2620
        %v2854 = vpop.f32.mrb[0].mxu0
        %v2855 = vadd.f32 %v2759, %v2854
        %v2856 = vpop.f32.mrb[0].mxu0
        %v2857 = vpop.f32.mrb[0].mxu0
        %v2858 = vpop.f32.mrb[0].mxu0
        %2859 = vdwg.mxu0
        %s2860 = scalar_lea.vmem %s7, 144
        %v2861 = vld [vmem:[%s2860] sm:$0xf]
        %v2862 = vld [vmem:[%s2860 + $0x4] sm:$0xf]
        %v2863 = vld [vmem:[%s2860 + $0x8] sm:$0xf]
        %v2864 = vld [vmem:[%s2860 + $0xc] sm:$0xf]
        %v2865 = vld [vmem:[%s2860 + $0x10] sm:$0xf]
        %v2866 = vld [vmem:[%s2860 + $0x14] sm:$0xf]
        %v2867 = vld [vmem:[%s2860 + $0x18] sm:$0xf]
        %v2868 = vld [vmem:[%s2860 + $0x1c] sm:$0xf]
        %v2869 = vld [vmem:[%s2860 + $0x20] sm:$0xf]
        %v2870 = vld [vmem:[%s2860 + $0x24] sm:$0xf]
        %v2871 = vld [vmem:[%s2860 + $0x28] sm:$0xf]
        %v2872 = vld [vmem:[%s2860 + $0x2c] sm:$0xf]
        %v2873 = vld [vmem:[%s2860 + $0x30] sm:$0xf]
        %v2874 = vld [vmem:[%s2860 + $0x34] sm:$0xf]
        %v2875 = vld [vmem:[%s2860 + $0x38] sm:$0xf]
        %v2876 = vld [vmem:[%s2860 + $0x3c] sm:$0xf]
        %v2877 = vld [vmem:[%s2860 + $0x40] sm:$0xf]
        %v2878 = vld [vmem:[%s2860 + $0x44] sm:$0xf]
        %v2881 = vrot.slane %v2620, 1
        %v2882 = vrot.slane %v2621, 1
        %v2902 = vunpack.c.l.b16 %v2861
        %v2903 = vunpack.c.l.b16 %v2862
        %v2904 = vunpack.c.l.b16 %v2863
        %v2905 = vunpack.c.l.b16 %v2864
        %v2906 = vunpack.c.l.b16 %v2865
        %v2907 = vunpack.c.l.b16 %v2866
        %v2908 = vunpack.c.l.b16 %v2867
        %v2909 = vunpack.c.l.b16 %v2868
        %v2910 = vunpack.c.l.b16 %v2869
        %v2911 = vunpack.c.l.b16 %v2870
        %v2912 = vunpack.c.l.b16 %v2871
        %v2913 = vunpack.c.l.b16 %v2872
        %v2914 = vunpack.c.l.b16 %v2873
        %v2915 = vunpack.c.l.b16 %v2874
        %v2916 = vunpack.c.l.b16 %v2875
        %v2917 = vunpack.c.l.b16 %v2876
        %v2918 = vunpack.c.l.b16 %v2877
        %v2919 = vunpack.c.l.b16 %v2878
        %v2920 = vpack.c.b16 %v2903, %v2902
        %v2921 = vpack.c.b16 %v2905, %v2904
        %v2922 = vpack.c.b16 %v2907, %v2906
        %v2923 = vpack.c.b16 %v2909, %v2908
        %v2924 = vpack.c.b16 %v2911, %v2910
        %v2925 = vpack.c.b16 %v2913, %v2912
        %v2926 = vpack.c.b16 %v2915, %v2914
        %v2927 = vpack.c.b16 %v2917, %v2916
        %v2928 = vpack.c.b16 %v2919, %v2918
        %v2939 = vsel %vm2720, %v2882, 0
        %2941 = vmatprep.subr.bf16.mxu0 0
        %2942 = vmatpush1.bf16.msra.mxu0 %v2920
        %2943 = vmatprep.subr.bf16.mxu0 0
        %2944 = vmatpush1.bf16.msra.mxu0 %v2921
        %2945 = vmatprep.subr.bf16.mxu0 0
        %2946 = vmatpush1.bf16.msra.mxu0 %v2922
        %2947 = vmatprep.subr.bf16.mxu0 0
        %2948 = vmatpush1.bf16.msra.mxu0 %v2923
        %2949 = vmatprep.subr.bf16.mxu0 0
        %2950 = vmatpush1.bf16.msra.mxu0 %v2924
        %2951 = vmatprep.subr.bf16.mxu0 0
        %2952 = vmatpush1.bf16.msra.mxu0 %v2925
        %2953 = vmatprep.subr.bf16.mxu0 0
        %2954 = vmatpush1.bf16.msra.mxu0 %v2926
        %2955 = vmatprep.subr.bf16.mxu0 0
        %2956 = vmatpush1.bf16.msra.mxu0 %v2927
        %2957 = vmatprep.subr.bf16.mxu0 0
        %2958 = vmatpush1.bf16.msra.mxu0 %v2928
        %2959 = vmatprep.subr.bf16.mxu0 0
        %2960 = vmatpush1.bf16.msra.mxu0 0
        %2961 = vmatprep.subr.bf16.mxu0 0
        %2962 = vmatpush1.bf16.msra.mxu0 0
        %2963 = vmatprep.subr.bf16.mxu0 0
        %2964 = vmatpush1.bf16.msra.mxu0 0
        %2965 = vmatprep.subr.bf16.mxu0 0
        %2966 = vmatpush1.bf16.msra.mxu0 0
        %2967 = vmatprep.subr.bf16.mxu0 0
        %2968 = vmatpush1.bf16.msra.mxu0 0
        %2969 = vmatprep.subr.bf16.mxu0 0
        %2970 = vmatpush1.bf16.msra.mxu0 0
        %2971 = vmatprep.subr.bf16.mxu0 0
        %2972 = vmatpush1.bf16.msra.mxu0 0
        %2973 = vmatprep.mubr.bf16.mxu0 %v2939
        %2974 = vmatmul.mubr.bf16.gmra.mrb[0].mxu0 %v2881
        %v2975 = vpop.f32.mrb[0].mxu0
        %v2976 = vadd.f32 0.0, %v2975
        %v2977 = vpop.f32.mrb[0].mxu0
        %v2978 = vpop.f32.mrb[0].mxu0
        %v2979 = vpop.f32.mrb[0].mxu0
        %2980 = vdwg.mxu0
        %v2981 = vadd.f32 %v2855, %v2976
        %s2982 = scalar_lea.vmem %s7, 216
        %v2983 = vld [vmem:[%s2982] sm:$0xf]
        %v2984 = vld [vmem:[%s2982 + $0x4] sm:$0xf]
        %v2985 = vld [vmem:[%s2982 + $0x8] sm:$0xf]
        %v2986 = vld [vmem:[%s2982 + $0xc] sm:$0xf]
        %v2987 = vld [vmem:[%s2982 + $0x10] sm:$0xf]
        %v2988 = vld [vmem:[%s2982 + $0x14] sm:$0xf]
        %v2989 = vld [vmem:[%s2982 + $0x18] sm:$0xf]
        %v2990 = vld [vmem:[%s2982 + $0x1c] sm:$0xf]
        %v2991 = vld [vmem:[%s2982 + $0x20] sm:$0xf]
        %v2992 = vld [vmem:[%s2982 + $0x24] sm:$0xf]
        %v2993 = vld [vmem:[%s2982 + $0x28] sm:$0xf]
        %v2994 = vld [vmem:[%s2982 + $0x2c] sm:$0xf]
        %v2995 = vld [vmem:[%s2982 + $0x30] sm:$0xf]
        %v2996 = vld [vmem:[%s2982 + $0x34] sm:$0xf]
        %v2997 = vld [vmem:[%s2982 + $0x38] sm:$0xf]
        %v2998 = vld [vmem:[%s2982 + $0x3c] sm:$0xf]
        %v2999 = vld [vmem:[%s2982 + $0x40] sm:$0xf]
        %v3000 = vld [vmem:[%s2982 + $0x44] sm:$0xf]
        %v3001 = vrot.slane %v2660, 1
        %v3002 = vrot.slane %v2663, 1
        %v3022 = vunpack.c.l.b16 %v2983
        %v3023 = vunpack.c.l.b16 %v2984
        %v3024 = vunpack.c.l.b16 %v2985
        %v3025 = vunpack.c.l.b16 %v2986
        %v3026 = vunpack.c.l.b16 %v2987
        %v3027 = vunpack.c.l.b16 %v2988
        %v3028 = vunpack.c.l.b16 %v2989
        %v3029 = vunpack.c.l.b16 %v2990
        %v3030 = vunpack.c.l.b16 %v2991
        %v3031 = vunpack.c.l.b16 %v2992
        %v3032 = vunpack.c.l.b16 %v2993
        %v3033 = vunpack.c.l.b16 %v2994
        %v3034 = vunpack.c.l.b16 %v2995
        %v3035 = vunpack.c.l.b16 %v2996
        %v3036 = vunpack.c.l.b16 %v2997
        %v3037 = vunpack.c.l.b16 %v2998
        %v3038 = vunpack.c.l.b16 %v2999
        %v3039 = vunpack.c.l.b16 %v3000
        %v3040 = vpack.c.b16 %v3023, %v3022
        %v3041 = vpack.c.b16 %v3025, %v3024
        %v3042 = vpack.c.b16 %v3027, %v3026
        %v3043 = vpack.c.b16 %v3029, %v3028
        %v3044 = vpack.c.b16 %v3031, %v3030
        %v3045 = vpack.c.b16 %v3033, %v3032
        %v3046 = vpack.c.b16 %v3035, %v3034
        %v3047 = vpack.c.b16 %v3037, %v3036
        %v3048 = vpack.c.b16 %v3039, %v3038
        %v3059 = vsel %vm2720, %v3002, 0
        %3061 = vmatprep.subr.bf16.mxu0 0
        %3062 = vmatpush1.bf16.msra.mxu0 %v3040
        %3063 = vmatprep.subr.bf16.mxu0 0
        %3064 = vmatpush1.bf16.msra.mxu0 %v3041
        %3065 = vmatprep.subr.bf16.mxu0 0
        %3066 = vmatpush1.bf16.msra.mxu0 %v3042
        %3067 = vmatprep.subr.bf16.mxu0 0
        %3068 = vmatpush1.bf16.msra.mxu0 %v3043
        %3069 = vmatprep.subr.bf16.mxu0 0
        %3070 = vmatpush1.bf16.msra.mxu0 %v3044
        %3071 = vmatprep.subr.bf16.mxu0 0
        %3072 = vmatpush1.bf16.msra.mxu0 %v3045
        %3073 = vmatprep.subr.bf16.mxu0 0
        %3074 = vmatpush1.bf16.msra.mxu0 %v3046
        %3075 = vmatprep.subr.bf16.mxu0 0
        %3076 = vmatpush1.bf16.msra.mxu0 %v3047
        %3077 = vmatprep.subr.bf16.mxu0 0
        %3078 = vmatpush1.bf16.msra.mxu0 %v3048
        %3079 = vmatprep.subr.bf16.mxu0 0
        %3080 = vmatpush1.bf16.msra.mxu0 0
        %3081 = vmatprep.subr.bf16.mxu0 0
        %3082 = vmatpush1.bf16.msra.mxu0 0
        %3083 = vmatprep.subr.bf16.mxu0 0
        %3084 = vmatpush1.bf16.msra.mxu0 0
        %3085 = vmatprep.subr.bf16.mxu0 0
        %3086 = vmatpush1.bf16.msra.mxu0 0
        %3087 = vmatprep.subr.bf16.mxu0 0
        %3088 = vmatpush1.bf16.msra.mxu0 0
        %3089 = vmatprep.subr.bf16.mxu0 0
        %3090 = vmatpush1.bf16.msra.mxu0 0
        %3091 = vmatprep.subr.bf16.mxu0 0
        %3092 = vmatpush1.bf16.msra.mxu0 0
        %3093 = vmatprep.mubr.bf16.mxu0 %v3059
        %3094 = vmatmul.mubr.bf16.gmra.mrb[0].mxu0 %v3001
        %v3095 = vpop.f32.mrb[0].mxu0
        %v3096 = vadd.f32 0.0, %v3095
        %v3097 = vpop.f32.mrb[0].mxu0
        %v3098 = vpop.f32.mrb[0].mxu0
        %v3099 = vpop.f32.mrb[0].mxu0
        %3100 = vdwg.mxu0
        %v3101 = vadd.f32 %v2981, %v3096
        %s3102 = scalar_lea.vmem %s7, 288
        %v3103 = vld [vmem:[%s3102] sm:$0xf]
        %v3104 = vld [vmem:[%s3102 + $0x4] sm:$0xf]
        %v3105 = vld [vmem:[%s3102 + $0x8] sm:$0xf]
        %v3106 = vld [vmem:[%s3102 + $0xc] sm:$0xf]
        %v3107 = vld [vmem:[%s3102 + $0x10] sm:$0xf]
        %v3108 = vld [vmem:[%s3102 + $0x14] sm:$0xf]
        %v3109 = vld [vmem:[%s3102 + $0x18] sm:$0xf]
        %v3110 = vld [vmem:[%s3102 + $0x1c] sm:$0xf]
        %v3111 = vld [vmem:[%s3102 + $0x20] sm:$0xf]
        %v3112 = vld [vmem:[%s3102 + $0x24] sm:$0xf]
        %v3113 = vld [vmem:[%s3102 + $0x28] sm:$0xf]
        %v3114 = vld [vmem:[%s3102 + $0x2c] sm:$0xf]
        %v3115 = vld [vmem:[%s3102 + $0x30] sm:$0xf]
        %v3116 = vld [vmem:[%s3102 + $0x34] sm:$0xf]
        %v3117 = vld [vmem:[%s3102 + $0x38] sm:$0xf]
        %v3118 = vld [vmem:[%s3102 + $0x3c] sm:$0xf]
        %v3119 = vld [vmem:[%s3102 + $0x40] sm:$0xf]
        %v3120 = vld [vmem:[%s3102 + $0x44] sm:$0xf]
        %v3121 = vrot.slane %v2620, 2
        %v3122 = vrot.slane %v2621, 2
        %v3142 = vunpack.c.l.b16 %v3103
        %v3143 = vunpack.c.l.b16 %v3104
        %v3144 = vunpack.c.l.b16 %v3105
        %v3145 = vunpack.c.l.b16 %v3106
        %v3146 = vunpack.c.l.b16 %v3107
        %v3147 = vunpack.c.l.b16 %v3108
        %v3148 = vunpack.c.l.b16 %v3109
        %v3149 = vunpack.c.l.b16 %v3110
        %v3150 = vunpack.c.l.b16 %v3111
        %v3151 = vunpack.c.l.b16 %v3112
        %v3152 = vunpack.c.l.b16 %v3113
        %v3153 = vunpack.c.l.b16 %v3114
        %v3154 = vunpack.c.l.b16 %v3115
        %v3155 = vunpack.c.l.b16 %v3116
        %v3156 = vunpack.c.l.b16 %v3117
        %v3157 = vunpack.c.l.b16 %v3118
        %v3158 = vunpack.c.l.b16 %v3119
        %v3159 = vunpack.c.l.b16 %v3120
        %v3160 = vpack.c.b16 %v3143, %v3142
        %v3161 = vpack.c.b16 %v3145, %v3144
        %v3162 = vpack.c.b16 %v3147, %v3146
        %v3163 = vpack.c.b16 %v3149, %v3148
        %v3164 = vpack.c.b16 %v3151, %v3150
        %v3165 = vpack.c.b16 %v3153, %v3152
        %v3166 = vpack.c.b16 %v3155, %v3154
        %v3167 = vpack.c.b16 %v3157, %v3156
        %v3168 = vpack.c.b16 %v3159, %v3158
        %v3179 = vsel %vm2720, %v3122, 0
        %3181 = vmatprep.subr.bf16.mxu0 0
        %3182 = vmatpush1.bf16.msra.mxu0 %v3160
        %3183 = vmatprep.subr.bf16.mxu0 0
        %3184 = vmatpush1.bf16.msra.mxu0 %v3161
        %3185 = vmatprep.subr.bf16.mxu0 0
        %3186 = vmatpush1.bf16.msra.mxu0 %v3162
        %3187 = vmatprep.subr.bf16.mxu0 0
        %3188 = vmatpush1.bf16.msra.mxu0 %v3163
        %3189 = vmatprep.subr.bf16.mxu0 0
        %3190 = vmatpush1.bf16.msra.mxu0 %v3164
        %3191 = vmatprep.subr.bf16.mxu0 0
        %3192 = vmatpush1.bf16.msra.mxu0 %v3165
        %3193 = vmatprep.subr.bf16.mxu0 0
        %3194 = vmatpush1.bf16.msra.mxu0 %v3166
        %3195 = vmatprep.subr.bf16.mxu0 0
        %3196 = vmatpush1.bf16.msra.mxu0 %v3167
        %3197 = vmatprep.subr.bf16.mxu0 0
        %3198 = vmatpush1.bf16.msra.mxu0 %v3168
        %3199 = vmatprep.subr.bf16.mxu0 0
        %3200 = vmatpush1.bf16.msra.mxu0 0
        %3201 = vmatprep.subr.bf16.mxu0 0
        %3202 = vmatpush1.bf16.msra.mxu0 0
        %3203 = vmatprep.subr.bf16.mxu0 0
        %3204 = vmatpush1.bf16.msra.mxu0 0
        %3205 = vmatprep.subr.bf16.mxu0 0
        %3206 = vmatpush1.bf16.msra.mxu0 0
        %3207 = vmatprep.subr.bf16.mxu0 0
        %3208 = vmatpush1.bf16.msra.mxu0 0
        %3209 = vmatprep.subr.bf16.mxu0 0
        %3210 = vmatpush1.bf16.msra.mxu0 0
        %3211 = vmatprep.subr.bf16.mxu0 0
        %3212 = vmatpush1.bf16.msra.mxu0 0
        %3213 = vmatprep.mubr.bf16.mxu0 %v3179
        %3214 = vmatmul.mubr.bf16.gmra.mrb[0].mxu0 %v3121
        %v3215 = vpop.f32.mrb[0].mxu0
        %v3216 = vadd.f32 0.0, %v3215
        %v3217 = vpop.f32.mrb[0].mxu0
        %v3218 = vpop.f32.mrb[0].mxu0
        %v3219 = vpop.f32.mrb[0].mxu0
        %3220 = vdwg.mxu0
        %v3221 = vadd.f32 %v3101, %v3216
        %v3222 = vld [vmem:[%s8] sm:$0x1]
        %v3223 = vadd.f32 %v3221, %v3222
        %vm3224 = vcmp.ge.f32.partialorder %v3223, 0.0
        %v3225 = vmul.f32 %v3223, 0.01
        %v3226 = vsel %vm3224, %v3223, %v3225
        %v3227 = vpack.c.bf16 %v3226, %v3226
        %v3228 = vld [vmem:[%s9] sm:$0xf]
        %v3229 = vld [vmem:[%s9 + $0x4] sm:$0xf]
        %v3230 = vld [vmem:[%s9 + $0x8] sm:$0xf]
        %v3231 = vld [vmem:[%s9 + $0xc] sm:$0xf]
        %v3232 = vld [vmem:[%s10] sm:$0x1]
        %v3237 = vunpack.c.l.b16 %v3228
        %v3238 = vunpack.c.l.b16 %v3229
        %v3239 = vunpack.c.l.b16 %v3230
        %v3240 = vunpack.c.l.b16 %v3231
        %v3241 = vpack.c.b16 %v3238, %v3237
        %v3242 = vpack.c.b16 %v3240, %v3239
        %vm3245 = vcmask 261120
        %v3247 = vsel %vm3245, %v3227, 0
        %3249 = vmatprep.subr.bf16.mxu0 0
        %3250 = vmatpush1.bf16.msra.mxu0 %v3241
        %3251 = vmatprep.subr.bf16.mxu0 0
        %3252 = vmatpush1.bf16.msra.mxu0 %v3242
        %3253 = vmatprep.subr.bf16.mxu0 0
        %3254 = vmatpush1.bf16.msra.mxu0 0
        %3255 = vmatprep.subr.bf16.mxu0 0
        %3256 = vmatpush1.bf16.msra.mxu0 0
        %3257 = vmatprep.subr.bf16.mxu0 0
        %3258 = vmatpush1.bf16.msra.mxu0 0
        %3259 = vmatprep.subr.bf16.mxu0 0
        %3260 = vmatpush1.bf16.msra.mxu0 0
        %3261 = vmatprep.subr.bf16.mxu0 0
        %3262 = vmatpush1.bf16.msra.mxu0 0
        %3263 = vmatprep.subr.bf16.mxu0 0
        %3264 = vmatpush1.bf16.msra.mxu0 0
        %3265 = vmatprep.subr.bf16.mxu0 0
        %3266 = vmatpush1.bf16.msra.mxu0 0
        %3267 = vmatprep.subr.bf16.mxu0 0
        %3268 = vmatpush1.bf16.msra.mxu0 0
        %3269 = vmatprep.subr.bf16.mxu0 0
        %3270 = vmatpush1.bf16.msra.mxu0 0
        %3271 = vmatprep.subr.bf16.mxu0 0
        %3272 = vmatpush1.bf16.msra.mxu0 0
        %3273 = vmatprep.subr.bf16.mxu0 0
        %3274 = vmatpush1.bf16.msra.mxu0 0
        %3275 = vmatprep.subr.bf16.mxu0 0
        %3276 = vmatpush1.bf16.msra.mxu0 0
        %3277 = vmatprep.subr.bf16.mxu0 0
        %3278 = vmatpush1.bf16.msra.mxu0 0
        %3279 = vmatprep.subr.bf16.mxu0 0
        %3280 = vmatpush1.bf16.msra.mxu0 0
        %3281 = vmatprep.mubr.bf16.mxu0 0
        %3282 = vmatmul.mubr.bf16.gmra.mrb[0].mxu0 %v3247
        %v3283 = vpop.f32.mrb[0].mxu0
        %v3284 = vadd.f32 %v3232, %v3283
        %v3285 = vpop.f32.mrb[0].mxu0
        %v3286 = vpop.f32.mrb[0].mxu0
        %v3287 = vpop.f32.mrb[0].mxu0
        %3288 = vdwg.mxu0
        %vm3289 = vcmp.ge.f32.partialorder %v3284, 0.0
        %v3290 = vmul.f32 %v3284, 0.01
        %v3291 = vsel %vm3289, %v3284, %v3290
        %v3292 = vpack.c.bf16 %v3291, %v3291
        %v3293 = vld [vmem:[%s11] sm:$0xf]
        %v3294 = vld [vmem:[%s11 + $0x4] sm:$0xf]
        %v3295 = vld [vmem:[%s11 + $0x8] sm:$0xf]
        %v3296 = vld [vmem:[%s11 + $0xc] sm:$0xf]
        %v3297 = vld [vmem:[%s12] sm:$0x1]
        %v3302 = vunpack.c.l.b16 %v3293
        %v3303 = vunpack.c.l.b16 %v3294
        %v3304 = vunpack.c.l.b16 %v3295
        %v3305 = vunpack.c.l.b16 %v3296
        %v3306 = vpack.c.b16 %v3303, %v3302
        %v3307 = vpack.c.b16 %v3305, %v3304
        %v3311 = vsel %vm3245, %v3292, 0
        %3313 = vmatprep.subr.bf16.mxu0 0
        %3314 = vmatpush1.bf16.msra.mxu0 %v3306
        %3315 = vmatprep.subr.bf16.mxu0 0
        %3316 = vmatpush1.bf16.msra.mxu0 %v3307
        %3317 = vmatprep.subr.bf16.mxu0 0
        %3318 = vmatpush1.bf16.msra.mxu0 0
        %3319 = vmatprep.subr.bf16.mxu0 0
        %3320 = vmatpush1.bf16.msra.mxu0 0
        %3321 = vmatprep.subr.bf16.mxu0 0
        %3322 = vmatpush1.bf16.msra.mxu0 0
        %3323 = vmatprep.subr.bf16.mxu0 0
        %3324 = vmatpush1.bf16.msra.mxu0 0
        %3325 = vmatprep.subr.bf16.mxu0 0
        %3326 = vmatpush1.bf16.msra.mxu0 0
        %3327 = vmatprep.subr.bf16.mxu0 0
        %3328 = vmatpush1.bf16.msra.mxu0 0
        %3329 = vmatprep.subr.bf16.mxu0 0
        %3330 = vmatpush1.bf16.msra.mxu0 0
        %3331 = vmatprep.subr.bf16.mxu0 0
        %3332 = vmatpush1.bf16.msra.mxu0 0
        %3333 = vmatprep.subr.bf16.mxu0 0
        %3334 = vmatpush1.bf16.msra.mxu0 0
        %3335 = vmatprep.subr.bf16.mxu0 0
        %3336 = vmatpush1.bf16.msra.mxu0 0
        %3337 = vmatprep.subr.bf16.mxu0 0
        %3338 = vmatpush1.bf16.msra.mxu0 0
        %3339 = vmatprep.subr.bf16.mxu0 0
        %3340 = vmatpush1.bf16.msra.mxu0 0
        %3341 = vmatprep.subr.bf16.mxu0 0
        %3342 = vmatpush1.bf16.msra.mxu0 0
        %3343 = vmatprep.subr.bf16.mxu0 0
        %3344 = vmatpush1.bf16.msra.mxu0 0
        %3345 = vmatprep.mubr.bf16.mxu0 0
        %3346 = vmatmul.mubr.bf16.gmra.mrb[0].mxu0 %v3311
        %v3347 = vpop.f32.mrb[0].mxu0
        %v3348 = vadd.f32 %v3297, %v3347
        %v3349 = vpop.f32.mrb[0].mxu0
        %v3350 = vpop.f32.mrb[0].mxu0
        %v3351 = vpop.f32.mrb[0].mxu0
        %3352 = vdwg.mxu0
        %vm3353 = vcmask 73728
        %3354 = vst.msk [vmem:[%s432] sm:$0x1] %vm3353, %v3348
        %s3355 = sand.u32 %s313, 1
        %s3356 = scalar_lea.sflag [#allocation3], %s3355
        %s3357 = sand.u32 %s313, 1
        %s3358 = scalar_lea.vmem [#allocation2], %s3357
        // Predicated region
        $region73: #{cifar_forward.1} parent=71 // pred_check
          %p3359 = pneg %p323
        $region74: #{cifar_forward.1} parent=71 // pred_check_branch
          %3361 = sbr.rel (%p3359) target = $region76
        $region75: #{cifar_forward.1} parent=71 // pred_region
          %s3363 = ssub.s32 16, 16
          %3364 = vsyncadd %s3356, %s3363
          %s3365 = smul.addr %s27, 16
          %s3366 = scalar_lea.hbm %s13, %s3365
          %s3368 = sshll.u32 %s3358, 4
          %s3369 = int_to_ptr.vmem [resolvable:$true] %s3368
          %3371 = dma.vmem_to_hbm [thread:$0]  %s3369, 16, %s3366, %s3356
        $region76: #{cifar_forward.1} parent=71 // pred_fallthru
          _
      $region72: #{cifar_forward.1} parent=5 // pred_fallthru
        _
      %p3372 = scmp.le.s32.totalorder 2, %s22
      // Predicated region
      $region77: #{cifar_forward.1} parent=5 // pred_check
        %p3373 = pneg %p3372
      $region78: #{cifar_forward.1} parent=5 // pred_check_branch
        %3375 = sbr.rel (%p3373) target = $region80
      $region79: #{cifar_forward.1} parent=5 // pred_region
        %s3376 = ssub.s32 %s22, 2
        // Predicated region
        $region81: #{cifar_forward.1} parent=79 // pred_check
          %p3377 = pneg %p329
        $region82: #{cifar_forward.1} parent=79 // pred_check_branch
          %3379 = sbr.rel (%p3377) target = $region84
        $region83: #{cifar_forward.1} parent=79 // pred_region
          %s3380 = sand.u32 %s314, 1
          %s3381 = scalar_lea.sflag [#allocation3], %s3380
          %s3382 = sand.u32 %s314, 1
          %s3383 = scalar_lea.vmem [#allocation2], %s3382
          %3384 = dma.done %s3381, 16
        $region84: #{cifar_forward.1} parent=79 // pred_fallthru
          _
      $region80: #{cifar_forward.1} parent=5 // pred_fallthru
        _
    $region6: #{cifar_forward.1} parent=1 // loop_footer
      %s26 = sadd.s32 1, %s22
    $region7: #{cifar_forward.1} parent=1 // loop_footer_branch
      %21 = sbr.rel target = $region3
    $region8: #{cifar_forward.1} parent=1 // loop_exit
      _
    %3385 = vsyncpa [#allocation3], 1
    %s3386 = scalar_lea.sflag [#allocation3], 1
    %3387 = vsyncpa %s3386, 1

</llo_original>
